<compile_context>
chip_gen: v6e
topology: v6e:2x2x1
jax: 0.10.0
libtpu: 0.0.40
codegen_flags: <defaults>
</compile_context>

<pallas_src>
import functools
import math

import jax
import jax.numpy as jnp
import numpy as np
from jax.experimental import pallas as pl
from jax.experimental.pallas import tpu as pltpu

_SQRT_HALF = np.float32(np.sqrt(0.5))
_LANE = 128


def _round_up(x, m):
    return ((x + m - 1) // m) * m


def _pick_tile_m(L, m_total):
    """Row-tile size: multiple of L (causality) and of 8 (sublanes), ~128."""
    step = (L * 8) // math.gcd(L, 8)
    target = _round_up(128, step)
    return min(target, _round_up(m_total, step))


# ------------------------------ fused kernel --------------------------------

def _fused_forward_kernel(*refs, tile_m, L, K, H, V_pad, n_layers):
    """One row-tile of (B*L) rows, processed entirely in VMEM/vregs.

    refs = (tok,                        # (tile_m, 1)   int32
            table,                      # (V_pad, H)    f32  (= emb @ W + b)
            [w_conv, b_conv]*n_layers,  # (K*H, 2H) bf16, (1, 2H) f32
            w_out, b_out,               # (H, n_pad) bf16, (1, n_pad) f32
            out)                        # (tile_m, n_pad) f32
    """
    tok_ref, table_ref = refs[0], refs[1]
    conv_refs = refs[2:2 + 2 * n_layers]
    w_out_ref, b_out_ref = refs[2 + 2 * n_layers], refs[3 + 2 * n_layers]
    o_ref = refs[4 + 2 * n_layers]

    # ---- fused embedding + emb2hid: exact one-hot lookup via the MXU ------
    tok = tok_ref[...]                                            # (tile_m, 1)
    vocab_iota = jax.lax.broadcasted_iota(jnp.int32, (tile_m, V_pad), 1)
    onehot = (tok == vocab_iota).astype(jnp.float32)              # exact 0/1
    h = jnp.dot(onehot, table_ref[...],
                preferred_element_type=jnp.float32)               # (tile_m, H)

    # ---- causal shift matrices (built once, hoisted out of the layer loop).
    # shift_mats[s-1][i, j] = 1  iff  j == i - s  and  (i % L) >= s, so
    # (S_s @ h)[i] = h[i - s] within the same sequence, 0 otherwise (exact).
    ri = jax.lax.broadcasted_iota(jnp.int32, (tile_m, tile_m), 0)
    ci = jax.lax.broadcasted_iota(jnp.int32, (tile_m, tile_m), 1)
    shift_mats = [
        ((ci == ri - s) & ((ri % L) >= s)).astype(jnp.float32)
        for s in range(1, K)
    ]

    for layer in range(n_layers):
        w_ref, b_ref = conv_refs[2 * layer], conv_refs[2 * layer + 1]
        # im2col along lanes: column block k holds h[row - (K-1-k)] (tap k).
        parts = []
        for k in range(K):
            s = K - 1 - k
            parts.append(h if s == 0 else
                         jnp.dot(shift_mats[s - 1], h,
                                 preferred_element_type=jnp.float32))
        cols = jnp.concatenate(parts, axis=1)                     # (tile_m, K*H)
        conved = jnp.dot(cols.astype(w_ref.dtype), w_ref[...],
                         preferred_element_type=jnp.float32)
        conved = conved + b_ref[...]                              # (tile_m, 2H)
        a, g = conved[:, :H], conved[:, H:]                       # lane-aligned
        h = (a * jax.nn.sigmoid(g) + h) * _SQRT_HALF              # (tile_m, H)

    # ---- fc_out (lane-dense, padded output width) --------------------------
    out = jnp.dot(h.astype(w_out_ref.dtype), w_out_ref[...],
                  preferred_element_type=jnp.float32)
    o_ref[...] = (out + b_out_ref[...]).astype(o_ref.dtype)


# ------------------------------ wrapper / call -------------------------------

def cnn_accum_forward(packed, tokens):
    """tokens: (B, L, 1) int32 -> output (B, 28*num_seq*accum_param, L)."""
    B, L, _ = tokens.shape
    V_pad, H = packed["table_pad"].shape
    K = packed["kernel_size"]
    n_layers = len(packed["convs"])
    out_dim = packed["out_dim"]
    n_pad = packed["fc_out_w_pad"].shape[1]

    m_total = B * L
    tile_m = _pick_tile_m(L, m_total)
    m_pad = _round_up(m_total, tile_m)

    tok_flat = tokens.reshape(m_total, 1).astype(jnp.int32)
    if m_pad != m_total:
        tok_flat = jnp.pad(tok_flat, ((0, m_pad - m_total), (0, 0)))

    const2d = lambda t: (0, 0)   # resident weights: same block every grid step
    inputs = [tok_flat, packed["table_pad"]]
    in_specs = [
        pl.BlockSpec((tile_m, 1), lambda t: (t, 0)),
        pl.BlockSpec((V_pad, H), const2d),
    ]
    for (w_conv, b_conv) in packed["convs"]:
        inputs += [w_conv, b_conv]
        in_specs += [
            pl.BlockSpec((K * H, 2 * H), const2d),
            pl.BlockSpec((1, 2 * H), const2d),
        ]
    inputs += [packed["fc_out_w_pad"], packed["fc_out_b_pad"]]
    in_specs += [
        pl.BlockSpec((H, n_pad), const2d),
        pl.BlockSpec((1, n_pad), const2d),
    ]

    kernel = functools.partial(
        _fused_forward_kernel, tile_m=tile_m, L=L, K=K, H=H,
        V_pad=V_pad, n_layers=n_layers)

    out_padded = pl.pallas_call(
        kernel,
        out_shape=jax.ShapeDtypeStruct((m_pad, n_pad), jnp.float32),
        grid=(m_pad // tile_m,),
        in_specs=in_specs,
        out_specs=pl.BlockSpec((tile_m, n_pad), lambda t: (t, 0)),
        compiler_params=pltpu.CompilerParams(
            dimension_semantics=("parallel",),
            vmem_limit_bytes=32 * 1024 * 1024),
    )(*inputs)

    out = out_padded[:m_total, :out_dim].reshape(B, L, out_dim)
    return jnp.transpose(out, (0, 2, 1))                          # (B, D, L)


# --------------------------- parameters & packing ----------------------------

def init_params(key, output_size, emb_size, hidden_size, num_seq,
                kernel_size, n_layers, accum_param):
    """Raw parameters (conv weights kept in PyTorch (O=2H, C=H, K) layout)."""
    out_dim = 28 * num_seq * accum_param
    keys = jax.random.split(key, 5 + 2 * n_layers)
    params = {
        "embedding": 0.1 * jax.random.normal(
            keys[0], (output_size, emb_size), jnp.float32),
        "emb2hid_w": 0.1 * jax.random.normal(
            keys[1], (emb_size, hidden_size), jnp.float32),
        "emb2hid_b": 0.1 * jax.random.normal(
            keys[2], (hidden_size,), jnp.float32),
        "fc_out_w": 0.1 * jax.random.normal(
            keys[3], (hidden_size, out_dim), jnp.float32),
        "fc_out_b": 0.1 * jax.random.normal(
            keys[4], (out_dim,), jnp.float32),
        "kernel_size": kernel_size,
        "convs_raw": [],
    }
    for i in range(n_layers):
        w_conv = 0.1 * jax.random.normal(
            keys[5 + 2 * i],
            (2 * hidden_size, hidden_size, kernel_size), jnp.float32)
        b_conv = 0.1 * jax.random.normal(
            keys[6 + 2 * i], (2 * hidden_size,), jnp.float32)
        params["convs_raw"].append((w_conv, b_conv))
    return params


def pack_params(params, matmul_dtype=jnp.bfloat16):
    """Repack once (outside the per-call path) into the kernel layout."""
    H = params["emb2hid_w"].shape[1]
    out_dim = params["fc_out_w"].shape[1]
    n_pad = _round_up(out_dim, _LANE)
    V = params["embedding"].shape[0]
    V_pad = _round_up(V, 8)

    # Eval-mode fusion: dropout == identity, so emb2hid(embedding(tok)) is a
    # plain lookup into (embedding @ W + b); keep this table in f32 (exact).
    table = params["embedding"] @ params["emb2hid_w"] + params["emb2hid_b"]
    table_pad = jnp.pad(table, ((0, V_pad - V), (0, 0))).astype(jnp.float32)

    packed = {
        "table_pad": table_pad,
        "kernel_size": params["kernel_size"],
        "out_dim": out_dim,
        "fc_out_w_pad": jnp.pad(
            params["fc_out_w"], ((0, 0), (0, n_pad - out_dim))
        ).astype(matmul_dtype),
        "fc_out_b_pad": jnp.pad(
            params["fc_out_b"], (0, n_pad - out_dim)
        ).reshape(1, n_pad).astype(jnp.float32),
        "convs": [],
    }
    for (w_conv, b_conv) in params["convs_raw"]:
        K = w_conv.shape[2]
        # torch (O=2H, C=H, K) -> per-tap (K, C, O) -> merged im2col weight
        # (K*H, 2H).  GLU halves stay as output columns [0:H] (a) / [H:2H] (g);
        # the split is lane-tile aligned since H % 128 == 0.
        w_taps = jnp.transpose(w_conv, (2, 1, 0))            # (K, H, 2H)
        packed["convs"].append((
            w_taps.reshape(K * H, 2 * H).astype(matmul_dtype),
            b_conv.reshape(1, 2 * H).astype(jnp.float32),
        ))
    return packed


# ----------------------------- pure-JAX reference ----------------------------

def cnn_accum_reference(params, tokens):
    emb = jnp.take(params["embedding"], tokens[..., 0], axis=0)   # (B, L, E)
    x = emb @ params["emb2hid_w"] + params["emb2hid_b"]           # (B, L, H)
    B, L, H = x.shape
    K = params["kernel_size"]
    scale = jnp.float32(np.sqrt(0.5))
    for (w_conv, b_conv) in params["convs_raw"]:
        xpad = jnp.concatenate(
            [jnp.zeros((B, K - 1, H), x.dtype), x], axis=1)
        acc = b_conv[None, None, :]
        for k in range(K):
            acc = acc + jnp.einsum("blc,oc->blo",
                                   xpad[:, k:k + L, :], w_conv[:, :, k])
        a, g = acc[..., :H], acc[..., H:]
        x = (a * jax.nn.sigmoid(g) + x) * scale
    out = x @ params["fc_out_w"] + params["fc_out_b"]
    return jnp.transpose(out, (0, 2, 1))


# ----------------------------------- main ------------------------------------

if __name__ == "__main__":
    # Module-consistent small shapes; batch chosen so B*L = 256 rows -> two
    # 128-row MXU tiles (>= 2 parallel grid steps for v7x's two TensorCores).
    output_size = 12
    emb_size = 128
    hidden_size = 256
    num_seq = 8
    kernel_size = 3
    n_layers = 2
    accum_param = 1
    batch = 32
    seq_len = 8

    key = jax.random.PRNGKey(0)
    pkey, tkey = jax.random.split(key)
    params = init_params(pkey, output_size, emb_size, hidden_size, num_seq,
                         kernel_size, n_layers, accum_param)
    packed = pack_params(params)
    tokens = jax.random.randint(tkey, (batch, seq_len, 1), 0, output_size,
                                dtype=jnp.int32)

    out = jax.block_until_ready(cnn_accum_forward(packed, tokens))
    ref = jax.block_until_ready(cnn_accum_reference(params, tokens))

    expected_shape = (batch, 28 * num_seq * accum_param, seq_len)
    assert out.shape == expected_shape, (out.shape, expected_shape)
    # bf16 matmul operands with f32 accumulation -> loosened tolerance.
    err = float(np.max(np.abs(np.asarray(out) - np.asarray(ref))))
    assert np.allclose(np.asarray(out), np.asarray(ref),
                       atol=3e-2, rtol=2e-2), err

    print("KERNEL_OK")
</pallas_src>

<mosaic_0001>
module attributes {stable_mosaic.version = 11 : i64} {
  func.func @_fused_forward_kernel(%arg0: i32, %arg1: memref<128x1xi32, #tpu.memory_space<vmem>>, %arg2: memref<16x256xf32, #tpu.memory_space<vmem>>, %arg3: memref<768x512xbf16, #tpu.memory_space<vmem>>, %arg4: memref<1x512xf32, #tpu.memory_space<vmem>>, %arg5: memref<768x512xbf16, #tpu.memory_space<vmem>>, %arg6: memref<1x512xf32, #tpu.memory_space<vmem>>, %arg7: memref<256x256xbf16, #tpu.memory_space<vmem>>, %arg8: memref<1x256xf32, #tpu.memory_space<vmem>>, %arg9: memref<128x256xf32, #tpu.memory_space<vmem>>) attributes {dimension_semantics = [#tpu.dimension_semantics<parallel>], iteration_bounds = array<i64: 2>, scalar_prefetch = 0 : i64, scratch_operands = 0 : i64, tpu.core_type = #tpu.core_type<tc>, window_params = [{transform_indices = @transform_0, window_bounds = array<i64: 128, 1>}, {pipeline_mode = #tpu.pipeline_mode<synchronous>, transform_indices = @transform_1, window_bounds = array<i64: 16, 256>}, {pipeline_mode = #tpu.pipeline_mode<synchronous>, transform_indices = @transform_2, window_bounds = array<i64: 768, 512>}, {pipeline_mode = #tpu.pipeline_mode<synchronous>, transform_indices = @transform_3, window_bounds = array<i64: 1, 512>}, {pipeline_mode = #tpu.pipeline_mode<synchronous>, transform_indices = @transform_4, window_bounds = array<i64: 768, 512>}, {pipeline_mode = #tpu.pipeline_mode<synchronous>, transform_indices = @transform_5, window_bounds = array<i64: 1, 512>}, {pipeline_mode = #tpu.pipeline_mode<synchronous>, transform_indices = @transform_6, window_bounds = array<i64: 256, 256>}, {pipeline_mode = #tpu.pipeline_mode<synchronous>, transform_indices = @transform_7, window_bounds = array<i64: 1, 256>}, {transform_indices = @transform_8, window_bounds = array<i64: 128, 256>}]} {
    %c0 = arith.constant 0 : index
    %c0_0 = arith.constant 0 : index
    %0 = vector.load %arg1[%c0, %c0_0] : memref<128x1xi32, #tpu.memory_space<vmem>>, vector<128x1xi32>
    %1 = tpu.iota {dimensions = array<i32: 1>} : vector<128x16xi32>
    %2 = vector.broadcast %0 : vector<128x1xi32> to vector<128x16xi32>
    %3 = arith.cmpi eq, %2, %1 : vector<128x16xi32>
    %4 = arith.extui %3 : vector<128x16xi1> to vector<128x16xi32>
    %5 = arith.sitofp %4 : vector<128x16xi32> to vector<128x16xf32>
    %c0_1 = arith.constant 0 : index
    %c0_2 = arith.constant 0 : index
    %6 = vector.load %arg2[%c0_1, %c0_2] : memref<16x256xf32, #tpu.memory_space<vmem>>, vector<16x256xf32>
    %cst = arith.constant dense<0.000000e+00> : vector<128x256xf32>
    %7 = tpu.matmul %5, %6, %cst {dimension_numbers = #tpu.dot_dimension_numbers<[1], [0], [0], [1], [0, 0, 1, 1], [], []>} : vector<128x16xf32>, vector<16x256xf32>, vector<128x256xf32> -> vector<128x256xf32>
    %8 = tpu.iota {dimensions = array<i32: 0>} : vector<128x128xi32>
    %9 = tpu.iota {dimensions = array<i32: 1>} : vector<128x128xi32>
    %c1_i32 = arith.constant 1 : i32
    %10 = vector.broadcast %c1_i32 : i32 to vector<128x128xi32>
    %11 = arith.subi %8, %10 : vector<128x128xi32>
    %12 = arith.cmpi eq, %9, %11 : vector<128x128xi32>
    %c8_i32 = arith.constant 8 : i32
    %c0_i32 = arith.constant 0 : i32
    %13 = arith.cmpi eq, %c8_i32, %c0_i32 : i32
    %c1_i32_3 = arith.constant 1 : i32
    %14 = arith.select %13, %c1_i32_3, %c8_i32 : i32
    %15 = vector.broadcast %14 : i32 to vector<128x128xi32>
    %16 = arith.remsi %8, %15 : vector<128x128xi32>
    %c0_i32_4 = arith.constant 0 : i32
    %17 = vector.broadcast %c0_i32_4 : i32 to vector<128x128xi32>
    %18 = arith.cmpi ne, %16, %17 : vector<128x128xi32>
    %c0_i32_5 = arith.constant 0 : i32
    %19 = vector.broadcast %c0_i32_5 : i32 to vector<128x128xi32>
    %20 = arith.cmpi slt, %16, %19 : vector<128x128xi32>
    %c0_i32_6 = arith.constant 0 : i32
    %21 = arith.cmpi slt, %14, %c0_i32_6 : i32
    %22 = vector.broadcast %21 : i1 to vector<128x128xi1>
    %23 = vector.broadcast %22 : vector<128x128xi1> to vector<128x128xi1>
    %24 = arith.xori %20, %23 : vector<128x128xi1>
    %25 = arith.andi %24, %18 : vector<128x128xi1>
    %26 = vector.broadcast %14 : i32 to vector<128x128xi32>
    %27 = arith.addi %16, %26 : vector<128x128xi32>
    %28 = arith.select %25, %27, %16 : vector<128x128xi1>, vector<128x128xi32>
    %c1_i32_7 = arith.constant 1 : i32
    %29 = vector.broadcast %c1_i32_7 : i32 to vector<128x128xi32>
    %30 = arith.cmpi sge, %28, %29 : vector<128x128xi32>
    %31 = arith.andi %12, %30 : vector<128x128xi1>
    %32 = arith.extui %31 : vector<128x128xi1> to vector<128x128xi32>
    %33 = arith.sitofp %32 : vector<128x128xi32> to vector<128x128xf32>
    %c2_i32 = arith.constant 2 : i32
    %34 = vector.broadcast %c2_i32 : i32 to vector<128x128xi32>
    %35 = arith.subi %8, %34 : vector<128x128xi32>
    %36 = arith.cmpi eq, %9, %35 : vector<128x128xi32>
    %c8_i32_8 = arith.constant 8 : i32
    %c0_i32_9 = arith.constant 0 : i32
    %37 = arith.cmpi eq, %c8_i32_8, %c0_i32_9 : i32
    %c1_i32_10 = arith.constant 1 : i32
    %38 = arith.select %37, %c1_i32_10, %c8_i32_8 : i32
    %39 = vector.broadcast %38 : i32 to vector<128x128xi32>
    %40 = arith.remsi %8, %39 : vector<128x128xi32>
    %c0_i32_11 = arith.constant 0 : i32
    %41 = vector.broadcast %c0_i32_11 : i32 to vector<128x128xi32>
    %42 = arith.cmpi ne, %40, %41 : vector<128x128xi32>
    %c0_i32_12 = arith.constant 0 : i32
    %43 = vector.broadcast %c0_i32_12 : i32 to vector<128x128xi32>
    %44 = arith.cmpi slt, %40, %43 : vector<128x128xi32>
    %c0_i32_13 = arith.constant 0 : i32
    %45 = arith.cmpi slt, %38, %c0_i32_13 : i32
    %46 = vector.broadcast %45 : i1 to vector<128x128xi1>
    %47 = vector.broadcast %46 : vector<128x128xi1> to vector<128x128xi1>
    %48 = arith.xori %44, %47 : vector<128x128xi1>
    %49 = arith.andi %48, %42 : vector<128x128xi1>
    %50 = vector.broadcast %38 : i32 to vector<128x128xi32>
    %51 = arith.addi %40, %50 : vector<128x128xi32>
    %52 = arith.select %49, %51, %40 : vector<128x128xi1>, vector<128x128xi32>
    %c2_i32_14 = arith.constant 2 : i32
    %53 = vector.broadcast %c2_i32_14 : i32 to vector<128x128xi32>
    %54 = arith.cmpi sge, %52, %53 : vector<128x128xi32>
    %55 = arith.andi %36, %54 : vector<128x128xi1>
    %56 = arith.extui %55 : vector<128x128xi1> to vector<128x128xi32>
    %57 = arith.sitofp %56 : vector<128x128xi32> to vector<128x128xf32>
    %cst_15 = arith.constant dense<0.000000e+00> : vector<128x256xf32>
    %58 = tpu.matmul %57, %7, %cst_15 {dimension_numbers = #tpu.dot_dimension_numbers<[1], [0], [0], [1], [0, 0, 1, 1], [], []>} : vector<128x128xf32>, vector<128x256xf32>, vector<128x256xf32> -> vector<128x256xf32>
    %cst_16 = arith.constant dense<0.000000e+00> : vector<128x256xf32>
    %59 = tpu.matmul %33, %7, %cst_16 {dimension_numbers = #tpu.dot_dimension_numbers<[1], [0], [0], [1], [0, 0, 1, 1], [], []>} : vector<128x128xf32>, vector<128x256xf32>, vector<128x256xf32> -> vector<128x256xf32>
    %60 = tpu.concatenate %58, %59, %7 in 1 : vector<128x256xf32>, vector<128x256xf32>, vector<128x256xf32> -> vector<128x768xf32>
    %61 = arith.truncf %60 : vector<128x768xf32> to vector<128x768xbf16>
    %c0_17 = arith.constant 0 : index
    %c0_18 = arith.constant 0 : index
    %62 = vector.load %arg3[%c0_17, %c0_18] : memref<768x512xbf16, #tpu.memory_space<vmem>>, vector<768x512xbf16>
    %cst_19 = arith.constant dense<0.000000e+00> : vector<128x512xf32>
    %63 = tpu.matmul %61, %62, %cst_19 {dimension_numbers = #tpu.dot_dimension_numbers<[1], [0], [0], [1], [0, 0, 1, 1], [], []>} : vector<128x768xbf16>, vector<768x512xbf16>, vector<128x512xf32> -> vector<128x512xf32>
    %c0_20 = arith.constant 0 : index
    %c0_21 = arith.constant 0 : index
    %64 = vector.load %arg4[%c0_20, %c0_21] : memref<1x512xf32, #tpu.memory_space<vmem>>, vector<1x512xf32>
    %65 = vector.broadcast %64 : vector<1x512xf32> to vector<128x512xf32>
    %66 = arith.addf %63, %65 : vector<128x512xf32>
    %67 = vector.extract_strided_slice %66 {offsets = [0, 0], sizes = [128, 256], strides = [1, 1]} : vector<128x512xf32> to vector<128x256xf32>
    %68 = vector.extract_strided_slice %66 {offsets = [0, 256], sizes = [128, 256], strides = [1, 1]} : vector<128x512xf32> to vector<128x256xf32>
    %69 = arith.negf %68 : vector<128x256xf32>
    %70 = math.exp %69 : vector<128x256xf32>
    %cst_22 = arith.constant 1.000000e+00 : f32
    %71 = vector.broadcast %cst_22 : f32 to vector<128x256xf32>
    %72 = arith.addf %71, %70 : vector<128x256xf32>
    %73 = arith.divf %71, %72 : vector<128x256xf32>
    %74 = arith.mulf %67, %73 : vector<128x256xf32>
    %75 = arith.addf %74, %7 : vector<128x256xf32>
    %cst_23 = arith.constant 0.707106769 : f32
    %76 = vector.broadcast %cst_23 : f32 to vector<128x256xf32>
    %77 = arith.mulf %75, %76 : vector<128x256xf32>
    %cst_24 = arith.constant dense<0.000000e+00> : vector<128x256xf32>
    %78 = tpu.matmul %57, %77, %cst_24 {dimension_numbers = #tpu.dot_dimension_numbers<[1], [0], [0], [1], [0, 0, 1, 1], [], []>} : vector<128x128xf32>, vector<128x256xf32>, vector<128x256xf32> -> vector<128x256xf32>
    %cst_25 = arith.constant dense<0.000000e+00> : vector<128x256xf32>
    %79 = tpu.matmul %33, %77, %cst_25 {dimension_numbers = #tpu.dot_dimension_numbers<[1], [0], [0], [1], [0, 0, 1, 1], [], []>} : vector<128x128xf32>, vector<128x256xf32>, vector<128x256xf32> -> vector<128x256xf32>
    %80 = tpu.concatenate %78, %79, %77 in 1 : vector<128x256xf32>, vector<128x256xf32>, vector<128x256xf32> -> vector<128x768xf32>
    %81 = arith.truncf %80 : vector<128x768xf32> to vector<128x768xbf16>
    %c0_26 = arith.constant 0 : index
    %c0_27 = arith.constant 0 : index
    %82 = vector.load %arg5[%c0_26, %c0_27] : memref<768x512xbf16, #tpu.memory_space<vmem>>, vector<768x512xbf16>
    %cst_28 = arith.constant dense<0.000000e+00> : vector<128x512xf32>
    %83 = tpu.matmul %81, %82, %cst_28 {dimension_numbers = #tpu.dot_dimension_numbers<[1], [0], [0], [1], [0, 0, 1, 1], [], []>} : vector<128x768xbf16>, vector<768x512xbf16>, vector<128x512xf32> -> vector<128x512xf32>
    %c0_29 = arith.constant 0 : index
    %c0_30 = arith.constant 0 : index
    %84 = vector.load %arg6[%c0_29, %c0_30] : memref<1x512xf32, #tpu.memory_space<vmem>>, vector<1x512xf32>
    %85 = vector.broadcast %84 : vector<1x512xf32> to vector<128x512xf32>
    %86 = arith.addf %83, %85 : vector<128x512xf32>
    %87 = vector.extract_strided_slice %86 {offsets = [0, 0], sizes = [128, 256], strides = [1, 1]} : vector<128x512xf32> to vector<128x256xf32>
    %88 = vector.extract_strided_slice %86 {offsets = [0, 256], sizes = [128, 256], strides = [1, 1]} : vector<128x512xf32> to vector<128x256xf32>
    %89 = arith.negf %88 : vector<128x256xf32>
    %90 = math.exp %89 : vector<128x256xf32>
    %cst_31 = arith.constant 1.000000e+00 : f32
    %91 = vector.broadcast %cst_31 : f32 to vector<128x256xf32>
    %92 = arith.addf %91, %90 : vector<128x256xf32>
    %93 = arith.divf %91, %92 : vector<128x256xf32>
    %94 = arith.mulf %87, %93 : vector<128x256xf32>
    %95 = arith.addf %94, %77 : vector<128x256xf32>
    %cst_32 = arith.constant 0.707106769 : f32
    %96 = vector.broadcast %cst_32 : f32 to vector<128x256xf32>
    %97 = arith.mulf %95, %96 : vector<128x256xf32>
    %98 = arith.truncf %97 : vector<128x256xf32> to vector<128x256xbf16>
    %c0_33 = arith.constant 0 : index
    %c0_34 = arith.constant 0 : index
    %99 = vector.load %arg7[%c0_33, %c0_34] : memref<256x256xbf16, #tpu.memory_space<vmem>>, vector<256x256xbf16>
    %cst_35 = arith.constant dense<0.000000e+00> : vector<128x256xf32>
    %100 = tpu.matmul %98, %99, %cst_35 {dimension_numbers = #tpu.dot_dimension_numbers<[1], [0], [0], [1], [0, 0, 1, 1], [], []>} : vector<128x256xbf16>, vector<256x256xbf16>, vector<128x256xf32> -> vector<128x256xf32>
    %c0_36 = arith.constant 0 : index
    %c0_37 = arith.constant 0 : index
    %101 = vector.load %arg8[%c0_36, %c0_37] : memref<1x256xf32, #tpu.memory_space<vmem>>, vector<1x256xf32>
    %102 = vector.broadcast %101 : vector<1x256xf32> to vector<128x256xf32>
    %103 = arith.addf %100, %102 : vector<128x256xf32>
    %c0_38 = arith.constant 0 : index
    %c0_39 = arith.constant 0 : index
    %104 = vector.load %arg9[%c0_38, %c0_39] : memref<128x256xf32, #tpu.memory_space<vmem>>, vector<128x256xf32>
    tpu.vector_store %arg9[%c0_38, %c0_39], %103 {strides = array<i32>} : memref<128x256xf32, #tpu.memory_space<vmem>>, vector<128x256xf32>,
    return
  }
  func.func @transform_0(%arg0: i32) -> (i32, i32) {
    %c0_i32 = arith.constant 0 : i32
    %c0_i32_0 = arith.constant 0 : i32
    return %arg0, %c0_i32 : i32, i32
  }
  func.func @transform_1(%arg0: i32) -> (i32, i32) {
    %c0_i32 = arith.constant 0 : i32
    %c0_i32_0 = arith.constant 0 : i32
    %c0_i32_1 = arith.constant 0 : i32
    return %c0_i32, %c0_i32_0 : i32, i32
  }
  func.func @transform_2(%arg0: i32) -> (i32, i32) {
    %c0_i32 = arith.constant 0 : i32
    %c0_i32_0 = arith.constant 0 : i32
    %c0_i32_1 = arith.constant 0 : i32
    return %c0_i32, %c0_i32_0 : i32, i32
  }
  func.func @transform_3(%arg0: i32) -> (i32, i32) {
    %c0_i32 = arith.constant 0 : i32
    %c0_i32_0 = arith.constant 0 : i32
    %c0_i32_1 = arith.constant 0 : i32
    return %c0_i32, %c0_i32_0 : i32, i32
  }
  func.func @transform_4(%arg0: i32) -> (i32, i32) {
    %c0_i32 = arith.constant 0 : i32
    %c0_i32_0 = arith.constant 0 : i32
    %c0_i32_1 = arith.constant 0 : i32
    return %c0_i32, %c0_i32_0 : i32, i32
  }
  func.func @transform_5(%arg0: i32) -> (i32, i32) {
    %c0_i32 = arith.constant 0 : i32
    %c0_i32_0 = arith.constant 0 : i32
    %c0_i32_1 = arith.constant 0 : i32
    return %c0_i32, %c0_i32_0 : i32, i32
  }
  func.func @transform_6(%arg0: i32) -> (i32, i32) {
    %c0_i32 = arith.constant 0 : i32
    %c0_i32_0 = arith.constant 0 : i32
    %c0_i32_1 = arith.constant 0 : i32
    return %c0_i32, %c0_i32_0 : i32, i32
  }
  func.func @transform_7(%arg0: i32) -> (i32, i32) {
    %c0_i32 = arith.constant 0 : i32
    %c0_i32_0 = arith.constant 0 : i32
    %c0_i32_1 = arith.constant 0 : i32
    return %c0_i32, %c0_i32_0 : i32, i32
  }
  func.func @transform_8(%arg0: i32) -> (i32, i32) {
    %c0_i32 = arith.constant 0 : i32
    %c0_i32_0 = arith.constant 0 : i32
    return %arg0, %c0_i32 : i32, i32
  }
}

</mosaic_0001>

<llo_original>
// kernel: tpu_custom_call.1
$region0: #{tpu_custom_call.1}
  #allocation0 [shape = 'u32[]', space=smem, size = 0x4, offset = 0x4, fixed_abs, tag = 'smem constant byte address 0x4 - core index']
  #allocation1 [shape = 'u32[144,128]{1,0:T(1,128)}', space=vmem, size = 0x12000, scoped, tag = 'internal scratch']
  %s0 = inlined_call_operand.vmem [shape: s32[256,1], index: 0, kind: input, shape index: {}]
  %s1 = inlined_call_operand.hbm [shape: f32[16,256], index: 1, kind: input, shape index: {}]
  %s2 = inlined_call_operand.hbm [shape: bf16[768,512], index: 2, kind: input, shape index: {}]
  %s3 = inlined_call_operand.vmem [shape: f32[1,512], index: 3, kind: input, shape index: {}]
  %s4 = inlined_call_operand.hbm [shape: bf16[768,512], index: 4, kind: input, shape index: {}]
  %s5 = inlined_call_operand.vmem [shape: f32[1,512], index: 5, kind: input, shape index: {}]
  %s6 = inlined_call_operand.vmem [shape: bf16[256,256], index: 6, kind: input, shape index: {}]
  %s7 = inlined_call_operand.vmem [shape: f32[1,256], index: 7, kind: input, shape index: {}]
  %s8 = inlined_call_operand.hbm [shape: f32[256,256], index: 8, kind: output, shape index: {}]
  %s9 = sld [smem:[#allocation0]]
  $region77: #{tpu_custom_call.1} parent=0
    _
  %s11 = ssub.s32 1, %s9
  %s12 = scalar_select 0, %s11, %s9
  $region1: #{tpu_custom_call.1} parent=0
    #allocation2 [shape = 'u8[16384]{0}', space=vmem, size = 0x4000, scoped, tag = 'input window, operand 1, single buffered']
    #allocation3 [shape = 's32[2]{0}', space=sflag, size = 0x8, scoped, tag = 'scoped memory for tpu_custom_call.1']
    #allocation4 [shape = 's32[2]{0}', space=sflag, size = 0x8, scoped, tag = 'scoped memory for tpu_custom_call.1']
    #allocation5 [shape = 'u8[786432]{0}', space=vmem, size = 0xc0000, scoped, tag = 'input window, operand 2, single buffered']
    #allocation6 [shape = 's32[1]{0}', space=sflag, size = 0x4, scoped, tag = 'scoped memory for tpu_custom_call.1']
    #allocation7 [shape = 'u8[786432]{0}', space=vmem, size = 0xc0000, scoped, tag = 'input window, operand 4, single buffered']
    #allocation8 [shape = 'u8[262144]{0}', space=vmem, size = 0x40000, scoped, tag = 'output window, operand 0']
    %13 = vsyncpa [#allocation3], 0
    %14 = vsyncpa [#allocation6], 0
    %15 = vsyncpa [#allocation4], 0
    %s16 = scalar_lea.sflag [#allocation4], 1
    %17 = vsyncpa %s16, 0
    loop: start=0, step=1, limit=4
    $region2: #{tpu_custom_call.1} parent=1 // loop_pre_header
      _
    $region3: #{tpu_custom_call.1} parent=1 // loop_header
      %s19 = sphi 0, %s23
      %p20 = scmp.ge.s32.totalorder %s19, 4
      %s29 = sphi 0, %s31
      %s32 = sphi 0, %s29
      %s33 = sphi 0, %s32
      %s49 = sphi 0, %s33
      %s53 = sphi 0, %s53
      %s55 = sphi 0, %s53
      %s56 = sphi 0, %s55
      %s70 = sphi 0, %s56
      %s74 = sphi 0, %s74
      %s76 = sphi 0, %s74
      %s77 = sphi 0, %s76
      %s91 = sphi 0, %s77
      %s95 = sphi 0, %s95
      %s97 = sphi 0, %s95
      %s98 = sphi 0, %s97
      %s112 = sphi 0, %s98
      %s116 = sphi 0, %s116
      %s118 = sphi 0, %s116
      %s119 = sphi 0, %s118
      %s133 = sphi 0, %s119
      %s137 = sphi 0, %s137
      %s139 = sphi 0, %s137
      %s140 = sphi 0, %s139
      %s154 = sphi 0, %s140
      %s158 = sphi 0, %s158
      %s160 = sphi 0, %s158
      %s161 = sphi 0, %s160
      %s175 = sphi 0, %s161
      %s179 = sphi 0, %s179
      %s181 = sphi 0, %s179
      %s182 = sphi 0, %s181
      %s196 = sphi 0, %s182
      %s202 = sphi 0, %s204
      %s205 = sphi 0, %s202
      %s206 = sphi 0, %s205
      %s222 = sphi 0, %s206
    $region4: #{tpu_custom_call.1} parent=1 // loop_header_branch
      %22 = sbr.rel (%p20) target = $region8
    $region5: #{tpu_custom_call.1} parent=1 // loop_body
      %s24 = ssub.s32 %s19, 1
      %s25 = ssub.s32 %s19, 2
      %s26 = sadd.s32 %s19, 1
      %s27 = ssub.s32 %s19, %s26
      %p28 = scmp.eq.s32.totalorder %s27, 0
      %s30 = sadd.s32 %s29, 1
      %s31 = scalar_select %p28, %s29, %s30
      %p34 = pneg %p28
      %p35 = scmp.eq.s32.totalorder %s19, 1
      %p36 = por %p34, %p35
      %p37 = scmp.ne.s32.totalorder %s29, %s32
      %p38 = scmp.eq.s32.totalorder %s19, 0
      %p39 = por %p37, %p38
      %p40 = scmp.ne.s32.totalorder %s29, %s32
      %p41 = scmp.eq.s32.totalorder %s24, 1
      %p42 = por %p40, %p41
      %p43 = scmp.ne.s32.totalorder %s32, %s33
      %p44 = scmp.eq.s32.totalorder %s24, 0
      %p45 = por %p43, %p44
      %p46 = scmp.ne.s32.totalorder %s32, %s33
      %p47 = scmp.eq.s32.totalorder %s25, 1
      %p48 = por %p46, %p47
      %p50 = scmp.ne.s32.totalorder %s33, %s49
      %p51 = scmp.eq.s32.totalorder %s25, 0
      %p52 = por %p50, %p51
      %s54 = sadd.s32 %s53, 1
      %p57 = scmp.eq.s32.totalorder %s19, 1
      %p58 = scmp.ne.s32.totalorder %s53, %s55
      %p59 = scmp.eq.s32.totalorder %s19, 0
      %p60 = por %p58, %p59
      %p61 = scmp.ne.s32.totalorder %s53, %s55
      %p62 = scmp.eq.s32.totalorder %s24, 1
      %p63 = por %p61, %p62
      %p64 = scmp.ne.s32.totalorder %s55, %s56
      %p65 = scmp.eq.s32.totalorder %s24, 0
      %p66 = por %p64, %p65
      %p67 = scmp.ne.s32.totalorder %s55, %s56
      %p68 = scmp.eq.s32.totalorder %s25, 1
      %p69 = por %p67, %p68
      %p71 = scmp.ne.s32.totalorder %s56, %s70
      %p72 = scmp.eq.s32.totalorder %s25, 0
      %p73 = por %p71, %p72
      %s75 = sadd.s32 %s74, 1
      %p78 = scmp.eq.s32.totalorder %s19, 1
      %p79 = scmp.ne.s32.totalorder %s74, %s76
      %p80 = scmp.eq.s32.totalorder %s19, 0
      %p81 = por %p79, %p80
      %p82 = scmp.ne.s32.totalorder %s74, %s76
      %p83 = scmp.eq.s32.totalorder %s24, 1
      %p84 = por %p82, %p83
      %p85 = scmp.ne.s32.totalorder %s76, %s77
      %p86 = scmp.eq.s32.totalorder %s24, 0
      %p87 = por %p85, %p86
      %p88 = scmp.ne.s32.totalorder %s76, %s77
      %p89 = scmp.eq.s32.totalorder %s25, 1
      %p90 = por %p88, %p89
      %p92 = scmp.ne.s32.totalorder %s77, %s91
      %p93 = scmp.eq.s32.totalorder %s25, 0
      %p94 = por %p92, %p93
      %s96 = sadd.s32 %s95, 1
      %p99 = scmp.eq.s32.totalorder %s19, 1
      %p100 = scmp.ne.s32.totalorder %s95, %s97
      %p101 = scmp.eq.s32.totalorder %s19, 0
      %p102 = por %p100, %p101
      %p103 = scmp.ne.s32.totalorder %s95, %s97
      %p104 = scmp.eq.s32.totalorder %s24, 1
      %p105 = por %p103, %p104
      %p106 = scmp.ne.s32.totalorder %s97, %s98
      %p107 = scmp.eq.s32.totalorder %s24, 0
      %p108 = por %p106, %p107
      %p109 = scmp.ne.s32.totalorder %s97, %s98
      %p110 = scmp.eq.s32.totalorder %s25, 1
      %p111 = por %p109, %p110
      %p113 = scmp.ne.s32.totalorder %s98, %s112
      %p114 = scmp.eq.s32.totalorder %s25, 0
      %p115 = por %p113, %p114
      %s117 = sadd.s32 %s116, 1
      %p120 = scmp.eq.s32.totalorder %s19, 1
      %p121 = scmp.ne.s32.totalorder %s116, %s118
      %p122 = scmp.eq.s32.totalorder %s19, 0
      %p123 = por %p121, %p122
      %p124 = scmp.ne.s32.totalorder %s116, %s118
      %p125 = scmp.eq.s32.totalorder %s24, 1
      %p126 = por %p124, %p125
      %p127 = scmp.ne.s32.totalorder %s118, %s119
      %p128 = scmp.eq.s32.totalorder %s24, 0
      %p129 = por %p127, %p128
      %p130 = scmp.ne.s32.totalorder %s118, %s119
      %p131 = scmp.eq.s32.totalorder %s25, 1
      %p132 = por %p130, %p131
      %p134 = scmp.ne.s32.totalorder %s119, %s133
      %p135 = scmp.eq.s32.totalorder %s25, 0
      %p136 = por %p134, %p135
      %s138 = sadd.s32 %s137, 1
      %p141 = scmp.eq.s32.totalorder %s19, 1
      %p142 = scmp.ne.s32.totalorder %s137, %s139
      %p143 = scmp.eq.s32.totalorder %s19, 0
      %p144 = por %p142, %p143
      %p145 = scmp.ne.s32.totalorder %s137, %s139
      %p146 = scmp.eq.s32.totalorder %s24, 1
      %p147 = por %p145, %p146
      %p148 = scmp.ne.s32.totalorder %s139, %s140
      %p149 = scmp.eq.s32.totalorder %s24, 0
      %p150 = por %p148, %p149
      %p151 = scmp.ne.s32.totalorder %s139, %s140
      %p152 = scmp.eq.s32.totalorder %s25, 1
      %p153 = por %p151, %p152
      %p155 = scmp.ne.s32.totalorder %s140, %s154
      %p156 = scmp.eq.s32.totalorder %s25, 0
      %p157 = por %p155, %p156
      %s159 = sadd.s32 %s158, 1
      %p162 = scmp.eq.s32.totalorder %s19, 1
      %p163 = scmp.ne.s32.totalorder %s158, %s160
      %p164 = scmp.eq.s32.totalorder %s19, 0
      %p165 = por %p163, %p164
      %p166 = scmp.ne.s32.totalorder %s158, %s160
      %p167 = scmp.eq.s32.totalorder %s24, 1
      %p168 = por %p166, %p167
      %p169 = scmp.ne.s32.totalorder %s160, %s161
      %p170 = scmp.eq.s32.totalorder %s24, 0
      %p171 = por %p169, %p170
      %p172 = scmp.ne.s32.totalorder %s160, %s161
      %p173 = scmp.eq.s32.totalorder %s25, 1
      %p174 = por %p172, %p173
      %p176 = scmp.ne.s32.totalorder %s161, %s175
      %p177 = scmp.eq.s32.totalorder %s25, 0
      %p178 = por %p176, %p177
      %s180 = sadd.s32 %s179, 1
      %p183 = scmp.eq.s32.totalorder %s19, 1
      %p184 = scmp.ne.s32.totalorder %s179, %s181
      %p185 = scmp.eq.s32.totalorder %s19, 0
      %p186 = por %p184, %p185
      %p187 = scmp.ne.s32.totalorder %s179, %s181
      %p188 = scmp.eq.s32.totalorder %s24, 1
      %p189 = por %p187, %p188
      %p190 = scmp.ne.s32.totalorder %s181, %s182
      %p191 = scmp.eq.s32.totalorder %s24, 0
      %p192 = por %p190, %p191
      %p193 = scmp.ne.s32.totalorder %s181, %s182
      %p194 = scmp.eq.s32.totalorder %s25, 1
      %p195 = por %p193, %p194
      %p197 = scmp.ne.s32.totalorder %s182, %s196
      %p198 = scmp.eq.s32.totalorder %s25, 0
      %p199 = por %p197, %p198
      %s200 = ssub.s32 %s19, %s26
      %p201 = scmp.eq.s32.totalorder %s200, 0
      %s203 = sadd.s32 %s202, 1
      %s204 = scalar_select %p201, %s202, %s203
      %p207 = pneg %p201
      %p208 = scmp.eq.s32.totalorder %s19, 1
      %p209 = por %p207, %p208
      %p210 = scmp.ne.s32.totalorder %s202, %s205
      %p211 = scmp.eq.s32.totalorder %s19, 0
      %p212 = por %p210, %p211
      %p213 = scmp.ne.s32.totalorder %s202, %s205
      %p214 = scmp.eq.s32.totalorder %s24, 1
      %p215 = por %p213, %p214
      %p216 = scmp.ne.s32.totalorder %s205, %s206
      %p217 = scmp.eq.s32.totalorder %s24, 0
      %p218 = por %p216, %p217
      %p219 = scmp.ne.s32.totalorder %s205, %s206
      %p220 = scmp.eq.s32.totalorder %s25, 1
      %p221 = por %p219, %p220
      %p223 = scmp.ne.s32.totalorder %s206, %s222
      %p224 = scmp.eq.s32.totalorder %s25, 0
      %p225 = por %p223, %p224
      %p226 = scmp.le.s32.totalorder 1, %s19
      %p227 = scmp.lt.s32.totalorder %s19, 3
      %p228 = pnand %p226, %p227
      %p229 = pneg %p228
      // Predicated region
      $region9: #{tpu_custom_call.1} parent=5 // pred_check
        _
      $region10: #{tpu_custom_call.1} parent=5 // pred_check_branch
        %231 = sbr.rel (%p228) target = $region12
      $region11: #{tpu_custom_call.1} parent=5 // pred_region
        %s232 = ssub.s32 %s19, 1
        // Predicated region
        $region13: #{tpu_custom_call.1} parent=11 // pred_check
          %p233 = pneg %p66
        $region14: #{tpu_custom_call.1} parent=11 // pred_check_branch
          %235 = sbr.rel (%p233) target = $region16
        $region15: #{tpu_custom_call.1} parent=11 // pred_region
          %s237 = ssub.s32 512, 512
          %238 = vsyncadd [#allocation3], %s237
          %s239 = sshll.u32 [#allocation2], 4
          %s240 = int_to_ptr.vmem [resolvable:$true] %s239
          %245 = dma.hbm_to_vmem [thread:$0]  %s1, 512, %s240, [#allocation3], 256, 256, 16
        $region16: #{tpu_custom_call.1} parent=11 // pred_fallthru
          _
        // Predicated region
        $region17: #{tpu_custom_call.1} parent=11 // pred_check
          %p246 = pneg %p87
        $region18: #{tpu_custom_call.1} parent=11 // pred_check_branch
          %248 = sbr.rel (%p246) target = $region20
        $region19: #{tpu_custom_call.1} parent=11 // pred_region
          %s250 = ssub.s32 24576, 24576
          %251 = vsyncadd [#allocation6], %s250
          %s252 = sshll.u32 [#allocation5], 4
          %s253 = int_to_ptr.vmem [resolvable:$true] %s252
          %258 = dma.hbm_to_vmem [thread:$0]  %s2, 24576, %s253, [#allocation6], 256, 256, 16
        $region20: #{tpu_custom_call.1} parent=11 // pred_fallthru
          _
        // Predicated region
        $region21: #{tpu_custom_call.1} parent=11 // pred_check
          %p259 = pneg %p108
        $region22: #{tpu_custom_call.1} parent=11 // pred_check_branch
          %261 = sbr.rel (%p259) target = $region24
        $region23: #{tpu_custom_call.1} parent=11 // pred_region
          _
        $region24: #{tpu_custom_call.1} parent=11 // pred_fallthru
          _
        // Predicated region
        $region25: #{tpu_custom_call.1} parent=11 // pred_check
          %p262 = pneg %p129
        $region26: #{tpu_custom_call.1} parent=11 // pred_check_branch
          %264 = sbr.rel (%p262) target = $region28
        $region27: #{tpu_custom_call.1} parent=11 // pred_region
          %s266 = ssub.s32 24576, 24576
          %267 = vsyncadd [#allocation6], %s266
          %s268 = sshll.u32 [#allocation7], 4
          %s269 = int_to_ptr.vmem [resolvable:$true] %s268
          %274 = dma.hbm_to_vmem [thread:$0]  %s4, 24576, %s269, [#allocation6], 256, 256, 16
        $region28: #{tpu_custom_call.1} parent=11 // pred_fallthru
          _
        // Predicated region
        $region29: #{tpu_custom_call.1} parent=11 // pred_check
          %p275 = pneg %p150
        $region30: #{tpu_custom_call.1} parent=11 // pred_check_branch
          %277 = sbr.rel (%p275) target = $region32
        $region31: #{tpu_custom_call.1} parent=11 // pred_region
          _
        $region32: #{tpu_custom_call.1} parent=11 // pred_fallthru
          _
        // Predicated region
        $region33: #{tpu_custom_call.1} parent=11 // pred_check
          %p278 = pneg %p171
        $region34: #{tpu_custom_call.1} parent=11 // pred_check_branch
          %280 = sbr.rel (%p278) target = $region36
        $region35: #{tpu_custom_call.1} parent=11 // pred_region
          _
        $region36: #{tpu_custom_call.1} parent=11 // pred_fallthru
          _
        // Predicated region
        $region37: #{tpu_custom_call.1} parent=11 // pred_check
          %p281 = pneg %p192
        $region38: #{tpu_custom_call.1} parent=11 // pred_check_branch
          %283 = sbr.rel (%p281) target = $region40
        $region39: #{tpu_custom_call.1} parent=11 // pred_region
          _
        $region40: #{tpu_custom_call.1} parent=11 // pred_fallthru
          _
      $region12: #{tpu_custom_call.1} parent=5 // pred_fallthru
        _
      %p284 = scmp.lt.s32.totalorder %s19, 2
      // Predicated region
      $region41: #{tpu_custom_call.1} parent=5 // pred_check
        %p285 = pneg %p284
      $region42: #{tpu_custom_call.1} parent=5 // pred_check_branch
        %287 = sbr.rel (%p285) target = $region44
      $region43: #{tpu_custom_call.1} parent=5 // pred_region
        // Predicated region
        $region45: #{tpu_custom_call.1} parent=43 // pred_check
          %p288 = pneg %p39
        $region46: #{tpu_custom_call.1} parent=43 // pred_check_branch
          %290 = sbr.rel (%p288) target = $region48
        $region47: #{tpu_custom_call.1} parent=43 // pred_region
          %s291 = smul.u32 16, %s19
          %p292 = scmp.lt.s32.totalorder %s291, 31
          %s293 = scalar_select %p292, %s291, 31
          %s294 = smul.addr %s293, 8
          %s295 = scalar_lea.vmem %s0, %s294
          %s296 = smul.u32 16, %s19
        $region48: #{tpu_custom_call.1} parent=43 // pred_fallthru
          _
      $region44: #{tpu_custom_call.1} parent=5 // pred_fallthru
        _
      %p297 = scmp.le.s32.totalorder 1, %s19
      %p298 = scmp.lt.s32.totalorder %s19, 3
      %p299 = pnand %p297, %p298
      %p300 = pneg %p299
      // Predicated region
      $region49: #{tpu_custom_call.1} parent=5 // pred_check
        _
      $region50: #{tpu_custom_call.1} parent=5 // pred_check_branch
        %302 = sbr.rel (%p299) target = $region52
      $region51: #{tpu_custom_call.1} parent=5 // pred_region
        %s303 = ssub.s32 %s19, 1
        // Predicated region
        $region53: #{tpu_custom_call.1} parent=51 // pred_check
          %p304 = pneg %p66
        $region54: #{tpu_custom_call.1} parent=51 // pred_check_branch
          %306 = sbr.rel (%p304) target = $region56
        $region55: #{tpu_custom_call.1} parent=51 // pred_region
          %307 = dma.done [#allocation3], 512
        $region56: #{tpu_custom_call.1} parent=51 // pred_fallthru
          _
        // Predicated region
        $region57: #{tpu_custom_call.1} parent=51 // pred_check
          %p308 = pneg %p87
        $region58: #{tpu_custom_call.1} parent=51 // pred_check_branch
          %310 = sbr.rel (%p308) target = $region60
        $region59: #{tpu_custom_call.1} parent=51 // pred_region
          %311 = dma.done [#allocation6], 24576
        $region60: #{tpu_custom_call.1} parent=51 // pred_fallthru
          _
        // Predicated region
        $region61: #{tpu_custom_call.1} parent=51 // pred_check
          %p312 = pneg %p129
        $region62: #{tpu_custom_call.1} parent=51 // pred_check_branch
          %314 = sbr.rel (%p312) target = $region64
        $region63: #{tpu_custom_call.1} parent=51 // pred_region
          %315 = dma.done [#allocation6], 24576
        $region64: #{tpu_custom_call.1} parent=51 // pred_fallthru
          _
        %s316 = smul.u32 16, %s24
        %p317 = scmp.lt.s32.totalorder %s316, 31
        %s318 = scalar_select %p317, %s316, 31
        %s319 = smul.addr %s318, 8
        %s320 = scalar_lea.vmem %s0, %s319
        %p321 = pneg %p45
        %p322 = pneg %p42
        %p323 = pneg %p66
        %p324 = pneg %p63
        %p325 = pneg %p87
        %p326 = pneg %p84
        %p327 = pneg %p108
        %p328 = pneg %p105
        %p329 = pneg %p129
        %p330 = pneg %p126
        %p331 = pneg %p150
        %p332 = pneg %p147
        %p333 = pneg %p171
        %p334 = pneg %p168
        %p335 = pneg %p192
        %p336 = pneg %p189
        %p337 = pneg %p218
        %p338 = pneg %p215
        %s339 = sand.u32 %s205, 1
        %s340 = scalar_lea.sflag [#allocation4], %s339
        %s341 = sand.u32 %s205, 1
        %s342 = smul.addr %s341, 256
        %s343 = scalar_lea.vmem [#allocation8], %s342
        %s344 = smul.u32 16, %s24
        %p345 = scmp.lt.s32.totalorder %s344, 31
        %s346 = scalar_select %p345, %s344, 31
        %s347 = smul.addr %s346, 8
        %s348 = scalar_lea.vmem %s0, %s347
        %s349 = smul.u32 16, %s24
        %s350 = smul.u32 16, %s24
        %v351 = vld [vmem:[%s348] sm:$0xff]
        %v352 = vld [vmem:[%s348 + $0x8] sm:$0xff]
        %v353 = vld [vmem:[%s348 + $0x10] sm:$0xff]
        %v354 = vld [vmem:[%s348 + $0x18] sm:$0xff]
        %v355 = vld [vmem:[%s348 + $0x20] sm:$0xff]
        %v356 = vld [vmem:[%s348 + $0x28] sm:$0xff]
        %v357 = vld [vmem:[%s348 + $0x30] sm:$0xff]
        %v358 = vld [vmem:[%s348 + $0x38] sm:$0xff]
        %v359 = vld [vmem:[%s348 + $0x40] sm:$0xff]
        %v360 = vld [vmem:[%s348 + $0x48] sm:$0xff]
        %v361 = vld [vmem:[%s348 + $0x50] sm:$0xff]
        %v362 = vld [vmem:[%s348 + $0x58] sm:$0xff]
        %v363 = vld [vmem:[%s348 + $0x60] sm:$0xff]
        %v364 = vld [vmem:[%s348 + $0x68] sm:$0xff]
        %v365 = vld [vmem:[%s348 + $0x70] sm:$0xff]
        %v366 = vld [vmem:[%s348 + $0x78] sm:$0xff]
        %v367 = vlaneseq
        %v368 = vand.u32 %v367, 127
        %369 = vset.pattern.permute.xlu0 0
        %370 = vperm.xlu0 %369, %v351
        %v371 = vpop.permute.xlu0 %370
        %372 = vset.pattern.permute.xlu0 0
        %373 = vperm.xlu0 %372, %v352
        %v374 = vpop.permute.xlu0 %373
        %375 = vset.pattern.permute.xlu0 0
        %376 = vperm.xlu0 %375, %v353
        %v377 = vpop.permute.xlu0 %376
        %378 = vset.pattern.permute.xlu0 0
        %379 = vperm.xlu0 %378, %v354
        %v380 = vpop.permute.xlu0 %379
        %381 = vset.pattern.permute.xlu0 0
        %382 = vperm.xlu0 %381, %v355
        %v383 = vpop.permute.xlu0 %382
        %384 = vset.pattern.permute.xlu0 0
        %385 = vperm.xlu0 %384, %v356
        %v386 = vpop.permute.xlu0 %385
        %387 = vset.pattern.permute.xlu0 0
        %388 = vperm.xlu0 %387, %v357
        %v389 = vpop.permute.xlu0 %388
        %390 = vset.pattern.permute.xlu0 0
        %391 = vperm.xlu0 %390, %v358
        %v392 = vpop.permute.xlu0 %391
        %393 = vset.pattern.permute.xlu0 0
        %394 = vperm.xlu0 %393, %v359
        %v395 = vpop.permute.xlu0 %394
        %396 = vset.pattern.permute.xlu0 0
        %397 = vperm.xlu0 %396, %v360
        %v398 = vpop.permute.xlu0 %397
        %399 = vset.pattern.permute.xlu0 0
        %400 = vperm.xlu0 %399, %v361
        %v401 = vpop.permute.xlu0 %400
        %402 = vset.pattern.permute.xlu0 0
        %403 = vperm.xlu0 %402, %v362
        %v404 = vpop.permute.xlu0 %403
        %405 = vset.pattern.permute.xlu0 0
        %406 = vperm.xlu0 %405, %v363
        %v407 = vpop.permute.xlu0 %406
        %408 = vset.pattern.permute.xlu0 0
        %409 = vperm.xlu0 %408, %v364
        %v410 = vpop.permute.xlu0 %409
        %411 = vset.pattern.permute.xlu0 0
        %412 = vperm.xlu0 %411, %v365
        %v413 = vpop.permute.xlu0 %412
        %414 = vset.pattern.permute.xlu0 0
        %415 = vperm.xlu0 %414, %v366
        %v416 = vpop.permute.xlu0 %415
        %vm417 = vcmp.eq.s32.totalorder %v371, %v368
        %vm418 = vcmp.eq.s32.totalorder %v374, %v368
        %vm419 = vcmp.eq.s32.totalorder %v377, %v368
        %vm420 = vcmp.eq.s32.totalorder %v380, %v368
        %vm421 = vcmp.eq.s32.totalorder %v383, %v368
        %vm422 = vcmp.eq.s32.totalorder %v386, %v368
        %vm423 = vcmp.eq.s32.totalorder %v389, %v368
        %vm424 = vcmp.eq.s32.totalorder %v392, %v368
        %vm425 = vcmp.eq.s32.totalorder %v395, %v368
        %vm426 = vcmp.eq.s32.totalorder %v398, %v368
        %vm427 = vcmp.eq.s32.totalorder %v401, %v368
        %vm428 = vcmp.eq.s32.totalorder %v404, %v368
        %vm429 = vcmp.eq.s32.totalorder %v407, %v368
        %vm430 = vcmp.eq.s32.totalorder %v410, %v368
        %vm431 = vcmp.eq.s32.totalorder %v413, %v368
        %vm432 = vcmp.eq.s32.totalorder %v416, %v368
        %v433 = vsel %vm417, 1, 0
        %v434 = vsel %vm418, 1, 0
        %v435 = vsel %vm419, 1, 0
        %v436 = vsel %vm420, 1, 0
        %v437 = vsel %vm421, 1, 0
        %v438 = vsel %vm422, 1, 0
        %v439 = vsel %vm423, 1, 0
        %v440 = vsel %vm424, 1, 0
        %v441 = vsel %vm425, 1, 0
        %v442 = vsel %vm426, 1, 0
        %v443 = vsel %vm427, 1, 0
        %v444 = vsel %vm428, 1, 0
        %v445 = vsel %vm429, 1, 0
        %v446 = vsel %vm430, 1, 0
        %v447 = vsel %vm431, 1, 0
        %v448 = vsel %vm432, 1, 0
        %v449 = vcvt.s32.f32 %v433
        %v450 = vcvt.s32.f32 %v434
        %v451 = vcvt.s32.f32 %v435
        %v452 = vcvt.s32.f32 %v436
        %v453 = vcvt.s32.f32 %v437
        %v454 = vcvt.s32.f32 %v438
        %v455 = vcvt.s32.f32 %v439
        %v456 = vcvt.s32.f32 %v440
        %v457 = vcvt.s32.f32 %v441
        %v458 = vcvt.s32.f32 %v442
        %v459 = vcvt.s32.f32 %v443
        %v460 = vcvt.s32.f32 %v444
        %v461 = vcvt.s32.f32 %v445
        %v462 = vcvt.s32.f32 %v446
        %v463 = vcvt.s32.f32 %v447
        %v464 = vcvt.s32.f32 %v448
        %v465 = vld [vmem:[#allocation2] sm:$0xff]
        %v466 = vld [vmem:[#allocation2 + $0x8] sm:$0xff]
        %v467 = vld [vmem:[#allocation2 + $0x10] sm:$0xff]
        %v468 = vld [vmem:[#allocation2 + $0x18] sm:$0xff]
        %vm469 = vcmask 130048
        %v471 = vsel %vm469, %v449, 0
        %v474 = vsel %vm469, %v450, 0
        %v477 = vsel %vm469, %v451, 0
        %v480 = vsel %vm469, %v452, 0
        %v483 = vsel %vm469, %v453, 0
        %v486 = vsel %vm469, %v454, 0
        %v489 = vsel %vm469, %v455, 0
        %v492 = vsel %vm469, %v456, 0
        %v495 = vsel %vm469, %v457, 0
        %v498 = vsel %vm469, %v458, 0
        %v501 = vsel %vm469, %v459, 0
        %v504 = vsel %vm469, %v460, 0
        %v507 = vsel %vm469, %v461, 0
        %v510 = vsel %vm469, %v462, 0
        %v513 = vsel %vm469, %v463, 0
        %v516 = vsel %vm469, %v464, 0
        %518 = vmatprep.subr.mxu0 0.0
        %519 = vmatpush1.msra.mxu0 0.0
        %520 = vmatprep.subr.mxu0 0.0
        %521 = vmatpush1.msra.mxu0 0.0
        %522 = vmatprep.subr.mxu0 0.0
        %523 = vmatpush1.msra.mxu0 0.0
        %524 = vmatprep.subr.mxu0 0.0
        %525 = vmatpush1.msra.mxu0 0.0
        %526 = vmatprep.subr.mxu0 0.0
        %527 = vmatpush1.msra.mxu0 0.0
        %528 = vmatprep.subr.mxu0 0.0
        %529 = vmatpush1.msra.mxu0 0.0
        %530 = vmatprep.subr.mxu0 0.0
        %531 = vmatpush1.msra.mxu0 0.0
        %532 = vmatprep.subr.mxu0 0.0
        %533 = vmatpush1.msra.mxu0 0.0
        %534 = vmatprep.subr.mxu0 0.0
        %535 = vmatpush1.msra.mxu0 0.0
        %536 = vmatprep.subr.mxu0 0.0
        %537 = vmatpush1.msra.mxu0 0.0
        %538 = vmatprep.subr.mxu0 0.0
        %539 = vmatpush1.msra.mxu0 0.0
        %540 = vmatprep.subr.mxu0 0.0
        %541 = vmatpush1.msra.mxu0 0.0
        %542 = vmatprep.subr.mxu0 0.0
        %543 = vmatpush1.msra.mxu0 0.0
        %544 = vmatprep.subr.mxu0 0.0
        %545 = vmatpush1.msra.mxu0 0.0
        %546 = vmatprep.subr.mxu0 %v468
        %547 = vmatpush1.msra.mxu0 %v467
        %548 = vmatprep.subr.mxu0 %v466
        %549 = vmatpush1.msra.mxu0 %v465
        %550 = vmatprep.subr.mxu0 0.0
        %551 = vmatpush2.msra.mxu0 0.0
        %552 = vmatprep.subr.mxu0 0.0
        %553 = vmatpush2.msra.mxu0 0.0
        %554 = vmatprep.subr.mxu0 0.0
        %555 = vmatpush2.msra.mxu0 0.0
        %556 = vmatprep.subr.mxu0 0.0
        %557 = vmatpush2.msra.mxu0 0.0
        %558 = vmatprep.subr.mxu0 0.0
        %559 = vmatpush2.msra.mxu0 0.0
        %560 = vmatprep.subr.mxu0 0.0
        %561 = vmatpush2.msra.mxu0 0.0
        %562 = vmatprep.subr.mxu0 0.0
        %563 = vmatpush2.msra.mxu0 0.0
        %564 = vmatprep.subr.mxu0 0.0
        %565 = vmatpush2.msra.mxu0 0.0
        %566 = vmatprep.subr.mxu0 0.0
        %567 = vmatpush2.msra.mxu0 0.0
        %568 = vmatprep.subr.mxu0 0.0
        %569 = vmatpush2.msra.mxu0 0.0
        %570 = vmatprep.subr.mxu0 0.0
        %571 = vmatpush2.msra.mxu0 0.0
        %572 = vmatprep.subr.mxu0 0.0
        %573 = vmatpush2.msra.mxu0 0.0
        %574 = vmatprep.subr.mxu0 0.0
        %575 = vmatpush2.msra.mxu0 0.0
        %576 = vmatprep.subr.mxu0 0.0
        %577 = vmatpush2.msra.mxu0 0.0
        %578 = vmatprep.subr.mxu0 0.0
        %579 = vmatpush2.msra.mxu0 0.0
        %580 = vmatprep.subr.mxu0 0.0
        %581 = vmatpush2.msra.mxu0 0.0
        %582 = vmatprep.mubr.f32.mxu0 0.0
        %583 = vmatmul.mubr.f32.gmra.mxu0 %v471
        %v584 = vpop.f32.mrf.mxu0
        %v585 = vadd.f32 0.0, %v584
        %v586 = vpop.f32.mrf.mxu0
        %v587 = vadd.f32 0.0, %v586
        %588 = vmatprep.mubr.f32.mxu0 0.0
        %589 = vmatmul.mubr.f32.gmra.mxu0 %v474
        %v590 = vpop.f32.mrf.mxu0
        %v591 = vadd.f32 0.0, %v590
        %v592 = vpop.f32.mrf.mxu0
        %v593 = vadd.f32 0.0, %v592
        %594 = vmatprep.mubr.f32.mxu0 0.0
        %595 = vmatmul.mubr.f32.gmra.mxu0 %v477
        %v596 = vpop.f32.mrf.mxu0
        %v597 = vadd.f32 0.0, %v596
        %v598 = vpop.f32.mrf.mxu0
        %v599 = vadd.f32 0.0, %v598
        %600 = vmatprep.mubr.f32.mxu0 0.0
        %601 = vmatmul.mubr.f32.gmra.mxu0 %v480
        %v602 = vpop.f32.mrf.mxu0
        %v603 = vadd.f32 0.0, %v602
        %v604 = vpop.f32.mrf.mxu0
        %v605 = vadd.f32 0.0, %v604
        %606 = vmatprep.mubr.f32.mxu0 0.0
        %607 = vmatmul.mubr.f32.gmra.mxu0 %v483
        %v608 = vpop.f32.mrf.mxu0
        %v609 = vadd.f32 0.0, %v608
        %v610 = vpop.f32.mrf.mxu0
        %v611 = vadd.f32 0.0, %v610
        %612 = vmatprep.mubr.f32.mxu0 0.0
        %613 = vmatmul.mubr.f32.gmra.mxu0 %v486
        %v614 = vpop.f32.mrf.mxu0
        %v615 = vadd.f32 0.0, %v614
        %v616 = vpop.f32.mrf.mxu0
        %v617 = vadd.f32 0.0, %v616
        %618 = vmatprep.mubr.f32.mxu0 0.0
        %619 = vmatmul.mubr.f32.gmra.mxu0 %v489
        %v620 = vpop.f32.mrf.mxu0
        %v621 = vadd.f32 0.0, %v620
        %v622 = vpop.f32.mrf.mxu0
        %v623 = vadd.f32 0.0, %v622
        %624 = vmatprep.mubr.f32.mxu0 0.0
        %625 = vmatmul.mubr.f32.gmra.mxu0 %v492
        %v626 = vpop.f32.mrf.mxu0
        %v627 = vadd.f32 0.0, %v626
        %v628 = vpop.f32.mrf.mxu0
        %v629 = vadd.f32 0.0, %v628
        %630 = vmatprep.mubr.f32.mxu0 0.0
        %631 = vmatmul.mubr.f32.gmra.mxu0 %v495
        %v632 = vpop.f32.mrf.mxu0
        %v633 = vadd.f32 0.0, %v632
        %v634 = vpop.f32.mrf.mxu0
        %v635 = vadd.f32 0.0, %v634
        %636 = vmatprep.mubr.f32.mxu0 0.0
        %637 = vmatmul.mubr.f32.gmra.mxu0 %v498
        %v638 = vpop.f32.mrf.mxu0
        %v639 = vadd.f32 0.0, %v638
        %v640 = vpop.f32.mrf.mxu0
        %v641 = vadd.f32 0.0, %v640
        %642 = vmatprep.mubr.f32.mxu0 0.0
        %643 = vmatmul.mubr.f32.gmra.mxu0 %v501
        %v644 = vpop.f32.mrf.mxu0
        %v645 = vadd.f32 0.0, %v644
        %v646 = vpop.f32.mrf.mxu0
        %v647 = vadd.f32 0.0, %v646
        %648 = vmatprep.mubr.f32.mxu0 0.0
        %649 = vmatmul.mubr.f32.gmra.mxu0 %v504
        %v650 = vpop.f32.mrf.mxu0
        %v651 = vadd.f32 0.0, %v650
        %v652 = vpop.f32.mrf.mxu0
        %v653 = vadd.f32 0.0, %v652
        %654 = vmatprep.mubr.f32.mxu0 0.0
        %655 = vmatmul.mubr.f32.gmra.mxu0 %v507
        %v656 = vpop.f32.mrf.mxu0
        %v657 = vadd.f32 0.0, %v656
        %v658 = vpop.f32.mrf.mxu0
        %v659 = vadd.f32 0.0, %v658
        %660 = vmatprep.mubr.f32.mxu0 0.0
        %661 = vmatmul.mubr.f32.gmra.mxu0 %v510
        %v662 = vpop.f32.mrf.mxu0
        %v663 = vadd.f32 0.0, %v662
        %v664 = vpop.f32.mrf.mxu0
        %v665 = vadd.f32 0.0, %v664
        %666 = vmatprep.mubr.f32.mxu0 0.0
        %667 = vmatmul.mubr.f32.gmra.mxu0 %v513
        %v668 = vpop.f32.mrf.mxu0
        %v669 = vadd.f32 0.0, %v668
        %v670 = vpop.f32.mrf.mxu0
        %v671 = vadd.f32 0.0, %v670
        %672 = vmatprep.mubr.f32.mxu0 0.0
        %673 = vmatmul.mubr.f32.gmra.mxu0 %v516
        %v674 = vpop.f32.mrf.mxu0
        %v675 = vadd.f32 0.0, %v674
        %v676 = vpop.f32.mrf.mxu0
        %v677 = vadd.f32 0.0, %v676
        %678 = vdwg.mxu0
        %v679 = vlaneseq
        %v680 = vshrl.u32 %v679, 7
        %v681 = vadd.s32 %v680, 8
        %v682 = vadd.s32 %v680, 16
        %v683 = vadd.s32 %v680, 24
        %v684 = vadd.s32 %v680, 32
        %v685 = vadd.s32 %v680, 40
        %v686 = vadd.s32 %v680, 48
        %v687 = vadd.s32 %v680, 56
        %v688 = vadd.s32 %v680, 64
        %v689 = vadd.s32 %v680, 72
        %v690 = vadd.s32 %v680, 80
        %v691 = vadd.s32 %v680, 88
        %v692 = vadd.s32 %v680, 96
        %v693 = vadd.s32 %v680, 104
        %v694 = vadd.s32 %v680, 112
        %v695 = vadd.s32 %v680, 120
        %v696 = vsub.s32 %v680, 1
        %v697 = vsub.s32 %v681, 1
        %v698 = vsub.s32 %v682, 1
        %v699 = vsub.s32 %v683, 1
        %v700 = vsub.s32 %v684, 1
        %v701 = vsub.s32 %v685, 1
        %v702 = vsub.s32 %v686, 1
        %v703 = vsub.s32 %v687, 1
        %v704 = vsub.s32 %v688, 1
        %v705 = vsub.s32 %v689, 1
        %v706 = vsub.s32 %v690, 1
        %v707 = vsub.s32 %v691, 1
        %v708 = vsub.s32 %v692, 1
        %v709 = vsub.s32 %v693, 1
        %v710 = vsub.s32 %v694, 1
        %v711 = vsub.s32 %v695, 1
        %vm712 = vcmp.eq.s32.totalorder %v368, %v696
        %vm713 = vcmp.eq.s32.totalorder %v368, %v697
        %vm714 = vcmp.eq.s32.totalorder %v368, %v698
        %vm715 = vcmp.eq.s32.totalorder %v368, %v699
        %vm716 = vcmp.eq.s32.totalorder %v368, %v700
        %vm717 = vcmp.eq.s32.totalorder %v368, %v701
        %vm718 = vcmp.eq.s32.totalorder %v368, %v702
        %vm719 = vcmp.eq.s32.totalorder %v368, %v703
        %vm720 = vcmp.eq.s32.totalorder %v368, %v704
        %vm721 = vcmp.eq.s32.totalorder %v368, %v705
        %vm722 = vcmp.eq.s32.totalorder %v368, %v706
        %vm723 = vcmp.eq.s32.totalorder %v368, %v707
        %vm724 = vcmp.eq.s32.totalorder %v368, %v708
        %vm725 = vcmp.eq.s32.totalorder %v368, %v709
        %vm726 = vcmp.eq.s32.totalorder %v368, %v710
        %vm727 = vcmp.eq.s32.totalorder %v368, %v711
        %vm728 = vcmp.lt.s32.totalorder %v680, 0
        %v729 = vsub.s32 0, %v680
        %v730 = vsel %vm728, %v729, %v680
        %v731 = vshrl.u32 %v730, 3
        %v732 = vand.u32 %v730, 7
        %v733 = vsub.s32 0, %v732
        %v734 = vsel %vm728, %v733, %v732
        %vm735 = vcmp.lt.s32.totalorder %v681, 0
        %v736 = vsub.s32 0, %v681
        %v737 = vsel %vm735, %v736, %v681
        %v738 = vshrl.u32 %v737, 3
        %v739 = vand.u32 %v737, 7
        %v740 = vsub.s32 0, %v739
        %v741 = vsel %vm735, %v740, %v739
        %vm742 = vcmp.lt.s32.totalorder %v682, 0
        %v743 = vsub.s32 0, %v682
        %v744 = vsel %vm742, %v743, %v682
        %v745 = vshrl.u32 %v744, 3
        %v746 = vand.u32 %v744, 7
        %v747 = vsub.s32 0, %v746
        %v748 = vsel %vm742, %v747, %v746
        %vm749 = vcmp.lt.s32.totalorder %v683, 0
        %v750 = vsub.s32 0, %v683
        %v751 = vsel %vm749, %v750, %v683
        %v752 = vshrl.u32 %v751, 3
        %v753 = vand.u32 %v751, 7
        %v754 = vsub.s32 0, %v753
        %v755 = vsel %vm749, %v754, %v753
        %vm756 = vcmp.lt.s32.totalorder %v684, 0
        %v757 = vsub.s32 0, %v684
        %v758 = vsel %vm756, %v757, %v684
        %v759 = vshrl.u32 %v758, 3
        %v760 = vand.u32 %v758, 7
        %v761 = vsub.s32 0, %v760
        %v762 = vsel %vm756, %v761, %v760
        %vm763 = vcmp.lt.s32.totalorder %v685, 0
        %v764 = vsub.s32 0, %v685
        %v765 = vsel %vm763, %v764, %v685
        %v766 = vshrl.u32 %v765, 3
        %v767 = vand.u32 %v765, 7
        %v768 = vsub.s32 0, %v767
        %v769 = vsel %vm763, %v768, %v767
        %vm770 = vcmp.lt.s32.totalorder %v686, 0
        %v771 = vsub.s32 0, %v686
        %v772 = vsel %vm770, %v771, %v686
        %v773 = vshrl.u32 %v772, 3
        %v774 = vand.u32 %v772, 7
        %v775 = vsub.s32 0, %v774
        %v776 = vsel %vm770, %v775, %v774
        %vm777 = vcmp.lt.s32.totalorder %v687, 0
        %v778 = vsub.s32 0, %v687
        %v779 = vsel %vm777, %v778, %v687
        %v780 = vshrl.u32 %v779, 3
        %v781 = vand.u32 %v779, 7
        %v782 = vsub.s32 0, %v781
        %v783 = vsel %vm777, %v782, %v781
        %vm784 = vcmp.lt.s32.totalorder %v688, 0
        %v785 = vsub.s32 0, %v688
        %v786 = vsel %vm784, %v785, %v688
        %v787 = vshrl.u32 %v786, 3
        %v788 = vand.u32 %v786, 7
        %v789 = vsub.s32 0, %v788
        %v790 = vsel %vm784, %v789, %v788
        %vm791 = vcmp.lt.s32.totalorder %v689, 0
        %v792 = vsub.s32 0, %v689
        %v793 = vsel %vm791, %v792, %v689
        %v794 = vshrl.u32 %v793, 3
        %v795 = vand.u32 %v793, 7
        %v796 = vsub.s32 0, %v795
        %v797 = vsel %vm791, %v796, %v795
        %vm798 = vcmp.lt.s32.totalorder %v690, 0
        %v799 = vsub.s32 0, %v690
        %v800 = vsel %vm798, %v799, %v690
        %v801 = vshrl.u32 %v800, 3
        %v802 = vand.u32 %v800, 7
        %v803 = vsub.s32 0, %v802
        %v804 = vsel %vm798, %v803, %v802
        %vm805 = vcmp.lt.s32.totalorder %v691, 0
        %v806 = vsub.s32 0, %v691
        %v807 = vsel %vm805, %v806, %v691
        %v808 = vshrl.u32 %v807, 3
        %v809 = vand.u32 %v807, 7
        %v810 = vsub.s32 0, %v809
        %v811 = vsel %vm805, %v810, %v809
        %vm812 = vcmp.lt.s32.totalorder %v692, 0
        %v813 = vsub.s32 0, %v692
        %v814 = vsel %vm812, %v813, %v692
        %v815 = vshrl.u32 %v814, 3
        %v816 = vand.u32 %v814, 7
        %v817 = vsub.s32 0, %v816
        %v818 = vsel %vm812, %v817, %v816
        %vm819 = vcmp.lt.s32.totalorder %v693, 0
        %v820 = vsub.s32 0, %v693
        %v821 = vsel %vm819, %v820, %v693
        %v822 = vshrl.u32 %v821, 3
        %v823 = vand.u32 %v821, 7
        %v824 = vsub.s32 0, %v823
        %v825 = vsel %vm819, %v824, %v823
        %vm826 = vcmp.lt.s32.totalorder %v694, 0
        %v827 = vsub.s32 0, %v694
        %v828 = vsel %vm826, %v827, %v694
        %v829 = vshrl.u32 %v828, 3
        %v830 = vand.u32 %v828, 7
        %v831 = vsub.s32 0, %v830
        %v832 = vsel %vm826, %v831, %v830
        %vm833 = vcmp.lt.s32.totalorder %v695, 0
        %v834 = vsub.s32 0, %v695
        %v835 = vsel %vm833, %v834, %v695
        %v836 = vshrl.u32 %v835, 3
        %v837 = vand.u32 %v835, 7
        %v838 = vsub.s32 0, %v837
        %v839 = vsel %vm833, %v838, %v837
        %vm840 = vcmp.ne.s32.totalorder %v734, 0
        %vm841 = vcmp.ne.s32.totalorder %v741, 0
        %vm842 = vcmp.ne.s32.totalorder %v748, 0
        %vm843 = vcmp.ne.s32.totalorder %v755, 0
        %vm844 = vcmp.ne.s32.totalorder %v762, 0
        %vm845 = vcmp.ne.s32.totalorder %v769, 0
        %vm846 = vcmp.ne.s32.totalorder %v776, 0
        %vm847 = vcmp.ne.s32.totalorder %v783, 0
        %vm848 = vcmp.ne.s32.totalorder %v790, 0
        %vm849 = vcmp.ne.s32.totalorder %v797, 0
        %vm850 = vcmp.ne.s32.totalorder %v804, 0
        %vm851 = vcmp.ne.s32.totalorder %v811, 0
        %vm852 = vcmp.ne.s32.totalorder %v818, 0
        %vm853 = vcmp.ne.s32.totalorder %v825, 0
        %vm854 = vcmp.ne.s32.totalorder %v832, 0
        %vm855 = vcmp.ne.s32.totalorder %v839, 0
        %vm856 = vcmp.lt.s32.totalorder %v734, 0
        %vm857 = vcmp.lt.s32.totalorder %v741, 0
        %vm858 = vcmp.lt.s32.totalorder %v748, 0
        %vm859 = vcmp.lt.s32.totalorder %v755, 0
        %vm860 = vcmp.lt.s32.totalorder %v762, 0
        %vm861 = vcmp.lt.s32.totalorder %v769, 0
        %vm862 = vcmp.lt.s32.totalorder %v776, 0
        %vm863 = vcmp.lt.s32.totalorder %v783, 0
        %vm864 = vcmp.lt.s32.totalorder %v790, 0
        %vm865 = vcmp.lt.s32.totalorder %v797, 0
        %vm866 = vcmp.lt.s32.totalorder %v804, 0
        %vm867 = vcmp.lt.s32.totalorder %v811, 0
        %vm868 = vcmp.lt.s32.totalorder %v818, 0
        %vm869 = vcmp.lt.s32.totalorder %v825, 0
        %vm870 = vcmp.lt.s32.totalorder %v832, 0
        %vm871 = vcmp.lt.s32.totalorder %v839, 0
        %vm872 = vmand %vm856, %vm840
        %vm873 = vmand %vm857, %vm841
        %vm874 = vmand %vm858, %vm842
        %vm875 = vmand %vm859, %vm843
        %vm876 = vmand %vm860, %vm844
        %vm877 = vmand %vm861, %vm845
        %vm878 = vmand %vm862, %vm846
        %vm879 = vmand %vm863, %vm847
        %vm880 = vmand %vm864, %vm848
        %vm881 = vmand %vm865, %vm849
        %vm882 = vmand %vm866, %vm850
        %vm883 = vmand %vm867, %vm851
        %vm884 = vmand %vm868, %vm852
        %vm885 = vmand %vm869, %vm853
        %vm886 = vmand %vm870, %vm854
        %vm887 = vmand %vm871, %vm855
        %v888 = vadd.s32 %v734, 8
        %v889 = vadd.s32 %v741, 8
        %v890 = vadd.s32 %v748, 8
        %v891 = vadd.s32 %v755, 8
        %v892 = vadd.s32 %v762, 8
        %v893 = vadd.s32 %v769, 8
        %v894 = vadd.s32 %v776, 8
        %v895 = vadd.s32 %v783, 8
        %v896 = vadd.s32 %v790, 8
        %v897 = vadd.s32 %v797, 8
        %v898 = vadd.s32 %v804, 8
        %v899 = vadd.s32 %v811, 8
        %v900 = vadd.s32 %v818, 8
        %v901 = vadd.s32 %v825, 8
        %v902 = vadd.s32 %v832, 8
        %v903 = vadd.s32 %v839, 8
        %v904 = vsel %vm872, %v888, %v734
        %v905 = vsel %vm873, %v889, %v741
        %v906 = vsel %vm874, %v890, %v748
        %v907 = vsel %vm875, %v891, %v755
        %v908 = vsel %vm876, %v892, %v762
        %v909 = vsel %vm877, %v893, %v769
        %v910 = vsel %vm878, %v894, %v776
        %v911 = vsel %vm879, %v895, %v783
        %v912 = vsel %vm880, %v896, %v790
        %v913 = vsel %vm881, %v897, %v797
        %v914 = vsel %vm882, %v898, %v804
        %v915 = vsel %vm883, %v899, %v811
        %v916 = vsel %vm884, %v900, %v818
        %v917 = vsel %vm885, %v901, %v825
        %v918 = vsel %vm886, %v902, %v832
        %v919 = vsel %vm887, %v903, %v839
        %vm920 = vcmp.ge.s32.totalorder %v904, 1
        %vm921 = vcmp.ge.s32.totalorder %v905, 1
        %vm922 = vcmp.ge.s32.totalorder %v906, 1
        %vm923 = vcmp.ge.s32.totalorder %v907, 1
        %vm924 = vcmp.ge.s32.totalorder %v908, 1
        %vm925 = vcmp.ge.s32.totalorder %v909, 1
        %vm926 = vcmp.ge.s32.totalorder %v910, 1
        %vm927 = vcmp.ge.s32.totalorder %v911, 1
        %vm928 = vcmp.ge.s32.totalorder %v912, 1
        %vm929 = vcmp.ge.s32.totalorder %v913, 1
        %vm930 = vcmp.ge.s32.totalorder %v914, 1
        %vm931 = vcmp.ge.s32.totalorder %v915, 1
        %vm932 = vcmp.ge.s32.totalorder %v916, 1
        %vm933 = vcmp.ge.s32.totalorder %v917, 1
        %vm934 = vcmp.ge.s32.totalorder %v918, 1
        %vm935 = vcmp.ge.s32.totalorder %v919, 1
        %vm936 = vmand %vm712, %vm920
        %vm937 = vmand %vm713, %vm921
        %vm938 = vmand %vm714, %vm922
        %vm939 = vmand %vm715, %vm923
        %vm940 = vmand %vm716, %vm924
        %vm941 = vmand %vm717, %vm925
        %vm942 = vmand %vm718, %vm926
        %vm943 = vmand %vm719, %vm927
        %vm944 = vmand %vm720, %vm928
        %vm945 = vmand %vm721, %vm929
        %vm946 = vmand %vm722, %vm930
        %vm947 = vmand %vm723, %vm931
        %vm948 = vmand %vm724, %vm932
        %vm949 = vmand %vm725, %vm933
        %vm950 = vmand %vm726, %vm934
        %vm951 = vmand %vm727, %vm935
        %v952 = vsel %vm936, 1, 0
        %v953 = vsel %vm937, 1, 0
        %v954 = vsel %vm938, 1, 0
        %v955 = vsel %vm939, 1, 0
        %v956 = vsel %vm940, 1, 0
        %v957 = vsel %vm941, 1, 0
        %v958 = vsel %vm942, 1, 0
        %v959 = vsel %vm943, 1, 0
        %v960 = vsel %vm944, 1, 0
        %v961 = vsel %vm945, 1, 0
        %v962 = vsel %vm946, 1, 0
        %v963 = vsel %vm947, 1, 0
        %v964 = vsel %vm948, 1, 0
        %v965 = vsel %vm949, 1, 0
        %v966 = vsel %vm950, 1, 0
        %v967 = vsel %vm951, 1, 0
        %v968 = vcvt.s32.f32 %v952
        %v969 = vcvt.s32.f32 %v953
        %v970 = vcvt.s32.f32 %v954
        %v971 = vcvt.s32.f32 %v955
        %v972 = vcvt.s32.f32 %v956
        %v973 = vcvt.s32.f32 %v957
        %v974 = vcvt.s32.f32 %v958
        %v975 = vcvt.s32.f32 %v959
        %v976 = vcvt.s32.f32 %v960
        %v977 = vcvt.s32.f32 %v961
        %v978 = vcvt.s32.f32 %v962
        %v979 = vcvt.s32.f32 %v963
        %v980 = vcvt.s32.f32 %v964
        %v981 = vcvt.s32.f32 %v965
        %v982 = vcvt.s32.f32 %v966
        %v983 = vcvt.s32.f32 %v967
        %v984 = vsub.s32 %v680, 2
        %v985 = vsub.s32 %v681, 2
        %v986 = vsub.s32 %v682, 2
        %v987 = vsub.s32 %v683, 2
        %v988 = vsub.s32 %v684, 2
        %v989 = vsub.s32 %v685, 2
        %v990 = vsub.s32 %v686, 2
        %v991 = vsub.s32 %v687, 2
        %v992 = vsub.s32 %v688, 2
        %v993 = vsub.s32 %v689, 2
        %v994 = vsub.s32 %v690, 2
        %v995 = vsub.s32 %v691, 2
        %v996 = vsub.s32 %v692, 2
        %v997 = vsub.s32 %v693, 2
        %v998 = vsub.s32 %v694, 2
        %v999 = vsub.s32 %v695, 2
        %vm1000 = vcmp.eq.s32.totalorder %v368, %v984
        %vm1001 = vcmp.eq.s32.totalorder %v368, %v985
        %vm1002 = vcmp.eq.s32.totalorder %v368, %v986
        %vm1003 = vcmp.eq.s32.totalorder %v368, %v987
        %vm1004 = vcmp.eq.s32.totalorder %v368, %v988
        %vm1005 = vcmp.eq.s32.totalorder %v368, %v989
        %vm1006 = vcmp.eq.s32.totalorder %v368, %v990
        %vm1007 = vcmp.eq.s32.totalorder %v368, %v991
        %vm1008 = vcmp.eq.s32.totalorder %v368, %v992
        %vm1009 = vcmp.eq.s32.totalorder %v368, %v993
        %vm1010 = vcmp.eq.s32.totalorder %v368, %v994
        %vm1011 = vcmp.eq.s32.totalorder %v368, %v995
        %vm1012 = vcmp.eq.s32.totalorder %v368, %v996
        %vm1013 = vcmp.eq.s32.totalorder %v368, %v997
        %vm1014 = vcmp.eq.s32.totalorder %v368, %v998
        %vm1015 = vcmp.eq.s32.totalorder %v368, %v999
        %vm1016 = vcmp.ge.s32.totalorder %v904, 2
        %vm1017 = vcmp.ge.s32.totalorder %v905, 2
        %vm1018 = vcmp.ge.s32.totalorder %v906, 2
        %vm1019 = vcmp.ge.s32.totalorder %v907, 2
        %vm1020 = vcmp.ge.s32.totalorder %v908, 2
        %vm1021 = vcmp.ge.s32.totalorder %v909, 2
        %vm1022 = vcmp.ge.s32.totalorder %v910, 2
        %vm1023 = vcmp.ge.s32.totalorder %v911, 2
        %vm1024 = vcmp.ge.s32.totalorder %v912, 2
        %vm1025 = vcmp.ge.s32.totalorder %v913, 2
        %vm1026 = vcmp.ge.s32.totalorder %v914, 2
        %vm1027 = vcmp.ge.s32.totalorder %v915, 2
        %vm1028 = vcmp.ge.s32.totalorder %v916, 2
        %vm1029 = vcmp.ge.s32.totalorder %v917, 2
        %vm1030 = vcmp.ge.s32.totalorder %v918, 2
        %vm1031 = vcmp.ge.s32.totalorder %v919, 2
        %vm1032 = vmand %vm1000, %vm1016
        %vm1033 = vmand %vm1001, %vm1017
        %vm1034 = vmand %vm1002, %vm1018
        %vm1035 = vmand %vm1003, %vm1019
        %vm1036 = vmand %vm1004, %vm1020
        %vm1037 = vmand %vm1005, %vm1021
        %vm1038 = vmand %vm1006, %vm1022
        %vm1039 = vmand %vm1007, %vm1023
        %vm1040 = vmand %vm1008, %vm1024
        %vm1041 = vmand %vm1009, %vm1025
        %vm1042 = vmand %vm1010, %vm1026
        %vm1043 = vmand %vm1011, %vm1027
        %vm1044 = vmand %vm1012, %vm1028
        %vm1045 = vmand %vm1013, %vm1029
        %vm1046 = vmand %vm1014, %vm1030
        %vm1047 = vmand %vm1015, %vm1031
        %v1048 = vsel %vm1032, 1, 0
        %v1049 = vsel %vm1033, 1, 0
        %v1050 = vsel %vm1034, 1, 0
        %v1051 = vsel %vm1035, 1, 0
        %v1052 = vsel %vm1036, 1, 0
        %v1053 = vsel %vm1037, 1, 0
        %v1054 = vsel %vm1038, 1, 0
        %v1055 = vsel %vm1039, 1, 0
        %v1056 = vsel %vm1040, 1, 0
        %v1057 = vsel %vm1041, 1, 0
        %v1058 = vsel %vm1042, 1, 0
        %v1059 = vsel %vm1043, 1, 0
        %v1060 = vsel %vm1044, 1, 0
        %v1061 = vsel %vm1045, 1, 0
        %v1062 = vsel %vm1046, 1, 0
        %v1063 = vsel %vm1047, 1, 0
        %v1064 = vcvt.s32.f32 %v1048
        %v1065 = vcvt.s32.f32 %v1049
        %v1066 = vcvt.s32.f32 %v1050
        %v1067 = vcvt.s32.f32 %v1051
        %v1068 = vcvt.s32.f32 %v1052
        %v1069 = vcvt.s32.f32 %v1053
        %v1070 = vcvt.s32.f32 %v1054
        %v1071 = vcvt.s32.f32 %v1055
        %v1072 = vcvt.s32.f32 %v1056
        %v1073 = vcvt.s32.f32 %v1057
        %v1074 = vcvt.s32.f32 %v1058
        %v1075 = vcvt.s32.f32 %v1059
        %v1076 = vcvt.s32.f32 %v1060
        %v1077 = vcvt.s32.f32 %v1061
        %v1078 = vcvt.s32.f32 %v1062
        %v1079 = vcvt.s32.f32 %v1063
        %1080 = vmatprep.subr.mxu0 %v677
        %1081 = vmatpush1.msra.mxu0 %v675
        %1082 = vmatprep.subr.mxu0 %v671
        %1083 = vmatpush1.msra.mxu0 %v669
        %1084 = vmatprep.subr.mxu0 %v665
        %1085 = vmatpush1.msra.mxu0 %v663
        %1086 = vmatprep.subr.mxu0 %v659
        %1087 = vmatpush1.msra.mxu0 %v657
        %1088 = vmatprep.subr.mxu0 %v653
        %1089 = vmatpush1.msra.mxu0 %v651
        %1090 = vmatprep.subr.mxu0 %v647
        %1091 = vmatpush1.msra.mxu0 %v645
        %1092 = vmatprep.subr.mxu0 %v641
        %1093 = vmatpush1.msra.mxu0 %v639
        %1094 = vmatprep.subr.mxu0 %v635
        %1095 = vmatpush1.msra.mxu0 %v633
        %1096 = vmatprep.subr.mxu0 %v629
        %1097 = vmatpush1.msra.mxu0 %v627
        %1098 = vmatprep.subr.mxu0 %v623
        %1099 = vmatpush1.msra.mxu0 %v621
        %1100 = vmatprep.subr.mxu0 %v617
        %1101 = vmatpush1.msra.mxu0 %v615
        %1102 = vmatprep.subr.mxu0 %v611
        %1103 = vmatpush1.msra.mxu0 %v609
        %1104 = vmatprep.subr.mxu0 %v605
        %1105 = vmatpush1.msra.mxu0 %v603
        %1106 = vmatprep.subr.mxu0 %v599
        %1107 = vmatpush1.msra.mxu0 %v597
        %1108 = vmatprep.subr.mxu0 %v593
        %1109 = vmatpush1.msra.mxu0 %v591
        %1110 = vmatprep.subr.mxu0 %v587
        %1111 = vmatpush1.msra.mxu0 %v585
        %1112 = vmatprep.subr.mxu0 0.0
        %1113 = vmatpush2.msra.mxu0 0.0
        %1114 = vmatprep.subr.mxu0 0.0
        %1115 = vmatpush2.msra.mxu0 0.0
        %1116 = vmatprep.subr.mxu0 0.0
        %1117 = vmatpush2.msra.mxu0 0.0
        %1118 = vmatprep.subr.mxu0 0.0
        %1119 = vmatpush2.msra.mxu0 0.0
        %1120 = vmatprep.subr.mxu0 0.0
        %1121 = vmatpush2.msra.mxu0 0.0
        %1122 = vmatprep.subr.mxu0 0.0
        %1123 = vmatpush2.msra.mxu0 0.0
        %1124 = vmatprep.subr.mxu0 0.0
        %1125 = vmatpush2.msra.mxu0 0.0
        %1126 = vmatprep.subr.mxu0 0.0
        %1127 = vmatpush2.msra.mxu0 0.0
        %1128 = vmatprep.subr.mxu0 0.0
        %1129 = vmatpush2.msra.mxu0 0.0
        %1130 = vmatprep.subr.mxu0 0.0
        %1131 = vmatpush2.msra.mxu0 0.0
        %1132 = vmatprep.subr.mxu0 0.0
        %1133 = vmatpush2.msra.mxu0 0.0
        %1134 = vmatprep.subr.mxu0 0.0
        %1135 = vmatpush2.msra.mxu0 0.0
        %1136 = vmatprep.subr.mxu0 0.0
        %1137 = vmatpush2.msra.mxu0 0.0
        %1138 = vmatprep.subr.mxu0 0.0
        %1139 = vmatpush2.msra.mxu0 0.0
        %1140 = vmatprep.subr.mxu0 0.0
        %1141 = vmatpush2.msra.mxu0 0.0
        %1142 = vmatprep.subr.mxu0 0.0
        %1143 = vmatpush2.msra.mxu0 0.0
        %1144 = vmatprep.mubr.f32.mxu0 0.0
        %1145 = vmatmul.mubr.f32.gmra.mxu0 %v1064
        %v1146 = vpop.f32.mrf.mxu0
        %v1147 = vadd.f32 0.0, %v1146
        %v1148 = vpop.f32.mrf.mxu0
        %v1149 = vadd.f32 0.0, %v1148
        %1150 = vmatprep.mubr.f32.mxu0 0.0
        %1151 = vmatmul.mubr.f32.gmra.mxu0 %v1065
        %v1152 = vpop.f32.mrf.mxu0
        %v1153 = vadd.f32 0.0, %v1152
        %v1154 = vpop.f32.mrf.mxu0
        %v1155 = vadd.f32 0.0, %v1154
        %1156 = vmatprep.mubr.f32.mxu0 0.0
        %1157 = vmatmul.mubr.f32.gmra.mxu0 %v1066
        %v1158 = vpop.f32.mrf.mxu0
        %v1159 = vadd.f32 0.0, %v1158
        %v1160 = vpop.f32.mrf.mxu0
        %v1161 = vadd.f32 0.0, %v1160
        %1162 = vmatprep.mubr.f32.mxu0 0.0
        %1163 = vmatmul.mubr.f32.gmra.mxu0 %v1067
        %v1164 = vpop.f32.mrf.mxu0
        %v1165 = vadd.f32 0.0, %v1164
        %v1166 = vpop.f32.mrf.mxu0
        %v1167 = vadd.f32 0.0, %v1166
        %1168 = vmatprep.mubr.f32.mxu0 0.0
        %1169 = vmatmul.mubr.f32.gmra.mxu0 %v1068
        %v1170 = vpop.f32.mrf.mxu0
        %v1171 = vadd.f32 0.0, %v1170
        %v1172 = vpop.f32.mrf.mxu0
        %v1173 = vadd.f32 0.0, %v1172
        %1174 = vmatprep.mubr.f32.mxu0 0.0
        %1175 = vmatmul.mubr.f32.gmra.mxu0 %v1069
        %v1176 = vpop.f32.mrf.mxu0
        %v1177 = vadd.f32 0.0, %v1176
        %v1178 = vpop.f32.mrf.mxu0
        %v1179 = vadd.f32 0.0, %v1178
        %1180 = vmatprep.mubr.f32.mxu0 0.0
        %1181 = vmatmul.mubr.f32.gmra.mxu0 %v1070
        %v1182 = vpop.f32.mrf.mxu0
        %v1183 = vadd.f32 0.0, %v1182
        %v1184 = vpop.f32.mrf.mxu0
        %v1185 = vadd.f32 0.0, %v1184
        %1186 = vmatprep.mubr.f32.mxu0 0.0
        %1187 = vmatmul.mubr.f32.gmra.mxu0 %v1071
        %v1188 = vpop.f32.mrf.mxu0
        %v1189 = vadd.f32 0.0, %v1188
        %v1190 = vpop.f32.mrf.mxu0
        %v1191 = vadd.f32 0.0, %v1190
        %1192 = vmatprep.mubr.f32.mxu0 0.0
        %1193 = vmatmul.mubr.f32.gmra.mxu0 %v1072
        %v1194 = vpop.f32.mrf.mxu0
        %v1195 = vadd.f32 0.0, %v1194
        %v1196 = vpop.f32.mrf.mxu0
        %v1197 = vadd.f32 0.0, %v1196
        %1198 = vmatprep.mubr.f32.mxu0 0.0
        %1199 = vmatmul.mubr.f32.gmra.mxu0 %v1073
        %v1200 = vpop.f32.mrf.mxu0
        %v1201 = vadd.f32 0.0, %v1200
        %v1202 = vpop.f32.mrf.mxu0
        %v1203 = vadd.f32 0.0, %v1202
        %1204 = vmatprep.mubr.f32.mxu0 0.0
        %1205 = vmatmul.mubr.f32.gmra.mxu0 %v1074
        %v1206 = vpop.f32.mrf.mxu0
        %v1207 = vadd.f32 0.0, %v1206
        %v1208 = vpop.f32.mrf.mxu0
        %v1209 = vadd.f32 0.0, %v1208
        %1210 = vmatprep.mubr.f32.mxu0 0.0
        %1211 = vmatmul.mubr.f32.gmra.mxu0 %v1075
        %v1212 = vpop.f32.mrf.mxu0
        %v1213 = vadd.f32 0.0, %v1212
        %v1214 = vpop.f32.mrf.mxu0
        %v1215 = vadd.f32 0.0, %v1214
        %1216 = vmatprep.mubr.f32.mxu0 0.0
        %1217 = vmatmul.mubr.f32.gmra.mxu0 %v1076
        %v1218 = vpop.f32.mrf.mxu0
        %v1219 = vadd.f32 0.0, %v1218
        %v1220 = vpop.f32.mrf.mxu0
        %v1221 = vadd.f32 0.0, %v1220
        %1222 = vmatprep.mubr.f32.mxu0 0.0
        %1223 = vmatmul.mubr.f32.gmra.mxu0 %v1077
        %v1224 = vpop.f32.mrf.mxu0
        %v1225 = vadd.f32 0.0, %v1224
        %v1226 = vpop.f32.mrf.mxu0
        %v1227 = vadd.f32 0.0, %v1226
        %1228 = vmatprep.mubr.f32.mxu0 0.0
        %1229 = vmatmul.mubr.f32.gmra.mxu0 %v1078
        %v1230 = vpop.f32.mrf.mxu0
        %v1231 = vadd.f32 0.0, %v1230
        %v1232 = vpop.f32.mrf.mxu0
        %v1233 = vadd.f32 0.0, %v1232
        %1234 = vmatprep.mubr.f32.mxu0 0.0
        %1235 = vmatmul.mubr.f32.gmra.mxu0 %v1079
        %v1236 = vpop.f32.mrf.mxu0
        %v1237 = vadd.f32 0.0, %v1236
        %v1238 = vpop.f32.mrf.mxu0
        %v1239 = vadd.f32 0.0, %v1238
        %1240 = vdwg.mxu0
        %1241 = vmatprep.subr.mxu0 %v677
        %1242 = vmatpush1.msra.mxu0 %v675
        %1243 = vmatprep.subr.mxu0 %v671
        %1244 = vmatpush1.msra.mxu0 %v669
        %1245 = vmatprep.subr.mxu0 %v665
        %1246 = vmatpush1.msra.mxu0 %v663
        %1247 = vmatprep.subr.mxu0 %v659
        %1248 = vmatpush1.msra.mxu0 %v657
        %1249 = vmatprep.subr.mxu0 %v653
        %1250 = vmatpush1.msra.mxu0 %v651
        %1251 = vmatprep.subr.mxu0 %v647
        %1252 = vmatpush1.msra.mxu0 %v645
        %1253 = vmatprep.subr.mxu0 %v641
        %1254 = vmatpush1.msra.mxu0 %v639
        %1255 = vmatprep.subr.mxu0 %v635
        %1256 = vmatpush1.msra.mxu0 %v633
        %1257 = vmatprep.subr.mxu0 %v629
        %1258 = vmatpush1.msra.mxu0 %v627
        %1259 = vmatprep.subr.mxu0 %v623
        %1260 = vmatpush1.msra.mxu0 %v621
        %1261 = vmatprep.subr.mxu0 %v617
        %1262 = vmatpush1.msra.mxu0 %v615
        %1263 = vmatprep.subr.mxu0 %v611
        %1264 = vmatpush1.msra.mxu0 %v609
        %1265 = vmatprep.subr.mxu0 %v605
        %1266 = vmatpush1.msra.mxu0 %v603
        %1267 = vmatprep.subr.mxu0 %v599
        %1268 = vmatpush1.msra.mxu0 %v597
        %1269 = vmatprep.subr.mxu0 %v593
        %1270 = vmatpush1.msra.mxu0 %v591
        %1271 = vmatprep.subr.mxu0 %v587
        %1272 = vmatpush1.msra.mxu0 %v585
        %1273 = vmatprep.subr.mxu0 0.0
        %1274 = vmatpush2.msra.mxu0 0.0
        %1275 = vmatprep.subr.mxu0 0.0
        %1276 = vmatpush2.msra.mxu0 0.0
        %1277 = vmatprep.subr.mxu0 0.0
        %1278 = vmatpush2.msra.mxu0 0.0
        %1279 = vmatprep.subr.mxu0 0.0
        %1280 = vmatpush2.msra.mxu0 0.0
        %1281 = vmatprep.subr.mxu0 0.0
        %1282 = vmatpush2.msra.mxu0 0.0
        %1283 = vmatprep.subr.mxu0 0.0
        %1284 = vmatpush2.msra.mxu0 0.0
        %1285 = vmatprep.subr.mxu0 0.0
        %1286 = vmatpush2.msra.mxu0 0.0
        %1287 = vmatprep.subr.mxu0 0.0
        %1288 = vmatpush2.msra.mxu0 0.0
        %1289 = vmatprep.subr.mxu0 0.0
        %1290 = vmatpush2.msra.mxu0 0.0
        %1291 = vmatprep.subr.mxu0 0.0
        %1292 = vmatpush2.msra.mxu0 0.0
        %1293 = vmatprep.subr.mxu0 0.0
        %1294 = vmatpush2.msra.mxu0 0.0
        %1295 = vmatprep.subr.mxu0 0.0
        %1296 = vmatpush2.msra.mxu0 0.0
        %1297 = vmatprep.subr.mxu0 0.0
        %1298 = vmatpush2.msra.mxu0 0.0
        %1299 = vmatprep.subr.mxu0 0.0
        %1300 = vmatpush2.msra.mxu0 0.0
        %1301 = vmatprep.subr.mxu0 0.0
        %1302 = vmatpush2.msra.mxu0 0.0
        %1303 = vmatprep.subr.mxu0 0.0
        %1304 = vmatpush2.msra.mxu0 0.0
        %1305 = vmatprep.mubr.f32.mxu0 0.0
        %1306 = vmatmul.mubr.f32.gmra.mxu0 %v968
        %v1307 = vpop.f32.mrf.mxu0
        %v1308 = vadd.f32 0.0, %v1307
        %v1309 = vpop.f32.mrf.mxu0
        %v1310 = vadd.f32 0.0, %v1309
        %1311 = vmatprep.mubr.f32.mxu0 0.0
        %1312 = vmatmul.mubr.f32.gmra.mxu0 %v969
        %v1313 = vpop.f32.mrf.mxu0
        %v1314 = vadd.f32 0.0, %v1313
        %v1315 = vpop.f32.mrf.mxu0
        %v1316 = vadd.f32 0.0, %v1315
        %1317 = vmatprep.mubr.f32.mxu0 0.0
        %1318 = vmatmul.mubr.f32.gmra.mxu0 %v970
        %v1319 = vpop.f32.mrf.mxu0
        %v1320 = vadd.f32 0.0, %v1319
        %v1321 = vpop.f32.mrf.mxu0
        %v1322 = vadd.f32 0.0, %v1321
        %1323 = vmatprep.mubr.f32.mxu0 0.0
        %1324 = vmatmul.mubr.f32.gmra.mxu0 %v971
        %v1325 = vpop.f32.mrf.mxu0
        %v1326 = vadd.f32 0.0, %v1325
        %v1327 = vpop.f32.mrf.mxu0
        %v1328 = vadd.f32 0.0, %v1327
        %1329 = vmatprep.mubr.f32.mxu0 0.0
        %1330 = vmatmul.mubr.f32.gmra.mxu0 %v972
        %v1331 = vpop.f32.mrf.mxu0
        %v1332 = vadd.f32 0.0, %v1331
        %v1333 = vpop.f32.mrf.mxu0
        %v1334 = vadd.f32 0.0, %v1333
        %1335 = vmatprep.mubr.f32.mxu0 0.0
        %1336 = vmatmul.mubr.f32.gmra.mxu0 %v973
        %v1337 = vpop.f32.mrf.mxu0
        %v1338 = vadd.f32 0.0, %v1337
        %v1339 = vpop.f32.mrf.mxu0
        %v1340 = vadd.f32 0.0, %v1339
        %1341 = vmatprep.mubr.f32.mxu0 0.0
        %1342 = vmatmul.mubr.f32.gmra.mxu0 %v974
        %v1343 = vpop.f32.mrf.mxu0
        %v1344 = vadd.f32 0.0, %v1343
        %v1345 = vpop.f32.mrf.mxu0
        %v1346 = vadd.f32 0.0, %v1345
        %1347 = vmatprep.mubr.f32.mxu0 0.0
        %1348 = vmatmul.mubr.f32.gmra.mxu0 %v975
        %v1349 = vpop.f32.mrf.mxu0
        %v1350 = vadd.f32 0.0, %v1349
        %v1351 = vpop.f32.mrf.mxu0
        %v1352 = vadd.f32 0.0, %v1351
        %1353 = vmatprep.mubr.f32.mxu0 0.0
        %1354 = vmatmul.mubr.f32.gmra.mxu0 %v976
        %v1355 = vpop.f32.mrf.mxu0
        %v1356 = vadd.f32 0.0, %v1355
        %v1357 = vpop.f32.mrf.mxu0
        %v1358 = vadd.f32 0.0, %v1357
        %1359 = vmatprep.mubr.f32.mxu0 0.0
        %1360 = vmatmul.mubr.f32.gmra.mxu0 %v977
        %v1361 = vpop.f32.mrf.mxu0
        %v1362 = vadd.f32 0.0, %v1361
        %v1363 = vpop.f32.mrf.mxu0
        %v1364 = vadd.f32 0.0, %v1363
        %1365 = vmatprep.mubr.f32.mxu0 0.0
        %1366 = vmatmul.mubr.f32.gmra.mxu0 %v978
        %v1367 = vpop.f32.mrf.mxu0
        %v1368 = vadd.f32 0.0, %v1367
        %v1369 = vpop.f32.mrf.mxu0
        %v1370 = vadd.f32 0.0, %v1369
        %1371 = vmatprep.mubr.f32.mxu0 0.0
        %1372 = vmatmul.mubr.f32.gmra.mxu0 %v979
        %v1373 = vpop.f32.mrf.mxu0
        %v1374 = vadd.f32 0.0, %v1373
        %v1375 = vpop.f32.mrf.mxu0
        %v1376 = vadd.f32 0.0, %v1375
        %1377 = vmatprep.mubr.f32.mxu0 0.0
        %1378 = vmatmul.mubr.f32.gmra.mxu0 %v980
        %v1379 = vpop.f32.mrf.mxu0
        %v1380 = vadd.f32 0.0, %v1379
        %v1381 = vpop.f32.mrf.mxu0
        %v1382 = vadd.f32 0.0, %v1381
        %1383 = vmatprep.mubr.f32.mxu0 0.0
        %1384 = vmatmul.mubr.f32.gmra.mxu0 %v981
        %v1385 = vpop.f32.mrf.mxu0
        %v1386 = vadd.f32 0.0, %v1385
        %v1387 = vpop.f32.mrf.mxu0
        %v1388 = vadd.f32 0.0, %v1387
        %1389 = vmatprep.mubr.f32.mxu0 0.0
        %1390 = vmatmul.mubr.f32.gmra.mxu0 %v982
        %v1391 = vpop.f32.mrf.mxu0
        %v1392 = vadd.f32 0.0, %v1391
        %v1393 = vpop.f32.mrf.mxu0
        %v1394 = vadd.f32 0.0, %v1393
        %1395 = vmatprep.mubr.f32.mxu0 0.0
        %1396 = vmatmul.mubr.f32.gmra.mxu0 %v983
        %v1397 = vpop.f32.mrf.mxu0
        %v1398 = vadd.f32 0.0, %v1397
        %v1399 = vpop.f32.mrf.mxu0
        %v1400 = vadd.f32 0.0, %v1399
        %1401 = vdwg.mxu0
        %v1402 = vpack.c.bf16 %v1153, %v1147
        %v1403 = vpack.c.bf16 %v1155, %v1149
        %v1404 = vpack.c.bf16 %v1314, %v1308
        %v1405 = vpack.c.bf16 %v1316, %v1310
        %v1406 = vpack.c.bf16 %v591, %v585
        %v1407 = vpack.c.bf16 %v593, %v587
        %v1408 = vpack.c.bf16 %v1165, %v1159
        %v1409 = vpack.c.bf16 %v1167, %v1161
        %v1410 = vpack.c.bf16 %v1326, %v1320
        %v1411 = vpack.c.bf16 %v1328, %v1322
        %v1412 = vpack.c.bf16 %v603, %v597
        %v1413 = vpack.c.bf16 %v605, %v599
        %v1414 = vpack.c.bf16 %v1177, %v1171
        %v1415 = vpack.c.bf16 %v1179, %v1173
        %v1416 = vpack.c.bf16 %v1338, %v1332
        %v1417 = vpack.c.bf16 %v1340, %v1334
        %v1418 = vpack.c.bf16 %v615, %v609
        %v1419 = vpack.c.bf16 %v617, %v611
        %v1420 = vpack.c.bf16 %v1189, %v1183
        %v1421 = vpack.c.bf16 %v1191, %v1185
        %v1422 = vpack.c.bf16 %v1350, %v1344
        %v1423 = vpack.c.bf16 %v1352, %v1346
        %v1424 = vpack.c.bf16 %v627, %v621
        %v1425 = vpack.c.bf16 %v629, %v623
        %v1426 = vpack.c.bf16 %v1201, %v1195
        %v1427 = vpack.c.bf16 %v1203, %v1197
        %v1428 = vpack.c.bf16 %v1362, %v1356
        %v1429 = vpack.c.bf16 %v1364, %v1358
        %v1430 = vpack.c.bf16 %v639, %v633
        %v1431 = vpack.c.bf16 %v641, %v635
        %v1432 = vpack.c.bf16 %v1213, %v1207
        %v1433 = vpack.c.bf16 %v1215, %v1209
        %v1434 = vpack.c.bf16 %v1374, %v1368
        %v1435 = vpack.c.bf16 %v1376, %v1370
        %v1436 = vpack.c.bf16 %v651, %v645
        %v1437 = vpack.c.bf16 %v653, %v647
        %v1438 = vpack.c.bf16 %v1225, %v1219
        %v1439 = vpack.c.bf16 %v1227, %v1221
        %v1440 = vpack.c.bf16 %v1386, %v1380
        %v1441 = vpack.c.bf16 %v1388, %v1382
        %v1442 = vpack.c.bf16 %v663, %v657
        %v1443 = vpack.c.bf16 %v665, %v659
        %v1444 = vpack.c.bf16 %v1237, %v1231
        %v1445 = vpack.c.bf16 %v1239, %v1233
        %v1446 = vpack.c.bf16 %v1398, %v1392
        %v1447 = vpack.c.bf16 %v1400, %v1394
        %v1448 = vpack.c.bf16 %v675, %v669
        %v1449 = vpack.c.bf16 %v677, %v671
        %v1450 = vld [vmem:[#allocation5] sm:$0xff]
        %v1451 = vld [vmem:[#allocation5 + $0x8] sm:$0xff]
        %v1452 = vld [vmem:[#allocation5 + $0x10] sm:$0xff]
        %v1453 = vld [vmem:[#allocation5 + $0x18] sm:$0xff]
        %v1454 = vld [vmem:[#allocation5 + $0x20] sm:$0xff]
        %v1455 = vld [vmem:[#allocation5 + $0x28] sm:$0xff]
        %v1456 = vld [vmem:[#allocation5 + $0x30] sm:$0xff]
        %v1457 = vld [vmem:[#allocation5 + $0x38] sm:$0xff]
        %v1458 = vld [vmem:[#allocation5 + $0x40] sm:$0xff]
        %v1459 = vld [vmem:[#allocation5 + $0x48] sm:$0xff]
        %v1460 = vld [vmem:[#allocation5 + $0x50] sm:$0xff]
        %v1461 = vld [vmem:[#allocation5 + $0x58] sm:$0xff]
        %v1462 = vld [vmem:[#allocation5 + $0x60] sm:$0xff]
        %v1463 = vld [vmem:[#allocation5 + $0x68] sm:$0xff]
        %v1464 = vld [vmem:[#allocation5 + $0x70] sm:$0xff]
        %v1465 = vld [vmem:[#allocation5 + $0x78] sm:$0xff]
        %v1466 = vld [vmem:[#allocation5 + $0x80] sm:$0xff]
        %v1467 = vld [vmem:[#allocation5 + $0x88] sm:$0xff]
        %v1468 = vld [vmem:[#allocation5 + $0x90] sm:$0xff]
        %v1469 = vld [vmem:[#allocation5 + $0x98] sm:$0xff]
        %v1470 = vld [vmem:[#allocation5 + $0xa0] sm:$0xff]
        %v1471 = vld [vmem:[#allocation5 + $0xa8] sm:$0xff]
        %v1472 = vld [vmem:[#allocation5 + $0xb0] sm:$0xff]
        %v1473 = vld [vmem:[#allocation5 + $0xb8] sm:$0xff]
        %v1474 = vld [vmem:[#allocation5 + $0xc0] sm:$0xff]
        %v1475 = vld [vmem:[#allocation5 + $0xc8] sm:$0xff]
        %v1476 = vld [vmem:[#allocation5 + $0xd0] sm:$0xff]
        %v1477 = vld [vmem:[#allocation5 + $0xd8] sm:$0xff]
        %v1478 = vld [vmem:[#allocation5 + $0xe0] sm:$0xff]
        %v1479 = vld [vmem:[#allocation5 + $0xe8] sm:$0xff]
        %v1480 = vld [vmem:[#allocation5 + $0xf0] sm:$0xff]
        %v1481 = vld [vmem:[#allocation5 + $0xf8] sm:$0xff]
        %v1482 = vld [vmem:[#allocation5 + $0x100] sm:$0xff]
        %v1483 = vld [vmem:[#allocation5 + $0x108] sm:$0xff]
        %v1484 = vld [vmem:[#allocation5 + $0x110] sm:$0xff]
        %v1485 = vld [vmem:[#allocation5 + $0x118] sm:$0xff]
        %v1486 = vld [vmem:[#allocation5 + $0x120] sm:$0xff]
        %v1487 = vld [vmem:[#allocation5 + $0x128] sm:$0xff]
        %v1488 = vld [vmem:[#allocation5 + $0x130] sm:$0xff]
        %v1489 = vld [vmem:[#allocation5 + $0x138] sm:$0xff]
        %v1490 = vld [vmem:[#allocation5 + $0x140] sm:$0xff]
        %v1491 = vld [vmem:[#allocation5 + $0x148] sm:$0xff]
        %v1492 = vld [vmem:[#allocation5 + $0x150] sm:$0xff]
        %v1493 = vld [vmem:[#allocation5 + $0x158] sm:$0xff]
        %v1494 = vld [vmem:[#allocation5 + $0x160] sm:$0xff]
        %v1495 = vld [vmem:[#allocation5 + $0x168] sm:$0xff]
        %v1496 = vld [vmem:[#allocation5 + $0x170] sm:$0xff]
        %v1497 = vld [vmem:[#allocation5 + $0x178] sm:$0xff]
        %v1498 = vld [vmem:[#allocation5 + $0x180] sm:$0xff]
        %v1499 = vld [vmem:[#allocation5 + $0x188] sm:$0xff]
        %v1500 = vld [vmem:[#allocation5 + $0x190] sm:$0xff]
        %v1501 = vld [vmem:[#allocation5 + $0x198] sm:$0xff]
        %v1502 = vld [vmem:[#allocation5 + $0x1a0] sm:$0xff]
        %v1503 = vld [vmem:[#allocation5 + $0x1a8] sm:$0xff]
        %v1504 = vld [vmem:[#allocation5 + $0x1b0] sm:$0xff]
        %v1505 = vld [vmem:[#allocation5 + $0x1b8] sm:$0xff]
        %v1506 = vld [vmem:[#allocation5 + $0x1c0] sm:$0xff]
        %v1507 = vld [vmem:[#allocation5 + $0x1c8] sm:$0xff]
        %v1508 = vld [vmem:[#allocation5 + $0x1d0] sm:$0xff]
        %v1509 = vld [vmem:[#allocation5 + $0x1d8] sm:$0xff]
        %v1510 = vld [vmem:[#allocation5 + $0x1e0] sm:$0xff]
        %v1511 = vld [vmem:[#allocation5 + $0x1e8] sm:$0xff]
        %v1512 = vld [vmem:[#allocation5 + $0x1f0] sm:$0xff]
        %v1513 = vld [vmem:[#allocation5 + $0x1f8] sm:$0xff]
        %v1514 = vld [vmem:[#allocation5 + $0x200] sm:$0xff]
        %v1515 = vld [vmem:[#allocation5 + $0x208] sm:$0xff]
        %v1516 = vld [vmem:[#allocation5 + $0x210] sm:$0xff]
        %v1517 = vld [vmem:[#allocation5 + $0x218] sm:$0xff]
        %v1518 = vld [vmem:[#allocation5 + $0x220] sm:$0xff]
        %v1519 = vld [vmem:[#allocation5 + $0x228] sm:$0xff]
        %v1520 = vld [vmem:[#allocation5 + $0x230] sm:$0xff]
        %v1521 = vld [vmem:[#allocation5 + $0x238] sm:$0xff]
        %v1522 = vld [vmem:[#allocation5 + $0x240] sm:$0xff]
        %v1523 = vld [vmem:[#allocation5 + $0x248] sm:$0xff]
        %v1524 = vld [vmem:[#allocation5 + $0x250] sm:$0xff]
        %v1525 = vld [vmem:[#allocation5 + $0x258] sm:$0xff]
        %v1526 = vld [vmem:[#allocation5 + $0x260] sm:$0xff]
        %v1527 = vld [vmem:[#allocation5 + $0x268] sm:$0xff]
        %v1528 = vld [vmem:[#allocation5 + $0x270] sm:$0xff]
        %v1529 = vld [vmem:[#allocation5 + $0x278] sm:$0xff]
        %v1530 = vld [vmem:[#allocation5 + $0x280] sm:$0xff]
        %v1531 = vld [vmem:[#allocation5 + $0x288] sm:$0xff]
        %v1532 = vld [vmem:[#allocation5 + $0x290] sm:$0xff]
        %v1533 = vld [vmem:[#allocation5 + $0x298] sm:$0xff]
        %v1534 = vld [vmem:[#allocation5 + $0x2a0] sm:$0xff]
        %v1535 = vld [vmem:[#allocation5 + $0x2a8] sm:$0xff]
        %v1536 = vld [vmem:[#allocation5 + $0x2b0] sm:$0xff]
        %v1537 = vld [vmem:[#allocation5 + $0x2b8] sm:$0xff]
        %v1538 = vld [vmem:[#allocation5 + $0x2c0] sm:$0xff]
        %v1539 = vld [vmem:[#allocation5 + $0x2c8] sm:$0xff]
        %v1540 = vld [vmem:[#allocation5 + $0x2d0] sm:$0xff]
        %v1541 = vld [vmem:[#allocation5 + $0x2d8] sm:$0xff]
        %v1542 = vld [vmem:[#allocation5 + $0x2e0] sm:$0xff]
        %v1543 = vld [vmem:[#allocation5 + $0x2e8] sm:$0xff]
        %v1544 = vld [vmem:[#allocation5 + $0x2f0] sm:$0xff]
        %v1545 = vld [vmem:[#allocation5 + $0x2f8] sm:$0xff]
        %v1546 = vld [vmem:[#allocation5 + $0x300] sm:$0xff]
        %v1547 = vld [vmem:[#allocation5 + $0x308] sm:$0xff]
        %v1548 = vld [vmem:[#allocation5 + $0x310] sm:$0xff]
        %v1549 = vld [vmem:[#allocation5 + $0x318] sm:$0xff]
        %v1550 = vld [vmem:[#allocation5 + $0x320] sm:$0xff]
        %v1551 = vld [vmem:[#allocation5 + $0x328] sm:$0xff]
        %v1552 = vld [vmem:[#allocation5 + $0x330] sm:$0xff]
        %v1553 = vld [vmem:[#allocation5 + $0x338] sm:$0xff]
        %v1554 = vld [vmem:[#allocation5 + $0x340] sm:$0xff]
        %v1555 = vld [vmem:[#allocation5 + $0x348] sm:$0xff]
        %v1556 = vld [vmem:[#allocation5 + $0x350] sm:$0xff]
        %v1557 = vld [vmem:[#allocation5 + $0x358] sm:$0xff]
        %v1558 = vld [vmem:[#allocation5 + $0x360] sm:$0xff]
        %v1559 = vld [vmem:[#allocation5 + $0x368] sm:$0xff]
        %v1560 = vld [vmem:[#allocation5 + $0x370] sm:$0xff]
        %v1561 = vld [vmem:[#allocation5 + $0x378] sm:$0xff]
        %v1562 = vld [vmem:[#allocation5 + $0x380] sm:$0xff]
        %v1563 = vld [vmem:[#allocation5 + $0x388] sm:$0xff]
        %v1564 = vld [vmem:[#allocation5 + $0x390] sm:$0xff]
        %v1565 = vld [vmem:[#allocation5 + $0x398] sm:$0xff]
        %v1566 = vld [vmem:[#allocation5 + $0x3a0] sm:$0xff]
        %v1567 = vld [vmem:[#allocation5 + $0x3a8] sm:$0xff]
        %v1568 = vld [vmem:[#allocation5 + $0x3b0] sm:$0xff]
        %v1569 = vld [vmem:[#allocation5 + $0x3b8] sm:$0xff]
        %v1570 = vld [vmem:[#allocation5 + $0x3c0] sm:$0xff]
        %v1571 = vld [vmem:[#allocation5 + $0x3c8] sm:$0xff]
        %v1572 = vld [vmem:[#allocation5 + $0x3d0] sm:$0xff]
        %v1573 = vld [vmem:[#allocation5 + $0x3d8] sm:$0xff]
        %v1574 = vld [vmem:[#allocation5 + $0x3e0] sm:$0xff]
        %v1575 = vld [vmem:[#allocation5 + $0x3e8] sm:$0xff]
        %v1576 = vld [vmem:[#allocation5 + $0x3f0] sm:$0xff]
        %v1577 = vld [vmem:[#allocation5 + $0x3f8] sm:$0xff]
        %v1578 = vld [vmem:[#allocation5 + $0x400] sm:$0xff]
        %v1579 = vld [vmem:[#allocation5 + $0x408] sm:$0xff]
        %v1580 = vld [vmem:[#allocation5 + $0x410] sm:$0xff]
        %v1581 = vld [vmem:[#allocation5 + $0x418] sm:$0xff]
        %v1582 = vld [vmem:[#allocation5 + $0x420] sm:$0xff]
        %v1583 = vld [vmem:[#allocation5 + $0x428] sm:$0xff]
        %v1584 = vld [vmem:[#allocation5 + $0x430] sm:$0xff]
        %v1585 = vld [vmem:[#allocation5 + $0x438] sm:$0xff]
        %v1586 = vld [vmem:[#allocation5 + $0x440] sm:$0xff]
        %v1587 = vld [vmem:[#allocation5 + $0x448] sm:$0xff]
        %v1588 = vld [vmem:[#allocation5 + $0x450] sm:$0xff]
        %v1589 = vld [vmem:[#allocation5 + $0x458] sm:$0xff]
        %v1590 = vld [vmem:[#allocation5 + $0x460] sm:$0xff]
        %v1591 = vld [vmem:[#allocation5 + $0x468] sm:$0xff]
        %v1592 = vld [vmem:[#allocation5 + $0x470] sm:$0xff]
        %v1593 = vld [vmem:[#allocation5 + $0x478] sm:$0xff]
        %v1594 = vld [vmem:[#allocation5 + $0x480] sm:$0xff]
        %v1595 = vld [vmem:[#allocation5 + $0x488] sm:$0xff]
        %v1596 = vld [vmem:[#allocation5 + $0x490] sm:$0xff]
        %v1597 = vld [vmem:[#allocation5 + $0x498] sm:$0xff]
        %v1598 = vld [vmem:[#allocation5 + $0x4a0] sm:$0xff]
        %v1599 = vld [vmem:[#allocation5 + $0x4a8] sm:$0xff]
        %v1600 = vld [vmem:[#allocation5 + $0x4b0] sm:$0xff]
        %v1601 = vld [vmem:[#allocation5 + $0x4b8] sm:$0xff]
        %v1602 = vld [vmem:[#allocation5 + $0x4c0] sm:$0xff]
        %v1603 = vld [vmem:[#allocation5 + $0x4c8] sm:$0xff]
        %v1604 = vld [vmem:[#allocation5 + $0x4d0] sm:$0xff]
        %v1605 = vld [vmem:[#allocation5 + $0x4d8] sm:$0xff]
        %v1606 = vld [vmem:[#allocation5 + $0x4e0] sm:$0xff]
        %v1607 = vld [vmem:[#allocation5 + $0x4e8] sm:$0xff]
        %v1608 = vld [vmem:[#allocation5 + $0x4f0] sm:$0xff]
        %v1609 = vld [vmem:[#allocation5 + $0x4f8] sm:$0xff]
        %v1610 = vld [vmem:[#allocation5 + $0x500] sm:$0xff]
        %v1611 = vld [vmem:[#allocation5 + $0x508] sm:$0xff]
        %v1612 = vld [vmem:[#allocation5 + $0x510] sm:$0xff]
        %v1613 = vld [vmem:[#allocation5 + $0x518] sm:$0xff]
        %v1614 = vld [vmem:[#allocation5 + $0x520] sm:$0xff]
        %v1615 = vld [vmem:[#allocation5 + $0x528] sm:$0xff]
        %v1616 = vld [vmem:[#allocation5 + $0x530] sm:$0xff]
        %v1617 = vld [vmem:[#allocation5 + $0x538] sm:$0xff]
        %v1618 = vld [vmem:[#allocation5 + $0x540] sm:$0xff]
        %v1619 = vld [vmem:[#allocation5 + $0x548] sm:$0xff]
        %v1620 = vld [vmem:[#allocation5 + $0x550] sm:$0xff]
        %v1621 = vld [vmem:[#allocation5 + $0x558] sm:$0xff]
        %v1622 = vld [vmem:[#allocation5 + $0x560] sm:$0xff]
        %v1623 = vld [vmem:[#allocation5 + $0x568] sm:$0xff]
        %v1624 = vld [vmem:[#allocation5 + $0x570] sm:$0xff]
        %v1625 = vld [vmem:[#allocation5 + $0x578] sm:$0xff]
        %v1626 = vld [vmem:[#allocation5 + $0x580] sm:$0xff]
        %v1627 = vld [vmem:[#allocation5 + $0x588] sm:$0xff]
        %v1628 = vld [vmem:[#allocation5 + $0x590] sm:$0xff]
        %v1629 = vld [vmem:[#allocation5 + $0x598] sm:$0xff]
        %v1630 = vld [vmem:[#allocation5 + $0x5a0] sm:$0xff]
        %v1631 = vld [vmem:[#allocation5 + $0x5a8] sm:$0xff]
        %v1632 = vld [vmem:[#allocation5 + $0x5b0] sm:$0xff]
        %v1633 = vld [vmem:[#allocation5 + $0x5b8] sm:$0xff]
        %v1634 = vld [vmem:[#allocation5 + $0x5c0] sm:$0xff]
        %v1635 = vld [vmem:[#allocation5 + $0x5c8] sm:$0xff]
        %v1636 = vld [vmem:[#allocation5 + $0x5d0] sm:$0xff]
        %v1637 = vld [vmem:[#allocation5 + $0x5d8] sm:$0xff]
        %v1638 = vld [vmem:[#allocation5 + $0x5e0] sm:$0xff]
        %v1639 = vld [vmem:[#allocation5 + $0x5e8] sm:$0xff]
        %v1640 = vld [vmem:[#allocation5 + $0x5f0] sm:$0xff]
        %v1641 = vld [vmem:[#allocation5 + $0x5f8] sm:$0xff]
        %v1642 = vld [vmem:[%s3] sm:$0xf]
        %v1644 = vlaneseq
        %v1645 = vshrl.u32 %v1644, 7
        %v1646 = vsub.s32 0, %v1645
        %v1647 = vrot.slane %v1642, %v1646
        %v1648 = vlaneseq
        %v1649 = vshrl.u32 %v1648, 7
        %v1650 = vsub.s32 1, %v1649
        %v1651 = vrot.slane %v1642, %v1650
        %v1652 = vlaneseq
        %v1653 = vshrl.u32 %v1652, 7
        %v1654 = vsub.s32 2, %v1653
        %v1655 = vrot.slane %v1642, %v1654
        %v1656 = vlaneseq
        %v1657 = vshrl.u32 %v1656, 7
        %v1658 = vsub.s32 3, %v1657
        %v1659 = vrot.slane %v1642, %v1658
        %v1856 = vunpack.c.l.b16 %v1450
        %v1857 = vunpack.c.h.b16 %v1450
        %v1858 = vunpack.c.l.b16 %v1451
        %v1859 = vunpack.c.h.b16 %v1451
        %v1860 = vunpack.c.l.b16 %v1452
        %v1861 = vunpack.c.h.b16 %v1452
        %v1862 = vunpack.c.l.b16 %v1453
        %v1863 = vunpack.c.h.b16 %v1453
        %v1864 = vunpack.c.l.b16 %v1454
        %v1865 = vunpack.c.h.b16 %v1454
        %v1866 = vunpack.c.l.b16 %v1455
        %v1867 = vunpack.c.h.b16 %v1455
        %v1868 = vunpack.c.l.b16 %v1456
        %v1869 = vunpack.c.h.b16 %v1456
        %v1870 = vunpack.c.l.b16 %v1457
        %v1871 = vunpack.c.h.b16 %v1457
        %v1872 = vunpack.c.l.b16 %v1458
        %v1873 = vunpack.c.h.b16 %v1458
        %v1874 = vunpack.c.l.b16 %v1459
        %v1875 = vunpack.c.h.b16 %v1459
        %v1876 = vunpack.c.l.b16 %v1460
        %v1877 = vunpack.c.h.b16 %v1460
        %v1878 = vunpack.c.l.b16 %v1461
        %v1879 = vunpack.c.h.b16 %v1461
        %v1880 = vunpack.c.l.b16 %v1462
        %v1881 = vunpack.c.h.b16 %v1462
        %v1882 = vunpack.c.l.b16 %v1463
        %v1883 = vunpack.c.h.b16 %v1463
        %v1884 = vunpack.c.l.b16 %v1464
        %v1885 = vunpack.c.h.b16 %v1464
        %v1886 = vunpack.c.l.b16 %v1465
        %v1887 = vunpack.c.h.b16 %v1465
        %v1888 = vunpack.c.l.b16 %v1466
        %v1889 = vunpack.c.h.b16 %v1466
        %v1890 = vunpack.c.l.b16 %v1467
        %v1891 = vunpack.c.h.b16 %v1467
        %v1892 = vunpack.c.l.b16 %v1468
        %v1893 = vunpack.c.h.b16 %v1468
        %v1894 = vunpack.c.l.b16 %v1469
        %v1895 = vunpack.c.h.b16 %v1469
        %v1896 = vunpack.c.l.b16 %v1470
        %v1897 = vunpack.c.h.b16 %v1470
        %v1898 = vunpack.c.l.b16 %v1471
        %v1899 = vunpack.c.h.b16 %v1471
        %v1900 = vunpack.c.l.b16 %v1472
        %v1901 = vunpack.c.h.b16 %v1472
        %v1902 = vunpack.c.l.b16 %v1473
        %v1903 = vunpack.c.h.b16 %v1473
        %v1904 = vunpack.c.l.b16 %v1474
        %v1905 = vunpack.c.h.b16 %v1474
        %v1906 = vunpack.c.l.b16 %v1475
        %v1907 = vunpack.c.h.b16 %v1475
        %v1908 = vunpack.c.l.b16 %v1476
        %v1909 = vunpack.c.h.b16 %v1476
        %v1910 = vunpack.c.l.b16 %v1477
        %v1911 = vunpack.c.h.b16 %v1477
        %v1912 = vunpack.c.l.b16 %v1478
        %v1913 = vunpack.c.h.b16 %v1478
        %v1914 = vunpack.c.l.b16 %v1479
        %v1915 = vunpack.c.h.b16 %v1479
        %v1916 = vunpack.c.l.b16 %v1480
        %v1917 = vunpack.c.h.b16 %v1480
        %v1918 = vunpack.c.l.b16 %v1481
        %v1919 = vunpack.c.h.b16 %v1481
        %v1920 = vunpack.c.l.b16 %v1482
        %v1921 = vunpack.c.h.b16 %v1482
        %v1922 = vunpack.c.l.b16 %v1483
        %v1923 = vunpack.c.h.b16 %v1483
        %v1924 = vunpack.c.l.b16 %v1484
        %v1925 = vunpack.c.h.b16 %v1484
        %v1926 = vunpack.c.l.b16 %v1485
        %v1927 = vunpack.c.h.b16 %v1485
        %v1928 = vunpack.c.l.b16 %v1486
        %v1929 = vunpack.c.h.b16 %v1486
        %v1930 = vunpack.c.l.b16 %v1487
        %v1931 = vunpack.c.h.b16 %v1487
        %v1932 = vunpack.c.l.b16 %v1488
        %v1933 = vunpack.c.h.b16 %v1488
        %v1934 = vunpack.c.l.b16 %v1489
        %v1935 = vunpack.c.h.b16 %v1489
        %v1936 = vunpack.c.l.b16 %v1490
        %v1937 = vunpack.c.h.b16 %v1490
        %v1938 = vunpack.c.l.b16 %v1491
        %v1939 = vunpack.c.h.b16 %v1491
        %v1940 = vunpack.c.l.b16 %v1492
        %v1941 = vunpack.c.h.b16 %v1492
        %v1942 = vunpack.c.l.b16 %v1493
        %v1943 = vunpack.c.h.b16 %v1493
        %v1944 = vunpack.c.l.b16 %v1494
        %v1945 = vunpack.c.h.b16 %v1494
        %v1946 = vunpack.c.l.b16 %v1495
        %v1947 = vunpack.c.h.b16 %v1495
        %v1948 = vunpack.c.l.b16 %v1496
        %v1949 = vunpack.c.h.b16 %v1496
        %v1950 = vunpack.c.l.b16 %v1497
        %v1951 = vunpack.c.h.b16 %v1497
        %v1952 = vunpack.c.l.b16 %v1498
        %v1953 = vunpack.c.h.b16 %v1498
        %v1954 = vunpack.c.l.b16 %v1499
        %v1955 = vunpack.c.h.b16 %v1499
        %v1956 = vunpack.c.l.b16 %v1500
        %v1957 = vunpack.c.h.b16 %v1500
        %v1958 = vunpack.c.l.b16 %v1501
        %v1959 = vunpack.c.h.b16 %v1501
        %v1960 = vunpack.c.l.b16 %v1502
        %v1961 = vunpack.c.h.b16 %v1502
        %v1962 = vunpack.c.l.b16 %v1503
        %v1963 = vunpack.c.h.b16 %v1503
        %v1964 = vunpack.c.l.b16 %v1504
        %v1965 = vunpack.c.h.b16 %v1504
        %v1966 = vunpack.c.l.b16 %v1505
        %v1967 = vunpack.c.h.b16 %v1505
        %v1968 = vunpack.c.l.b16 %v1506
        %v1969 = vunpack.c.h.b16 %v1506
        %v1970 = vunpack.c.l.b16 %v1507
        %v1971 = vunpack.c.h.b16 %v1507
        %v1972 = vunpack.c.l.b16 %v1508
        %v1973 = vunpack.c.h.b16 %v1508
        %v1974 = vunpack.c.l.b16 %v1509
        %v1975 = vunpack.c.h.b16 %v1509
        %v1976 = vunpack.c.l.b16 %v1510
        %v1977 = vunpack.c.h.b16 %v1510
        %v1978 = vunpack.c.l.b16 %v1511
        %v1979 = vunpack.c.h.b16 %v1511
        %v1980 = vunpack.c.l.b16 %v1512
        %v1981 = vunpack.c.h.b16 %v1512
        %v1982 = vunpack.c.l.b16 %v1513
        %v1983 = vunpack.c.h.b16 %v1513
        %v1984 = vunpack.c.l.b16 %v1514
        %v1985 = vunpack.c.h.b16 %v1514
        %v1986 = vunpack.c.l.b16 %v1515
        %v1987 = vunpack.c.h.b16 %v1515
        %v1988 = vunpack.c.l.b16 %v1516
        %v1989 = vunpack.c.h.b16 %v1516
        %v1990 = vunpack.c.l.b16 %v1517
        %v1991 = vunpack.c.h.b16 %v1517
        %v1992 = vunpack.c.l.b16 %v1518
        %v1993 = vunpack.c.h.b16 %v1518
        %v1994 = vunpack.c.l.b16 %v1519
        %v1995 = vunpack.c.h.b16 %v1519
        %v1996 = vunpack.c.l.b16 %v1520
        %v1997 = vunpack.c.h.b16 %v1520
        %v1998 = vunpack.c.l.b16 %v1521
        %v1999 = vunpack.c.h.b16 %v1521
        %v2000 = vunpack.c.l.b16 %v1522
        %v2001 = vunpack.c.h.b16 %v1522
        %v2002 = vunpack.c.l.b16 %v1523
        %v2003 = vunpack.c.h.b16 %v1523
        %v2004 = vunpack.c.l.b16 %v1524
        %v2005 = vunpack.c.h.b16 %v1524
        %v2006 = vunpack.c.l.b16 %v1525
        %v2007 = vunpack.c.h.b16 %v1525
        %v2008 = vunpack.c.l.b16 %v1526
        %v2009 = vunpack.c.h.b16 %v1526
        %v2010 = vunpack.c.l.b16 %v1527
        %v2011 = vunpack.c.h.b16 %v1527
        %v2012 = vunpack.c.l.b16 %v1528
        %v2013 = vunpack.c.h.b16 %v1528
        %v2014 = vunpack.c.l.b16 %v1529
        %v2015 = vunpack.c.h.b16 %v1529
        %v2016 = vunpack.c.l.b16 %v1530
        %v2017 = vunpack.c.h.b16 %v1530
        %v2018 = vunpack.c.l.b16 %v1531
        %v2019 = vunpack.c.h.b16 %v1531
        %v2020 = vunpack.c.l.b16 %v1532
        %v2021 = vunpack.c.h.b16 %v1532
        %v2022 = vunpack.c.l.b16 %v1533
        %v2023 = vunpack.c.h.b16 %v1533
        %v2024 = vunpack.c.l.b16 %v1534
        %v2025 = vunpack.c.h.b16 %v1534
        %v2026 = vunpack.c.l.b16 %v1535
        %v2027 = vunpack.c.h.b16 %v1535
        %v2028 = vunpack.c.l.b16 %v1536
        %v2029 = vunpack.c.h.b16 %v1536
        %v2030 = vunpack.c.l.b16 %v1537
        %v2031 = vunpack.c.h.b16 %v1537
        %v2032 = vunpack.c.l.b16 %v1538
        %v2033 = vunpack.c.h.b16 %v1538
        %v2034 = vunpack.c.l.b16 %v1539
        %v2035 = vunpack.c.h.b16 %v1539
        %v2036 = vunpack.c.l.b16 %v1540
        %v2037 = vunpack.c.h.b16 %v1540
        %v2038 = vunpack.c.l.b16 %v1541
        %v2039 = vunpack.c.h.b16 %v1541
        %v2040 = vunpack.c.l.b16 %v1542
        %v2041 = vunpack.c.h.b16 %v1542
        %v2042 = vunpack.c.l.b16 %v1543
        %v2043 = vunpack.c.h.b16 %v1543
        %v2044 = vunpack.c.l.b16 %v1544
        %v2045 = vunpack.c.h.b16 %v1544
        %v2046 = vunpack.c.l.b16 %v1545
        %v2047 = vunpack.c.h.b16 %v1545
        %v2048 = vunpack.c.l.b16 %v1546
        %v2049 = vunpack.c.h.b16 %v1546
        %v2050 = vunpack.c.l.b16 %v1547
        %v2051 = vunpack.c.h.b16 %v1547
        %v2052 = vunpack.c.l.b16 %v1548
        %v2053 = vunpack.c.h.b16 %v1548
        %v2054 = vunpack.c.l.b16 %v1549
        %v2055 = vunpack.c.h.b16 %v1549
        %v2056 = vunpack.c.l.b16 %v1550
        %v2057 = vunpack.c.h.b16 %v1550
        %v2058 = vunpack.c.l.b16 %v1551
        %v2059 = vunpack.c.h.b16 %v1551
        %v2060 = vunpack.c.l.b16 %v1552
        %v2061 = vunpack.c.h.b16 %v1552
        %v2062 = vunpack.c.l.b16 %v1553
        %v2063 = vunpack.c.h.b16 %v1553
        %v2064 = vunpack.c.l.b16 %v1554
        %v2065 = vunpack.c.h.b16 %v1554
        %v2066 = vunpack.c.l.b16 %v1555
        %v2067 = vunpack.c.h.b16 %v1555
        %v2068 = vunpack.c.l.b16 %v1556
        %v2069 = vunpack.c.h.b16 %v1556
        %v2070 = vunpack.c.l.b16 %v1557
        %v2071 = vunpack.c.h.b16 %v1557
        %v2072 = vunpack.c.l.b16 %v1558
        %v2073 = vunpack.c.h.b16 %v1558
        %v2074 = vunpack.c.l.b16 %v1559
        %v2075 = vunpack.c.h.b16 %v1559
        %v2076 = vunpack.c.l.b16 %v1560
        %v2077 = vunpack.c.h.b16 %v1560
        %v2078 = vunpack.c.l.b16 %v1561
        %v2079 = vunpack.c.h.b16 %v1561
        %v2080 = vunpack.c.l.b16 %v1562
        %v2081 = vunpack.c.h.b16 %v1562
        %v2082 = vunpack.c.l.b16 %v1563
        %v2083 = vunpack.c.h.b16 %v1563
        %v2084 = vunpack.c.l.b16 %v1564
        %v2085 = vunpack.c.h.b16 %v1564
        %v2086 = vunpack.c.l.b16 %v1565
        %v2087 = vunpack.c.h.b16 %v1565
        %v2088 = vunpack.c.l.b16 %v1566
        %v2089 = vunpack.c.h.b16 %v1566
        %v2090 = vunpack.c.l.b16 %v1567
        %v2091 = vunpack.c.h.b16 %v1567
        %v2092 = vunpack.c.l.b16 %v1568
        %v2093 = vunpack.c.h.b16 %v1568
        %v2094 = vunpack.c.l.b16 %v1569
        %v2095 = vunpack.c.h.b16 %v1569
        %v2096 = vunpack.c.l.b16 %v1570
        %v2097 = vunpack.c.h.b16 %v1570
        %v2098 = vunpack.c.l.b16 %v1571
        %v2099 = vunpack.c.h.b16 %v1571
        %v2100 = vunpack.c.l.b16 %v1572
        %v2101 = vunpack.c.h.b16 %v1572
        %v2102 = vunpack.c.l.b16 %v1573
        %v2103 = vunpack.c.h.b16 %v1573
        %v2104 = vunpack.c.l.b16 %v1574
        %v2105 = vunpack.c.h.b16 %v1574
        %v2106 = vunpack.c.l.b16 %v1575
        %v2107 = vunpack.c.h.b16 %v1575
        %v2108 = vunpack.c.l.b16 %v1576
        %v2109 = vunpack.c.h.b16 %v1576
        %v2110 = vunpack.c.l.b16 %v1577
        %v2111 = vunpack.c.h.b16 %v1577
        %v2112 = vunpack.c.l.b16 %v1578
        %v2113 = vunpack.c.h.b16 %v1578
        %v2114 = vunpack.c.l.b16 %v1579
        %v2115 = vunpack.c.h.b16 %v1579
        %v2116 = vunpack.c.l.b16 %v1580
        %v2117 = vunpack.c.h.b16 %v1580
        %v2118 = vunpack.c.l.b16 %v1581
        %v2119 = vunpack.c.h.b16 %v1581
        %v2120 = vunpack.c.l.b16 %v1582
        %v2121 = vunpack.c.h.b16 %v1582
        %v2122 = vunpack.c.l.b16 %v1583
        %v2123 = vunpack.c.h.b16 %v1583
        %v2124 = vunpack.c.l.b16 %v1584
        %v2125 = vunpack.c.h.b16 %v1584
        %v2126 = vunpack.c.l.b16 %v1585
        %v2127 = vunpack.c.h.b16 %v1585
        %v2128 = vunpack.c.l.b16 %v1586
        %v2129 = vunpack.c.h.b16 %v1586
        %v2130 = vunpack.c.l.b16 %v1587
        %v2131 = vunpack.c.h.b16 %v1587
        %v2132 = vunpack.c.l.b16 %v1588
        %v2133 = vunpack.c.h.b16 %v1588
        %v2134 = vunpack.c.l.b16 %v1589
        %v2135 = vunpack.c.h.b16 %v1589
        %v2136 = vunpack.c.l.b16 %v1590
        %v2137 = vunpack.c.h.b16 %v1590
        %v2138 = vunpack.c.l.b16 %v1591
        %v2139 = vunpack.c.h.b16 %v1591
        %v2140 = vunpack.c.l.b16 %v1592
        %v2141 = vunpack.c.h.b16 %v1592
        %v2142 = vunpack.c.l.b16 %v1593
        %v2143 = vunpack.c.h.b16 %v1593
        %v2144 = vunpack.c.l.b16 %v1594
        %v2145 = vunpack.c.h.b16 %v1594
        %v2146 = vunpack.c.l.b16 %v1595
        %v2147 = vunpack.c.h.b16 %v1595
        %v2148 = vunpack.c.l.b16 %v1596
        %v2149 = vunpack.c.h.b16 %v1596
        %v2150 = vunpack.c.l.b16 %v1597
        %v2151 = vunpack.c.h.b16 %v1597
        %v2152 = vunpack.c.l.b16 %v1598
        %v2153 = vunpack.c.h.b16 %v1598
        %v2154 = vunpack.c.l.b16 %v1599
        %v2155 = vunpack.c.h.b16 %v1599
        %v2156 = vunpack.c.l.b16 %v1600
        %v2157 = vunpack.c.h.b16 %v1600
        %v2158 = vunpack.c.l.b16 %v1601
        %v2159 = vunpack.c.h.b16 %v1601
        %v2160 = vunpack.c.l.b16 %v1602
        %v2161 = vunpack.c.h.b16 %v1602
        %v2162 = vunpack.c.l.b16 %v1603
        %v2163 = vunpack.c.h.b16 %v1603
        %v2164 = vunpack.c.l.b16 %v1604
        %v2165 = vunpack.c.h.b16 %v1604
        %v2166 = vunpack.c.l.b16 %v1605
        %v2167 = vunpack.c.h.b16 %v1605
        %v2168 = vunpack.c.l.b16 %v1606
        %v2169 = vunpack.c.h.b16 %v1606
        %v2170 = vunpack.c.l.b16 %v1607
        %v2171 = vunpack.c.h.b16 %v1607
        %v2172 = vunpack.c.l.b16 %v1608
        %v2173 = vunpack.c.h.b16 %v1608
        %v2174 = vunpack.c.l.b16 %v1609
        %v2175 = vunpack.c.h.b16 %v1609
        %v2176 = vunpack.c.l.b16 %v1610
        %v2177 = vunpack.c.h.b16 %v1610
        %v2178 = vunpack.c.l.b16 %v1611
        %v2179 = vunpack.c.h.b16 %v1611
        %v2180 = vunpack.c.l.b16 %v1612
        %v2181 = vunpack.c.h.b16 %v1612
        %v2182 = vunpack.c.l.b16 %v1613
        %v2183 = vunpack.c.h.b16 %v1613
        %v2184 = vunpack.c.l.b16 %v1614
        %v2185 = vunpack.c.h.b16 %v1614
        %v2186 = vunpack.c.l.b16 %v1615
        %v2187 = vunpack.c.h.b16 %v1615
        %v2188 = vunpack.c.l.b16 %v1616
        %v2189 = vunpack.c.h.b16 %v1616
        %v2190 = vunpack.c.l.b16 %v1617
        %v2191 = vunpack.c.h.b16 %v1617
        %v2192 = vunpack.c.l.b16 %v1618
        %v2193 = vunpack.c.h.b16 %v1618
        %v2194 = vunpack.c.l.b16 %v1619
        %v2195 = vunpack.c.h.b16 %v1619
        %v2196 = vunpack.c.l.b16 %v1620
        %v2197 = vunpack.c.h.b16 %v1620
        %v2198 = vunpack.c.l.b16 %v1621
        %v2199 = vunpack.c.h.b16 %v1621
        %v2200 = vunpack.c.l.b16 %v1622
        %v2201 = vunpack.c.h.b16 %v1622
        %v2202 = vunpack.c.l.b16 %v1623
        %v2203 = vunpack.c.h.b16 %v1623
        %v2204 = vunpack.c.l.b16 %v1624
        %v2205 = vunpack.c.h.b16 %v1624
        %v2206 = vunpack.c.l.b16 %v1625
        %v2207 = vunpack.c.h.b16 %v1625
        %v2208 = vunpack.c.l.b16 %v1626
        %v2209 = vunpack.c.h.b16 %v1626
        %v2210 = vunpack.c.l.b16 %v1627
        %v2211 = vunpack.c.h.b16 %v1627
        %v2212 = vunpack.c.l.b16 %v1628
        %v2213 = vunpack.c.h.b16 %v1628
        %v2214 = vunpack.c.l.b16 %v1629
        %v2215 = vunpack.c.h.b16 %v1629
        %v2216 = vunpack.c.l.b16 %v1630
        %v2217 = vunpack.c.h.b16 %v1630
        %v2218 = vunpack.c.l.b16 %v1631
        %v2219 = vunpack.c.h.b16 %v1631
        %v2220 = vunpack.c.l.b16 %v1632
        %v2221 = vunpack.c.h.b16 %v1632
        %v2222 = vunpack.c.l.b16 %v1633
        %v2223 = vunpack.c.h.b16 %v1633
        %v2224 = vunpack.c.l.b16 %v1634
        %v2225 = vunpack.c.h.b16 %v1634
        %v2226 = vunpack.c.l.b16 %v1635
        %v2227 = vunpack.c.h.b16 %v1635
        %v2228 = vunpack.c.l.b16 %v1636
        %v2229 = vunpack.c.h.b16 %v1636
        %v2230 = vunpack.c.l.b16 %v1637
        %v2231 = vunpack.c.h.b16 %v1637
        %v2232 = vunpack.c.l.b16 %v1638
        %v2233 = vunpack.c.h.b16 %v1638
        %v2234 = vunpack.c.l.b16 %v1639
        %v2235 = vunpack.c.h.b16 %v1639
        %v2236 = vunpack.c.l.b16 %v1640
        %v2237 = vunpack.c.h.b16 %v1640
        %v2238 = vunpack.c.l.b16 %v1641
        %v2239 = vunpack.c.h.b16 %v1641
        %v2240 = vpack.c.b16 %v1860, %v1856
        %v2241 = vpack.c.b16 %v1861, %v1857
        %v2242 = vpack.c.b16 %v1862, %v1858
        %v2243 = vpack.c.b16 %v1863, %v1859
        %v2244 = vpack.c.b16 %v1868, %v1864
        %v2245 = vpack.c.b16 %v1869, %v1865
        %v2246 = vpack.c.b16 %v1870, %v1866
        %v2247 = vpack.c.b16 %v1871, %v1867
        %v2248 = vpack.c.b16 %v1876, %v1872
        %v2249 = vpack.c.b16 %v1877, %v1873
        %v2250 = vpack.c.b16 %v1878, %v1874
        %v2251 = vpack.c.b16 %v1879, %v1875
        %v2252 = vpack.c.b16 %v1884, %v1880
        %v2253 = vpack.c.b16 %v1885, %v1881
        %v2254 = vpack.c.b16 %v1886, %v1882
        %v2255 = vpack.c.b16 %v1887, %v1883
        %v2256 = vpack.c.b16 %v1892, %v1888
        %v2257 = vpack.c.b16 %v1893, %v1889
        %v2258 = vpack.c.b16 %v1894, %v1890
        %v2259 = vpack.c.b16 %v1895, %v1891
        %v2260 = vpack.c.b16 %v1900, %v1896
        %v2261 = vpack.c.b16 %v1901, %v1897
        %v2262 = vpack.c.b16 %v1902, %v1898
        %v2263 = vpack.c.b16 %v1903, %v1899
        %v2264 = vpack.c.b16 %v1908, %v1904
        %v2265 = vpack.c.b16 %v1909, %v1905
        %v2266 = vpack.c.b16 %v1910, %v1906
        %v2267 = vpack.c.b16 %v1911, %v1907
        %v2268 = vpack.c.b16 %v1916, %v1912
        %v2269 = vpack.c.b16 %v1917, %v1913
        %v2270 = vpack.c.b16 %v1918, %v1914
        %v2271 = vpack.c.b16 %v1919, %v1915
        %v2272 = vpack.c.b16 %v1924, %v1920
        %v2273 = vpack.c.b16 %v1925, %v1921
        %v2274 = vpack.c.b16 %v1926, %v1922
        %v2275 = vpack.c.b16 %v1927, %v1923
        %v2276 = vpack.c.b16 %v1932, %v1928
        %v2277 = vpack.c.b16 %v1933, %v1929
        %v2278 = vpack.c.b16 %v1934, %v1930
        %v2279 = vpack.c.b16 %v1935, %v1931
        %v2280 = vpack.c.b16 %v1940, %v1936
        %v2281 = vpack.c.b16 %v1941, %v1937
        %v2282 = vpack.c.b16 %v1942, %v1938
        %v2283 = vpack.c.b16 %v1943, %v1939
        %v2284 = vpack.c.b16 %v1948, %v1944
        %v2285 = vpack.c.b16 %v1949, %v1945
        %v2286 = vpack.c.b16 %v1950, %v1946
        %v2287 = vpack.c.b16 %v1951, %v1947
        %v2288 = vpack.c.b16 %v1956, %v1952
        %v2289 = vpack.c.b16 %v1957, %v1953
        %v2290 = vpack.c.b16 %v1958, %v1954
        %v2291 = vpack.c.b16 %v1959, %v1955
        %v2292 = vpack.c.b16 %v1964, %v1960
        %v2293 = vpack.c.b16 %v1965, %v1961
        %v2294 = vpack.c.b16 %v1966, %v1962
        %v2295 = vpack.c.b16 %v1967, %v1963
        %v2296 = vpack.c.b16 %v1972, %v1968
        %v2297 = vpack.c.b16 %v1973, %v1969
        %v2298 = vpack.c.b16 %v1974, %v1970
        %v2299 = vpack.c.b16 %v1975, %v1971
        %v2300 = vpack.c.b16 %v1980, %v1976
        %v2301 = vpack.c.b16 %v1981, %v1977
        %v2302 = vpack.c.b16 %v1982, %v1978
        %v2303 = vpack.c.b16 %v1983, %v1979
        %v2304 = vpack.c.b16 %v1988, %v1984
        %v2305 = vpack.c.b16 %v1989, %v1985
        %v2306 = vpack.c.b16 %v1990, %v1986
        %v2307 = vpack.c.b16 %v1991, %v1987
        %v2308 = vpack.c.b16 %v1996, %v1992
        %v2309 = vpack.c.b16 %v1997, %v1993
        %v2310 = vpack.c.b16 %v1998, %v1994
        %v2311 = vpack.c.b16 %v1999, %v1995
        %v2312 = vpack.c.b16 %v2004, %v2000
        %v2313 = vpack.c.b16 %v2005, %v2001
        %v2314 = vpack.c.b16 %v2006, %v2002
        %v2315 = vpack.c.b16 %v2007, %v2003
        %v2316 = vpack.c.b16 %v2012, %v2008
        %v2317 = vpack.c.b16 %v2013, %v2009
        %v2318 = vpack.c.b16 %v2014, %v2010
        %v2319 = vpack.c.b16 %v2015, %v2011
        %v2320 = vpack.c.b16 %v2020, %v2016
        %v2321 = vpack.c.b16 %v2021, %v2017
        %v2322 = vpack.c.b16 %v2022, %v2018
        %v2323 = vpack.c.b16 %v2023, %v2019
        %v2324 = vpack.c.b16 %v2028, %v2024
        %v2325 = vpack.c.b16 %v2029, %v2025
        %v2326 = vpack.c.b16 %v2030, %v2026
        %v2327 = vpack.c.b16 %v2031, %v2027
        %v2328 = vpack.c.b16 %v2036, %v2032
        %v2329 = vpack.c.b16 %v2037, %v2033
        %v2330 = vpack.c.b16 %v2038, %v2034
        %v2331 = vpack.c.b16 %v2039, %v2035
        %v2332 = vpack.c.b16 %v2044, %v2040
        %v2333 = vpack.c.b16 %v2045, %v2041
        %v2334 = vpack.c.b16 %v2046, %v2042
        %v2335 = vpack.c.b16 %v2047, %v2043
        %v2336 = vpack.c.b16 %v2052, %v2048
        %v2337 = vpack.c.b16 %v2053, %v2049
        %v2338 = vpack.c.b16 %v2054, %v2050
        %v2339 = vpack.c.b16 %v2055, %v2051
        %v2340 = vpack.c.b16 %v2060, %v2056
        %v2341 = vpack.c.b16 %v2061, %v2057
        %v2342 = vpack.c.b16 %v2062, %v2058
        %v2343 = vpack.c.b16 %v2063, %v2059
        %v2344 = vpack.c.b16 %v2068, %v2064
        %v2345 = vpack.c.b16 %v2069, %v2065
        %v2346 = vpack.c.b16 %v2070, %v2066
        %v2347 = vpack.c.b16 %v2071, %v2067
        %v2348 = vpack.c.b16 %v2076, %v2072
        %v2349 = vpack.c.b16 %v2077, %v2073
        %v2350 = vpack.c.b16 %v2078, %v2074
        %v2351 = vpack.c.b16 %v2079, %v2075
        %v2352 = vpack.c.b16 %v2084, %v2080
        %v2353 = vpack.c.b16 %v2085, %v2081
        %v2354 = vpack.c.b16 %v2086, %v2082
        %v2355 = vpack.c.b16 %v2087, %v2083
        %v2356 = vpack.c.b16 %v2092, %v2088
        %v2357 = vpack.c.b16 %v2093, %v2089
        %v2358 = vpack.c.b16 %v2094, %v2090
        %v2359 = vpack.c.b16 %v2095, %v2091
        %v2360 = vpack.c.b16 %v2100, %v2096
        %v2361 = vpack.c.b16 %v2101, %v2097
        %v2362 = vpack.c.b16 %v2102, %v2098
        %v2363 = vpack.c.b16 %v2103, %v2099
        %v2364 = vpack.c.b16 %v2108, %v2104
        %v2365 = vpack.c.b16 %v2109, %v2105
        %v2366 = vpack.c.b16 %v2110, %v2106
        %v2367 = vpack.c.b16 %v2111, %v2107
        %v2368 = vpack.c.b16 %v2116, %v2112
        %v2369 = vpack.c.b16 %v2117, %v2113
        %v2370 = vpack.c.b16 %v2118, %v2114
        %v2371 = vpack.c.b16 %v2119, %v2115
        %v2372 = vpack.c.b16 %v2124, %v2120
        %v2373 = vpack.c.b16 %v2125, %v2121
        %v2374 = vpack.c.b16 %v2126, %v2122
        %v2375 = vpack.c.b16 %v2127, %v2123
        %v2376 = vpack.c.b16 %v2132, %v2128
        %v2377 = vpack.c.b16 %v2133, %v2129
        %v2378 = vpack.c.b16 %v2134, %v2130
        %v2379 = vpack.c.b16 %v2135, %v2131
        %v2380 = vpack.c.b16 %v2140, %v2136
        %v2381 = vpack.c.b16 %v2141, %v2137
        %v2382 = vpack.c.b16 %v2142, %v2138
        %v2383 = vpack.c.b16 %v2143, %v2139
        %v2384 = vpack.c.b16 %v2148, %v2144
        %v2385 = vpack.c.b16 %v2149, %v2145
        %v2386 = vpack.c.b16 %v2150, %v2146
        %v2387 = vpack.c.b16 %v2151, %v2147
        %v2388 = vpack.c.b16 %v2156, %v2152
        %v2389 = vpack.c.b16 %v2157, %v2153
        %v2390 = vpack.c.b16 %v2158, %v2154
        %v2391 = vpack.c.b16 %v2159, %v2155
        %v2392 = vpack.c.b16 %v2164, %v2160
        %v2393 = vpack.c.b16 %v2165, %v2161
        %v2394 = vpack.c.b16 %v2166, %v2162
        %v2395 = vpack.c.b16 %v2167, %v2163
        %v2396 = vpack.c.b16 %v2172, %v2168
        %v2397 = vpack.c.b16 %v2173, %v2169
        %v2398 = vpack.c.b16 %v2174, %v2170
        %v2399 = vpack.c.b16 %v2175, %v2171
        %v2400 = vpack.c.b16 %v2180, %v2176
        %v2401 = vpack.c.b16 %v2181, %v2177
        %v2402 = vpack.c.b16 %v2182, %v2178
        %v2403 = vpack.c.b16 %v2183, %v2179
        %v2404 = vpack.c.b16 %v2188, %v2184
        %v2405 = vpack.c.b16 %v2189, %v2185
        %v2406 = vpack.c.b16 %v2190, %v2186
        %v2407 = vpack.c.b16 %v2191, %v2187
        %v2408 = vpack.c.b16 %v2196, %v2192
        %v2409 = vpack.c.b16 %v2197, %v2193
        %v2410 = vpack.c.b16 %v2198, %v2194
        %v2411 = vpack.c.b16 %v2199, %v2195
        %v2412 = vpack.c.b16 %v2204, %v2200
        %v2413 = vpack.c.b16 %v2205, %v2201
        %v2414 = vpack.c.b16 %v2206, %v2202
        %v2415 = vpack.c.b16 %v2207, %v2203
        %v2416 = vpack.c.b16 %v2212, %v2208
        %v2417 = vpack.c.b16 %v2213, %v2209
        %v2418 = vpack.c.b16 %v2214, %v2210
        %v2419 = vpack.c.b16 %v2215, %v2211
        %v2420 = vpack.c.b16 %v2220, %v2216
        %v2421 = vpack.c.b16 %v2221, %v2217
        %v2422 = vpack.c.b16 %v2222, %v2218
        %v2423 = vpack.c.b16 %v2223, %v2219
        %v2424 = vpack.c.b16 %v2228, %v2224
        %v2425 = vpack.c.b16 %v2229, %v2225
        %v2426 = vpack.c.b16 %v2230, %v2226
        %v2427 = vpack.c.b16 %v2231, %v2227
        %v2428 = vpack.c.b16 %v2236, %v2232
        %v2429 = vpack.c.b16 %v2237, %v2233
        %v2430 = vpack.c.b16 %v2238, %v2234
        %v2431 = vpack.c.b16 %v2239, %v2235
        %2624 = vmatprep.subr.bf16.mxu0 %v2269
        %2625 = vmatpush1.bf16.msra.mxu0 %v2268
        %2626 = vmatprep.subr.bf16.mxu0 %v2265
        %2627 = vmatpush1.bf16.msra.mxu0 %v2264
        %2628 = vmatprep.subr.bf16.mxu0 %v2261
        %2629 = vmatpush1.bf16.msra.mxu0 %v2260
        %2630 = vmatprep.subr.bf16.mxu0 %v2257
        %2631 = vmatpush1.bf16.msra.mxu0 %v2256
        %2632 = vmatprep.subr.bf16.mxu0 %v2253
        %2633 = vmatpush1.bf16.msra.mxu0 %v2252
        %2634 = vmatprep.subr.bf16.mxu0 %v2249
        %2635 = vmatpush1.bf16.msra.mxu0 %v2248
        %2636 = vmatprep.subr.bf16.mxu0 %v2245
        %2637 = vmatpush1.bf16.msra.mxu0 %v2244
        %2638 = vmatprep.subr.bf16.mxu0 %v2241
        %2639 = vmatpush1.bf16.msra.mxu0 %v2240
        %2640 = vmatprep.subr.bf16.mxu0 %v2301
        %2641 = vmatpush2.bf16.msra.mxu0 %v2300
        %2642 = vmatprep.subr.bf16.mxu0 %v2297
        %2643 = vmatpush2.bf16.msra.mxu0 %v2296
        %2644 = vmatprep.subr.bf16.mxu0 %v2293
        %2645 = vmatpush2.bf16.msra.mxu0 %v2292
        %2646 = vmatprep.subr.bf16.mxu0 %v2289
        %2647 = vmatpush2.bf16.msra.mxu0 %v2288
        %2648 = vmatprep.subr.bf16.mxu0 %v2285
        %2649 = vmatpush2.bf16.msra.mxu0 %v2284
        %2650 = vmatprep.subr.bf16.mxu0 %v2281
        %2651 = vmatpush2.bf16.msra.mxu0 %v2280
        %2652 = vmatprep.subr.bf16.mxu0 %v2277
        %2653 = vmatpush2.bf16.msra.mxu0 %v2276
        %2654 = vmatprep.subr.bf16.mxu0 %v2273
        %2655 = vmatpush2.bf16.msra.mxu0 %v2272
        %2656 = vmatprep.mubr.bf16.mxu0 %v1403
        %2657 = vmatmul.mubr.bf16.gmra.mxu0 %v1402
        %v2658 = vpop.f32.mrf.mxu0
        %v2659 = vadd.f32 %v1647, %v2658
        %v2660 = vpop.f32.mrf.mxu0
        %v2661 = vadd.f32 %v1651, %v2660
        %v2662 = vpop.f32.mrf.mxu0
        %v2663 = vadd.f32 %v1647, %v2662
        %v2664 = vpop.f32.mrf.mxu0
        %v2665 = vadd.f32 %v1651, %v2664
        %2666 = vmatprep.mubr.bf16.mxu0 %v1409
        %2667 = vmatmul.mubr.bf16.gmra.mxu0 %v1408
        %v2668 = vpop.f32.mrf.mxu0
        %v2669 = vadd.f32 %v1647, %v2668
        %v2670 = vpop.f32.mrf.mxu0
        %v2671 = vadd.f32 %v1651, %v2670
        %v2672 = vpop.f32.mrf.mxu0
        %v2673 = vadd.f32 %v1647, %v2672
        %v2674 = vpop.f32.mrf.mxu0
        %v2675 = vadd.f32 %v1651, %v2674
        %2676 = vmatprep.mubr.bf16.mxu0 %v1415
        %2677 = vmatmul.mubr.bf16.gmra.mxu0 %v1414
        %v2678 = vpop.f32.mrf.mxu0
        %v2679 = vadd.f32 %v1647, %v2678
        %v2680 = vpop.f32.mrf.mxu0
        %v2681 = vadd.f32 %v1651, %v2680
        %v2682 = vpop.f32.mrf.mxu0
        %v2683 = vadd.f32 %v1647, %v2682
        %v2684 = vpop.f32.mrf.mxu0
        %v2685 = vadd.f32 %v1651, %v2684
        %2686 = vmatprep.mubr.bf16.mxu0 %v1421
        %2687 = vmatmul.mubr.bf16.gmra.mxu0 %v1420
        %v2688 = vpop.f32.mrf.mxu0
        %v2689 = vadd.f32 %v1647, %v2688
        %v2690 = vpop.f32.mrf.mxu0
        %v2691 = vadd.f32 %v1651, %v2690
        %v2692 = vpop.f32.mrf.mxu0
        %v2693 = vadd.f32 %v1647, %v2692
        %v2694 = vpop.f32.mrf.mxu0
        %v2695 = vadd.f32 %v1651, %v2694
        %2696 = vmatprep.mubr.bf16.mxu0 %v1427
        %2697 = vmatmul.mubr.bf16.gmra.mxu0 %v1426
        %v2698 = vpop.f32.mrf.mxu0
        %v2699 = vadd.f32 %v1647, %v2698
        %v2700 = vpop.f32.mrf.mxu0
        %v2701 = vadd.f32 %v1651, %v2700
        %v2702 = vpop.f32.mrf.mxu0
        %v2703 = vadd.f32 %v1647, %v2702
        %v2704 = vpop.f32.mrf.mxu0
        %v2705 = vadd.f32 %v1651, %v2704
        %2706 = vmatprep.mubr.bf16.mxu0 %v1433
        %2707 = vmatmul.mubr.bf16.gmra.mxu0 %v1432
        %v2708 = vpop.f32.mrf.mxu0
        %v2709 = vadd.f32 %v1647, %v2708
        %v2710 = vpop.f32.mrf.mxu0
        %v2711 = vadd.f32 %v1651, %v2710
        %v2712 = vpop.f32.mrf.mxu0
        %v2713 = vadd.f32 %v1647, %v2712
        %v2714 = vpop.f32.mrf.mxu0
        %v2715 = vadd.f32 %v1651, %v2714
        %2716 = vmatprep.mubr.bf16.mxu0 %v1439
        %2717 = vmatmul.mubr.bf16.gmra.mxu0 %v1438
        %v2718 = vpop.f32.mrf.mxu0
        %v2719 = vadd.f32 %v1647, %v2718
        %v2720 = vpop.f32.mrf.mxu0
        %v2721 = vadd.f32 %v1651, %v2720
        %v2722 = vpop.f32.mrf.mxu0
        %v2723 = vadd.f32 %v1647, %v2722
        %v2724 = vpop.f32.mrf.mxu0
        %v2725 = vadd.f32 %v1651, %v2724
        %2726 = vmatprep.mubr.bf16.mxu0 %v1445
        %2727 = vmatmul.mubr.bf16.gmra.mxu0 %v1444
        %v2728 = vpop.f32.mrf.mxu0
        %v2729 = vadd.f32 %v1647, %v2728
        %v2730 = vpop.f32.mrf.mxu0
        %v2731 = vadd.f32 %v1651, %v2730
        %v2732 = vpop.f32.mrf.mxu0
        %v2733 = vadd.f32 %v1647, %v2732
        %v2734 = vpop.f32.mrf.mxu0
        %v2735 = vadd.f32 %v1651, %v2734
        %2736 = vdwg.mxu0
        %2737 = vmatprep.subr.bf16.mxu0 %v2333
        %2738 = vmatpush1.bf16.msra.mxu0 %v2332
        %2739 = vmatprep.subr.bf16.mxu0 %v2329
        %2740 = vmatpush1.bf16.msra.mxu0 %v2328
        %2741 = vmatprep.subr.bf16.mxu0 %v2325
        %2742 = vmatpush1.bf16.msra.mxu0 %v2324
        %2743 = vmatprep.subr.bf16.mxu0 %v2321
        %2744 = vmatpush1.bf16.msra.mxu0 %v2320
        %2745 = vmatprep.subr.bf16.mxu0 %v2317
        %2746 = vmatpush1.bf16.msra.mxu0 %v2316
        %2747 = vmatprep.subr.bf16.mxu0 %v2313
        %2748 = vmatpush1.bf16.msra.mxu0 %v2312
        %2749 = vmatprep.subr.bf16.mxu0 %v2309
        %2750 = vmatpush1.bf16.msra.mxu0 %v2308
        %2751 = vmatprep.subr.bf16.mxu0 %v2305
        %2752 = vmatpush1.bf16.msra.mxu0 %v2304
        %2753 = vmatprep.subr.bf16.mxu0 %v2365
        %2754 = vmatpush2.bf16.msra.mxu0 %v2364
        %2755 = vmatprep.subr.bf16.mxu0 %v2361
        %2756 = vmatpush2.bf16.msra.mxu0 %v2360
        %2757 = vmatprep.subr.bf16.mxu0 %v2357
        %2758 = vmatpush2.bf16.msra.mxu0 %v2356
        %2759 = vmatprep.subr.bf16.mxu0 %v2353
        %2760 = vmatpush2.bf16.msra.mxu0 %v2352
        %2761 = vmatprep.subr.bf16.mxu0 %v2349
        %2762 = vmatpush2.bf16.msra.mxu0 %v2348
        %2763 = vmatprep.subr.bf16.mxu0 %v2345
        %2764 = vmatpush2.bf16.msra.mxu0 %v2344
        %2765 = vmatprep.subr.bf16.mxu0 %v2341
        %2766 = vmatpush2.bf16.msra.mxu0 %v2340
        %2767 = vmatprep.subr.bf16.mxu0 %v2337
        %2768 = vmatpush2.bf16.msra.mxu0 %v2336
        %2769 = vmatprep.mubr.bf16.mxu0 %v1405
        %2770 = vmatmul.mubr.bf16.gmra.mxu0 %v1404
        %v2771 = vpop.f32.mrf.mxu0
        %v2772 = vadd.f32 %v2659, %v2771
        %v2773 = vpop.f32.mrf.mxu0
        %v2774 = vadd.f32 %v2661, %v2773
        %v2775 = vpop.f32.mrf.mxu0
        %v2776 = vadd.f32 %v2663, %v2775
        %v2777 = vpop.f32.mrf.mxu0
        %v2778 = vadd.f32 %v2665, %v2777
        %2779 = vmatprep.mubr.bf16.mxu0 %v1411
        %2780 = vmatmul.mubr.bf16.gmra.mxu0 %v1410
        %v2781 = vpop.f32.mrf.mxu0
        %v2782 = vadd.f32 %v2669, %v2781
        %v2783 = vpop.f32.mrf.mxu0
        %v2784 = vadd.f32 %v2671, %v2783
        %v2785 = vpop.f32.mrf.mxu0
        %v2786 = vadd.f32 %v2673, %v2785
        %v2787 = vpop.f32.mrf.mxu0
        %v2788 = vadd.f32 %v2675, %v2787
        %2789 = vmatprep.mubr.bf16.mxu0 %v1417
        %2790 = vmatmul.mubr.bf16.gmra.mxu0 %v1416
        %v2791 = vpop.f32.mrf.mxu0
        %v2792 = vadd.f32 %v2679, %v2791
        %v2793 = vpop.f32.mrf.mxu0
        %v2794 = vadd.f32 %v2681, %v2793
        %v2795 = vpop.f32.mrf.mxu0
        %v2796 = vadd.f32 %v2683, %v2795
        %v2797 = vpop.f32.mrf.mxu0
        %v2798 = vadd.f32 %v2685, %v2797
        %2799 = vmatprep.mubr.bf16.mxu0 %v1423
        %2800 = vmatmul.mubr.bf16.gmra.mxu0 %v1422
        %v2801 = vpop.f32.mrf.mxu0
        %v2802 = vadd.f32 %v2689, %v2801
        %v2803 = vpop.f32.mrf.mxu0
        %v2804 = vadd.f32 %v2691, %v2803
        %v2805 = vpop.f32.mrf.mxu0
        %v2806 = vadd.f32 %v2693, %v2805
        %v2807 = vpop.f32.mrf.mxu0
        %v2808 = vadd.f32 %v2695, %v2807
        %2809 = vmatprep.mubr.bf16.mxu0 %v1429
        %2810 = vmatmul.mubr.bf16.gmra.mxu0 %v1428
        %v2811 = vpop.f32.mrf.mxu0
        %v2812 = vadd.f32 %v2699, %v2811
        %v2813 = vpop.f32.mrf.mxu0
        %v2814 = vadd.f32 %v2701, %v2813
        %v2815 = vpop.f32.mrf.mxu0
        %v2816 = vadd.f32 %v2703, %v2815
        %v2817 = vpop.f32.mrf.mxu0
        %v2818 = vadd.f32 %v2705, %v2817
        %2819 = vmatprep.mubr.bf16.mxu0 %v1435
        %2820 = vmatmul.mubr.bf16.gmra.mxu0 %v1434
        %v2821 = vpop.f32.mrf.mxu0
        %v2822 = vadd.f32 %v2709, %v2821
        %v2823 = vpop.f32.mrf.mxu0
        %v2824 = vadd.f32 %v2711, %v2823
        %v2825 = vpop.f32.mrf.mxu0
        %v2826 = vadd.f32 %v2713, %v2825
        %v2827 = vpop.f32.mrf.mxu0
        %v2828 = vadd.f32 %v2715, %v2827
        %2829 = vmatprep.mubr.bf16.mxu0 %v1441
        %2830 = vmatmul.mubr.bf16.gmra.mxu0 %v1440
        %v2831 = vpop.f32.mrf.mxu0
        %v2832 = vadd.f32 %v2719, %v2831
        %v2833 = vpop.f32.mrf.mxu0
        %v2834 = vadd.f32 %v2721, %v2833
        %v2835 = vpop.f32.mrf.mxu0
        %v2836 = vadd.f32 %v2723, %v2835
        %v2837 = vpop.f32.mrf.mxu0
        %v2838 = vadd.f32 %v2725, %v2837
        %2839 = vmatprep.mubr.bf16.mxu0 %v1447
        %2840 = vmatmul.mubr.bf16.gmra.mxu0 %v1446
        %v2841 = vpop.f32.mrf.mxu0
        %v2842 = vadd.f32 %v2729, %v2841
        %v2843 = vpop.f32.mrf.mxu0
        %v2844 = vadd.f32 %v2731, %v2843
        %v2845 = vpop.f32.mrf.mxu0
        %v2846 = vadd.f32 %v2733, %v2845
        %v2847 = vpop.f32.mrf.mxu0
        %v2848 = vadd.f32 %v2735, %v2847
        %2849 = vdwg.mxu0
        %2850 = vmatprep.subr.bf16.mxu0 %v2397
        %2851 = vmatpush1.bf16.msra.mxu0 %v2396
        %2852 = vmatprep.subr.bf16.mxu0 %v2393
        %2853 = vmatpush1.bf16.msra.mxu0 %v2392
        %2854 = vmatprep.subr.bf16.mxu0 %v2389
        %2855 = vmatpush1.bf16.msra.mxu0 %v2388
        %2856 = vmatprep.subr.bf16.mxu0 %v2385
        %2857 = vmatpush1.bf16.msra.mxu0 %v2384
        %2858 = vmatprep.subr.bf16.mxu0 %v2381
        %2859 = vmatpush1.bf16.msra.mxu0 %v2380
        %2860 = vmatprep.subr.bf16.mxu0 %v2377
        %2861 = vmatpush1.bf16.msra.mxu0 %v2376
        %2862 = vmatprep.subr.bf16.mxu0 %v2373
        %2863 = vmatpush1.bf16.msra.mxu0 %v2372
        %2864 = vmatprep.subr.bf16.mxu0 %v2369
        %2865 = vmatpush1.bf16.msra.mxu0 %v2368
        %2866 = vmatprep.subr.bf16.mxu0 %v2429
        %2867 = vmatpush2.bf16.msra.mxu0 %v2428
        %2868 = vmatprep.subr.bf16.mxu0 %v2425
        %2869 = vmatpush2.bf16.msra.mxu0 %v2424
        %2870 = vmatprep.subr.bf16.mxu0 %v2421
        %2871 = vmatpush2.bf16.msra.mxu0 %v2420
        %2872 = vmatprep.subr.bf16.mxu0 %v2417
        %2873 = vmatpush2.bf16.msra.mxu0 %v2416
        %2874 = vmatprep.subr.bf16.mxu0 %v2413
        %2875 = vmatpush2.bf16.msra.mxu0 %v2412
        %2876 = vmatprep.subr.bf16.mxu0 %v2409
        %2877 = vmatpush2.bf16.msra.mxu0 %v2408
        %2878 = vmatprep.subr.bf16.mxu0 %v2405
        %2879 = vmatpush2.bf16.msra.mxu0 %v2404
        %2880 = vmatprep.subr.bf16.mxu0 %v2401
        %2881 = vmatpush2.bf16.msra.mxu0 %v2400
        %2882 = vmatprep.mubr.bf16.mxu0 %v1407
        %2883 = vmatmul.mubr.bf16.gmra.mxu0 %v1406
        %v2884 = vpop.f32.mrf.mxu0
        %v2885 = vadd.f32 %v2772, %v2884
        %v2886 = vpop.f32.mrf.mxu0
        %v2887 = vadd.f32 %v2774, %v2886
        %v2888 = vpop.f32.mrf.mxu0
        %v2889 = vadd.f32 %v2776, %v2888
        %v2890 = vpop.f32.mrf.mxu0
        %v2891 = vadd.f32 %v2778, %v2890
        %2892 = vmatprep.mubr.bf16.mxu0 %v1413
        %2893 = vmatmul.mubr.bf16.gmra.mxu0 %v1412
        %v2894 = vpop.f32.mrf.mxu0
        %v2895 = vadd.f32 %v2782, %v2894
        %v2896 = vpop.f32.mrf.mxu0
        %v2897 = vadd.f32 %v2784, %v2896
        %v2898 = vpop.f32.mrf.mxu0
        %v2899 = vadd.f32 %v2786, %v2898
        %v2900 = vpop.f32.mrf.mxu0
        %v2901 = vadd.f32 %v2788, %v2900
        %2902 = vmatprep.mubr.bf16.mxu0 %v1419
        %2903 = vmatmul.mubr.bf16.gmra.mxu0 %v1418
        %v2904 = vpop.f32.mrf.mxu0
        %v2905 = vadd.f32 %v2792, %v2904
        %v2906 = vpop.f32.mrf.mxu0
        %v2907 = vadd.f32 %v2794, %v2906
        %v2908 = vpop.f32.mrf.mxu0
        %v2909 = vadd.f32 %v2796, %v2908
        %v2910 = vpop.f32.mrf.mxu0
        %v2911 = vadd.f32 %v2798, %v2910
        %2912 = vmatprep.mubr.bf16.mxu0 %v1425
        %2913 = vmatmul.mubr.bf16.gmra.mxu0 %v1424
        %v2914 = vpop.f32.mrf.mxu0
        %v2915 = vadd.f32 %v2802, %v2914
        %v2916 = vpop.f32.mrf.mxu0
        %v2917 = vadd.f32 %v2804, %v2916
        %v2918 = vpop.f32.mrf.mxu0
        %v2919 = vadd.f32 %v2806, %v2918
        %v2920 = vpop.f32.mrf.mxu0
        %v2921 = vadd.f32 %v2808, %v2920
        %2922 = vmatprep.mubr.bf16.mxu0 %v1431
        %2923 = vmatmul.mubr.bf16.gmra.mxu0 %v1430
        %v2924 = vpop.f32.mrf.mxu0
        %v2925 = vadd.f32 %v2812, %v2924
        %v2926 = vpop.f32.mrf.mxu0
        %v2927 = vadd.f32 %v2814, %v2926
        %v2928 = vpop.f32.mrf.mxu0
        %v2929 = vadd.f32 %v2816, %v2928
        %v2930 = vpop.f32.mrf.mxu0
        %v2931 = vadd.f32 %v2818, %v2930
        %2932 = vmatprep.mubr.bf16.mxu0 %v1437
        %2933 = vmatmul.mubr.bf16.gmra.mxu0 %v1436
        %v2934 = vpop.f32.mrf.mxu0
        %v2935 = vadd.f32 %v2822, %v2934
        %v2936 = vpop.f32.mrf.mxu0
        %v2937 = vadd.f32 %v2824, %v2936
        %v2938 = vpop.f32.mrf.mxu0
        %v2939 = vadd.f32 %v2826, %v2938
        %v2940 = vpop.f32.mrf.mxu0
        %v2941 = vadd.f32 %v2828, %v2940
        %2942 = vmatprep.mubr.bf16.mxu0 %v1443
        %2943 = vmatmul.mubr.bf16.gmra.mxu0 %v1442
        %v2944 = vpop.f32.mrf.mxu0
        %v2945 = vadd.f32 %v2832, %v2944
        %v2946 = vpop.f32.mrf.mxu0
        %v2947 = vadd.f32 %v2834, %v2946
        %v2948 = vpop.f32.mrf.mxu0
        %v2949 = vadd.f32 %v2836, %v2948
        %v2950 = vpop.f32.mrf.mxu0
        %v2951 = vadd.f32 %v2838, %v2950
        %2952 = vmatprep.mubr.bf16.mxu0 %v1449
        %2953 = vmatmul.mubr.bf16.gmra.mxu0 %v1448
        %v2954 = vpop.f32.mrf.mxu0
        %v2955 = vadd.f32 %v2842, %v2954
        %v2956 = vpop.f32.mrf.mxu0
        %v2957 = vadd.f32 %v2844, %v2956
        %v2958 = vpop.f32.mrf.mxu0
        %v2959 = vadd.f32 %v2846, %v2958
        %v2960 = vpop.f32.mrf.mxu0
        %v2961 = vadd.f32 %v2848, %v2960
        %2962 = vdwg.mxu0
        %2963 = vmatprep.subr.bf16.mxu0 %v2271
        %2964 = vmatpush1.bf16.msra.mxu0 %v2270
        %2965 = vmatprep.subr.bf16.mxu0 %v2267
        %2966 = vmatpush1.bf16.msra.mxu0 %v2266
        %2967 = vmatprep.subr.bf16.mxu0 %v2263
        %2968 = vmatpush1.bf16.msra.mxu0 %v2262
        %2969 = vmatprep.subr.bf16.mxu0 %v2259
        %2970 = vmatpush1.bf16.msra.mxu0 %v2258
        %2971 = vmatprep.subr.bf16.mxu0 %v2255
        %2972 = vmatpush1.bf16.msra.mxu0 %v2254
        %2973 = vmatprep.subr.bf16.mxu0 %v2251
        %2974 = vmatpush1.bf16.msra.mxu0 %v2250
        %2975 = vmatprep.subr.bf16.mxu0 %v2247
        %2976 = vmatpush1.bf16.msra.mxu0 %v2246
        %2977 = vmatprep.subr.bf16.mxu0 %v2243
        %2978 = vmatpush1.bf16.msra.mxu0 %v2242
        %2979 = vmatprep.subr.bf16.mxu0 %v2303
        %2980 = vmatpush2.bf16.msra.mxu0 %v2302
        %2981 = vmatprep.subr.bf16.mxu0 %v2299
        %2982 = vmatpush2.bf16.msra.mxu0 %v2298
        %2983 = vmatprep.subr.bf16.mxu0 %v2295
        %2984 = vmatpush2.bf16.msra.mxu0 %v2294
        %2985 = vmatprep.subr.bf16.mxu0 %v2291
        %2986 = vmatpush2.bf16.msra.mxu0 %v2290
        %2987 = vmatprep.subr.bf16.mxu0 %v2287
        %2988 = vmatpush2.bf16.msra.mxu0 %v2286
        %2989 = vmatprep.subr.bf16.mxu0 %v2283
        %2990 = vmatpush2.bf16.msra.mxu0 %v2282
        %2991 = vmatprep.subr.bf16.mxu0 %v2279
        %2992 = vmatpush2.bf16.msra.mxu0 %v2278
        %2993 = vmatprep.subr.bf16.mxu0 %v2275
        %2994 = vmatpush2.bf16.msra.mxu0 %v2274
        %2995 = vmatprep.mubr.bf16.mxu0 %v1403
        %2996 = vmatmul.mubr.bf16.gmra.mxu0 %v1402
        %v2997 = vpop.f32.mrf.mxu0
        %v2998 = vadd.f32 %v1655, %v2997
        %v2999 = vpop.f32.mrf.mxu0
        %v3000 = vadd.f32 %v1659, %v2999
        %v3001 = vpop.f32.mrf.mxu0
        %v3002 = vadd.f32 %v1655, %v3001
        %v3003 = vpop.f32.mrf.mxu0
        %v3004 = vadd.f32 %v1659, %v3003
        %3005 = vmatprep.mubr.bf16.mxu0 %v1409
        %3006 = vmatmul.mubr.bf16.gmra.mxu0 %v1408
        %v3007 = vpop.f32.mrf.mxu0
        %v3008 = vadd.f32 %v1655, %v3007
        %v3009 = vpop.f32.mrf.mxu0
        %v3010 = vadd.f32 %v1659, %v3009
        %v3011 = vpop.f32.mrf.mxu0
        %v3012 = vadd.f32 %v1655, %v3011
        %v3013 = vpop.f32.mrf.mxu0
        %v3014 = vadd.f32 %v1659, %v3013
        %3015 = vmatprep.mubr.bf16.mxu0 %v1415
        %3016 = vmatmul.mubr.bf16.gmra.mxu0 %v1414
        %v3017 = vpop.f32.mrf.mxu0
        %v3018 = vadd.f32 %v1655, %v3017
        %v3019 = vpop.f32.mrf.mxu0
        %v3020 = vadd.f32 %v1659, %v3019
        %v3021 = vpop.f32.mrf.mxu0
        %v3022 = vadd.f32 %v1655, %v3021
        %v3023 = vpop.f32.mrf.mxu0
        %v3024 = vadd.f32 %v1659, %v3023
        %3025 = vmatprep.mubr.bf16.mxu0 %v1421
        %3026 = vmatmul.mubr.bf16.gmra.mxu0 %v1420
        %v3027 = vpop.f32.mrf.mxu0
        %v3028 = vadd.f32 %v1655, %v3027
        %v3029 = vpop.f32.mrf.mxu0
        %v3030 = vadd.f32 %v1659, %v3029
        %v3031 = vpop.f32.mrf.mxu0
        %v3032 = vadd.f32 %v1655, %v3031
        %v3033 = vpop.f32.mrf.mxu0
        %v3034 = vadd.f32 %v1659, %v3033
        %3035 = vmatprep.mubr.bf16.mxu0 %v1427
        %3036 = vmatmul.mubr.bf16.gmra.mxu0 %v1426
        %v3037 = vpop.f32.mrf.mxu0
        %v3038 = vadd.f32 %v1655, %v3037
        %v3039 = vpop.f32.mrf.mxu0
        %v3040 = vadd.f32 %v1659, %v3039
        %v3041 = vpop.f32.mrf.mxu0
        %v3042 = vadd.f32 %v1655, %v3041
        %v3043 = vpop.f32.mrf.mxu0
        %v3044 = vadd.f32 %v1659, %v3043
        %3045 = vmatprep.mubr.bf16.mxu0 %v1433
        %3046 = vmatmul.mubr.bf16.gmra.mxu0 %v1432
        %v3047 = vpop.f32.mrf.mxu0
        %v3048 = vadd.f32 %v1655, %v3047
        %v3049 = vpop.f32.mrf.mxu0
        %v3050 = vadd.f32 %v1659, %v3049
        %v3051 = vpop.f32.mrf.mxu0
        %v3052 = vadd.f32 %v1655, %v3051
        %v3053 = vpop.f32.mrf.mxu0
        %v3054 = vadd.f32 %v1659, %v3053
        %3055 = vmatprep.mubr.bf16.mxu0 %v1439
        %3056 = vmatmul.mubr.bf16.gmra.mxu0 %v1438
        %v3057 = vpop.f32.mrf.mxu0
        %v3058 = vadd.f32 %v1655, %v3057
        %v3059 = vpop.f32.mrf.mxu0
        %v3060 = vadd.f32 %v1659, %v3059
        %v3061 = vpop.f32.mrf.mxu0
        %v3062 = vadd.f32 %v1655, %v3061
        %v3063 = vpop.f32.mrf.mxu0
        %v3064 = vadd.f32 %v1659, %v3063
        %3065 = vmatprep.mubr.bf16.mxu0 %v1445
        %3066 = vmatmul.mubr.bf16.gmra.mxu0 %v1444
        %v3067 = vpop.f32.mrf.mxu0
        %v3068 = vadd.f32 %v1655, %v3067
        %v3069 = vpop.f32.mrf.mxu0
        %v3070 = vadd.f32 %v1659, %v3069
        %v3071 = vpop.f32.mrf.mxu0
        %v3072 = vadd.f32 %v1655, %v3071
        %v3073 = vpop.f32.mrf.mxu0
        %v3074 = vadd.f32 %v1659, %v3073
        %3075 = vdwg.mxu0
        %3076 = vmatprep.subr.bf16.mxu0 %v2335
        %3077 = vmatpush1.bf16.msra.mxu0 %v2334
        %3078 = vmatprep.subr.bf16.mxu0 %v2331
        %3079 = vmatpush1.bf16.msra.mxu0 %v2330
        %3080 = vmatprep.subr.bf16.mxu0 %v2327
        %3081 = vmatpush1.bf16.msra.mxu0 %v2326
        %3082 = vmatprep.subr.bf16.mxu0 %v2323
        %3083 = vmatpush1.bf16.msra.mxu0 %v2322
        %3084 = vmatprep.subr.bf16.mxu0 %v2319
        %3085 = vmatpush1.bf16.msra.mxu0 %v2318
        %3086 = vmatprep.subr.bf16.mxu0 %v2315
        %3087 = vmatpush1.bf16.msra.mxu0 %v2314
        %3088 = vmatprep.subr.bf16.mxu0 %v2311
        %3089 = vmatpush1.bf16.msra.mxu0 %v2310
        %3090 = vmatprep.subr.bf16.mxu0 %v2307
        %3091 = vmatpush1.bf16.msra.mxu0 %v2306
        %3092 = vmatprep.subr.bf16.mxu0 %v2367
        %3093 = vmatpush2.bf16.msra.mxu0 %v2366
        %3094 = vmatprep.subr.bf16.mxu0 %v2363
        %3095 = vmatpush2.bf16.msra.mxu0 %v2362
        %3096 = vmatprep.subr.bf16.mxu0 %v2359
        %3097 = vmatpush2.bf16.msra.mxu0 %v2358
        %3098 = vmatprep.subr.bf16.mxu0 %v2355
        %3099 = vmatpush2.bf16.msra.mxu0 %v2354
        %3100 = vmatprep.subr.bf16.mxu0 %v2351
        %3101 = vmatpush2.bf16.msra.mxu0 %v2350
        %3102 = vmatprep.subr.bf16.mxu0 %v2347
        %3103 = vmatpush2.bf16.msra.mxu0 %v2346
        %3104 = vmatprep.subr.bf16.mxu0 %v2343
        %3105 = vmatpush2.bf16.msra.mxu0 %v2342
        %3106 = vmatprep.subr.bf16.mxu0 %v2339
        %3107 = vmatpush2.bf16.msra.mxu0 %v2338
        %3108 = vmatprep.mubr.bf16.mxu0 %v1405
        %3109 = vmatmul.mubr.bf16.gmra.mxu0 %v1404
        %v3110 = vpop.f32.mrf.mxu0
        %v3111 = vadd.f32 %v2998, %v3110
        %v3112 = vpop.f32.mrf.mxu0
        %v3113 = vadd.f32 %v3000, %v3112
        %v3114 = vpop.f32.mrf.mxu0
        %v3115 = vadd.f32 %v3002, %v3114
        %v3116 = vpop.f32.mrf.mxu0
        %v3117 = vadd.f32 %v3004, %v3116
        %3118 = vmatprep.mubr.bf16.mxu0 %v1411
        %3119 = vmatmul.mubr.bf16.gmra.mxu0 %v1410
        %v3120 = vpop.f32.mrf.mxu0
        %v3121 = vadd.f32 %v3008, %v3120
        %v3122 = vpop.f32.mrf.mxu0
        %v3123 = vadd.f32 %v3010, %v3122
        %v3124 = vpop.f32.mrf.mxu0
        %v3125 = vadd.f32 %v3012, %v3124
        %v3126 = vpop.f32.mrf.mxu0
        %v3127 = vadd.f32 %v3014, %v3126
        %3128 = vmatprep.mubr.bf16.mxu0 %v1417
        %3129 = vmatmul.mubr.bf16.gmra.mxu0 %v1416
        %v3130 = vpop.f32.mrf.mxu0
        %v3131 = vadd.f32 %v3018, %v3130
        %v3132 = vpop.f32.mrf.mxu0
        %v3133 = vadd.f32 %v3020, %v3132
        %v3134 = vpop.f32.mrf.mxu0
        %v3135 = vadd.f32 %v3022, %v3134
        %v3136 = vpop.f32.mrf.mxu0
        %v3137 = vadd.f32 %v3024, %v3136
        %3138 = vmatprep.mubr.bf16.mxu0 %v1423
        %3139 = vmatmul.mubr.bf16.gmra.mxu0 %v1422
        %v3140 = vpop.f32.mrf.mxu0
        %v3141 = vadd.f32 %v3028, %v3140
        %v3142 = vpop.f32.mrf.mxu0
        %v3143 = vadd.f32 %v3030, %v3142
        %v3144 = vpop.f32.mrf.mxu0
        %v3145 = vadd.f32 %v3032, %v3144
        %v3146 = vpop.f32.mrf.mxu0
        %v3147 = vadd.f32 %v3034, %v3146
        %3148 = vmatprep.mubr.bf16.mxu0 %v1429
        %3149 = vmatmul.mubr.bf16.gmra.mxu0 %v1428
        %v3150 = vpop.f32.mrf.mxu0
        %v3151 = vadd.f32 %v3038, %v3150
        %v3152 = vpop.f32.mrf.mxu0
        %v3153 = vadd.f32 %v3040, %v3152
        %v3154 = vpop.f32.mrf.mxu0
        %v3155 = vadd.f32 %v3042, %v3154
        %v3156 = vpop.f32.mrf.mxu0
        %v3157 = vadd.f32 %v3044, %v3156
        %3158 = vmatprep.mubr.bf16.mxu0 %v1435
        %3159 = vmatmul.mubr.bf16.gmra.mxu0 %v1434
        %v3160 = vpop.f32.mrf.mxu0
        %v3161 = vadd.f32 %v3048, %v3160
        %v3162 = vpop.f32.mrf.mxu0
        %v3163 = vadd.f32 %v3050, %v3162
        %v3164 = vpop.f32.mrf.mxu0
        %v3165 = vadd.f32 %v3052, %v3164
        %v3166 = vpop.f32.mrf.mxu0
        %v3167 = vadd.f32 %v3054, %v3166
        %3168 = vmatprep.mubr.bf16.mxu0 %v1441
        %3169 = vmatmul.mubr.bf16.gmra.mxu0 %v1440
        %v3170 = vpop.f32.mrf.mxu0
        %v3171 = vadd.f32 %v3058, %v3170
        %v3172 = vpop.f32.mrf.mxu0
        %v3173 = vadd.f32 %v3060, %v3172
        %v3174 = vpop.f32.mrf.mxu0
        %v3175 = vadd.f32 %v3062, %v3174
        %v3176 = vpop.f32.mrf.mxu0
        %v3177 = vadd.f32 %v3064, %v3176
        %3178 = vmatprep.mubr.bf16.mxu0 %v1447
        %3179 = vmatmul.mubr.bf16.gmra.mxu0 %v1446
        %v3180 = vpop.f32.mrf.mxu0
        %v3181 = vadd.f32 %v3068, %v3180
        %v3182 = vpop.f32.mrf.mxu0
        %v3183 = vadd.f32 %v3070, %v3182
        %v3184 = vpop.f32.mrf.mxu0
        %v3185 = vadd.f32 %v3072, %v3184
        %v3186 = vpop.f32.mrf.mxu0
        %v3187 = vadd.f32 %v3074, %v3186
        %3188 = vdwg.mxu0
        %3189 = vmatprep.subr.bf16.mxu0 %v2399
        %3190 = vmatpush1.bf16.msra.mxu0 %v2398
        %3191 = vmatprep.subr.bf16.mxu0 %v2395
        %3192 = vmatpush1.bf16.msra.mxu0 %v2394
        %3193 = vmatprep.subr.bf16.mxu0 %v2391
        %3194 = vmatpush1.bf16.msra.mxu0 %v2390
        %3195 = vmatprep.subr.bf16.mxu0 %v2387
        %3196 = vmatpush1.bf16.msra.mxu0 %v2386
        %3197 = vmatprep.subr.bf16.mxu0 %v2383
        %3198 = vmatpush1.bf16.msra.mxu0 %v2382
        %3199 = vmatprep.subr.bf16.mxu0 %v2379
        %3200 = vmatpush1.bf16.msra.mxu0 %v2378
        %3201 = vmatprep.subr.bf16.mxu0 %v2375
        %3202 = vmatpush1.bf16.msra.mxu0 %v2374
        %3203 = vmatprep.subr.bf16.mxu0 %v2371
        %3204 = vmatpush1.bf16.msra.mxu0 %v2370
        %3205 = vmatprep.subr.bf16.mxu0 %v2431
        %3206 = vmatpush2.bf16.msra.mxu0 %v2430
        %3207 = vmatprep.subr.bf16.mxu0 %v2427
        %3208 = vmatpush2.bf16.msra.mxu0 %v2426
        %3209 = vmatprep.subr.bf16.mxu0 %v2423
        %3210 = vmatpush2.bf16.msra.mxu0 %v2422
        %3211 = vmatprep.subr.bf16.mxu0 %v2419
        %3212 = vmatpush2.bf16.msra.mxu0 %v2418
        %3213 = vmatprep.subr.bf16.mxu0 %v2415
        %3214 = vmatpush2.bf16.msra.mxu0 %v2414
        %3215 = vmatprep.subr.bf16.mxu0 %v2411
        %3216 = vmatpush2.bf16.msra.mxu0 %v2410
        %3217 = vmatprep.subr.bf16.mxu0 %v2407
        %3218 = vmatpush2.bf16.msra.mxu0 %v2406
        %3219 = vmatprep.subr.bf16.mxu0 %v2403
        %3220 = vmatpush2.bf16.msra.mxu0 %v2402
        %3221 = vmatprep.mubr.bf16.mxu0 %v1407
        %3222 = vmatmul.mubr.bf16.gmra.mxu0 %v1406
        %v3223 = vpop.f32.mrf.mxu0
        %v3224 = vadd.f32 %v3111, %v3223
        %v3225 = vpop.f32.mrf.mxu0
        %v3226 = vadd.f32 %v3113, %v3225
        %v3227 = vpop.f32.mrf.mxu0
        %v3228 = vadd.f32 %v3115, %v3227
        %v3229 = vpop.f32.mrf.mxu0
        %v3230 = vadd.f32 %v3117, %v3229
        %3231 = vmatprep.mubr.bf16.mxu0 %v1413
        %3232 = vmatmul.mubr.bf16.gmra.mxu0 %v1412
        %v3233 = vpop.f32.mrf.mxu0
        %v3234 = vadd.f32 %v3121, %v3233
        %v3235 = vpop.f32.mrf.mxu0
        %v3236 = vadd.f32 %v3123, %v3235
        %v3237 = vpop.f32.mrf.mxu0
        %v3238 = vadd.f32 %v3125, %v3237
        %v3239 = vpop.f32.mrf.mxu0
        %v3240 = vadd.f32 %v3127, %v3239
        %3241 = vmatprep.mubr.bf16.mxu0 %v1419
        %3242 = vmatmul.mubr.bf16.gmra.mxu0 %v1418
        %v3243 = vpop.f32.mrf.mxu0
        %v3244 = vadd.f32 %v3131, %v3243
        %v3245 = vpop.f32.mrf.mxu0
        %v3246 = vadd.f32 %v3133, %v3245
        %v3247 = vpop.f32.mrf.mxu0
        %v3248 = vadd.f32 %v3135, %v3247
        %v3249 = vpop.f32.mrf.mxu0
        %v3250 = vadd.f32 %v3137, %v3249
        %3251 = vmatprep.mubr.bf16.mxu0 %v1425
        %3252 = vmatmul.mubr.bf16.gmra.mxu0 %v1424
        %v3253 = vpop.f32.mrf.mxu0
        %v3254 = vadd.f32 %v3141, %v3253
        %v3255 = vpop.f32.mrf.mxu0
        %v3256 = vadd.f32 %v3143, %v3255
        %v3257 = vpop.f32.mrf.mxu0
        %v3258 = vadd.f32 %v3145, %v3257
        %v3259 = vpop.f32.mrf.mxu0
        %v3260 = vadd.f32 %v3147, %v3259
        %3261 = vmatprep.mubr.bf16.mxu0 %v1431
        %3262 = vmatmul.mubr.bf16.gmra.mxu0 %v1430
        %v3263 = vpop.f32.mrf.mxu0
        %v3264 = vadd.f32 %v3151, %v3263
        %v3265 = vpop.f32.mrf.mxu0
        %v3266 = vadd.f32 %v3153, %v3265
        %v3267 = vpop.f32.mrf.mxu0
        %v3268 = vadd.f32 %v3155, %v3267
        %v3269 = vpop.f32.mrf.mxu0
        %v3270 = vadd.f32 %v3157, %v3269
        %3271 = vmatprep.mubr.bf16.mxu0 %v1437
        %3272 = vmatmul.mubr.bf16.gmra.mxu0 %v1436
        %v3273 = vpop.f32.mrf.mxu0
        %v3274 = vadd.f32 %v3161, %v3273
        %v3275 = vpop.f32.mrf.mxu0
        %v3276 = vadd.f32 %v3163, %v3275
        %v3277 = vpop.f32.mrf.mxu0
        %v3278 = vadd.f32 %v3165, %v3277
        %v3279 = vpop.f32.mrf.mxu0
        %v3280 = vadd.f32 %v3167, %v3279
        %3281 = vmatprep.mubr.bf16.mxu0 %v1443
        %3282 = vmatmul.mubr.bf16.gmra.mxu0 %v1442
        %v3283 = vpop.f32.mrf.mxu0
        %v3284 = vadd.f32 %v3171, %v3283
        %v3285 = vpop.f32.mrf.mxu0
        %v3286 = vadd.f32 %v3173, %v3285
        %v3287 = vpop.f32.mrf.mxu0
        %v3288 = vadd.f32 %v3175, %v3287
        %v3289 = vpop.f32.mrf.mxu0
        %v3290 = vadd.f32 %v3177, %v3289
        %3291 = vmatprep.mubr.bf16.mxu0 %v1449
        %3292 = vmatmul.mubr.bf16.gmra.mxu0 %v1448
        %v3293 = vpop.f32.mrf.mxu0
        %v3294 = vadd.f32 %v3181, %v3293
        %v3295 = vpop.f32.mrf.mxu0
        %v3296 = vadd.f32 %v3183, %v3295
        %v3297 = vpop.f32.mrf.mxu0
        %v3298 = vadd.f32 %v3185, %v3297
        %v3299 = vpop.f32.mrf.mxu0
        %v3300 = vadd.f32 %v3187, %v3299
        %3301 = vdwg.mxu0
        %v3302 = vxor.u32 %v3224, 2147483648
        %v3303 = vxor.u32 %v3226, 2147483648
        %v3304 = vxor.u32 %v3228, 2147483648
        %v3305 = vxor.u32 %v3230, 2147483648
        %v3306 = vxor.u32 %v3234, 2147483648
        %v3307 = vxor.u32 %v3236, 2147483648
        %v3308 = vxor.u32 %v3238, 2147483648
        %v3309 = vxor.u32 %v3240, 2147483648
        %v3310 = vxor.u32 %v3244, 2147483648
        %v3311 = vxor.u32 %v3246, 2147483648
        %v3312 = vxor.u32 %v3248, 2147483648
        %v3313 = vxor.u32 %v3250, 2147483648
        %v3314 = vxor.u32 %v3254, 2147483648
        %v3315 = vxor.u32 %v3256, 2147483648
        %v3316 = vxor.u32 %v3258, 2147483648
        %v3317 = vxor.u32 %v3260, 2147483648
        %v3318 = vxor.u32 %v3264, 2147483648
        %v3319 = vxor.u32 %v3266, 2147483648
        %v3320 = vxor.u32 %v3268, 2147483648
        %v3321 = vxor.u32 %v3270, 2147483648
        %v3322 = vxor.u32 %v3274, 2147483648
        %v3323 = vxor.u32 %v3276, 2147483648
        %v3324 = vxor.u32 %v3278, 2147483648
        %v3325 = vxor.u32 %v3280, 2147483648
        %v3326 = vxor.u32 %v3284, 2147483648
        %v3327 = vxor.u32 %v3286, 2147483648
        %v3328 = vxor.u32 %v3288, 2147483648
        %v3329 = vxor.u32 %v3290, 2147483648
        %v3330 = vxor.u32 %v3294, 2147483648
        %v3331 = vxor.u32 %v3296, 2147483648
        %v3332 = vxor.u32 %v3298, 2147483648
        %v3333 = vxor.u32 %v3300, 2147483648
        %v3334 = vmul.f32 %v3302, 1.442695
        %v3335 = vpow.pop %v3334
        %v3336 = vmul.f32 %v3303, 1.442695
        %v3337 = vpow.pop %v3336
        %v3338 = vmul.f32 %v3304, 1.442695
        %v3339 = vpow.pop %v3338
        %v3340 = vmul.f32 %v3305, 1.442695
        %v3341 = vpow.pop %v3340
        %v3342 = vmul.f32 %v3306, 1.442695
        %v3343 = vpow.pop %v3342
        %v3344 = vmul.f32 %v3307, 1.442695
        %v3345 = vpow.pop %v3344
        %v3346 = vmul.f32 %v3308, 1.442695
        %v3347 = vpow.pop %v3346
        %v3348 = vmul.f32 %v3309, 1.442695
        %v3349 = vpow.pop %v3348
        %v3350 = vmul.f32 %v3310, 1.442695
        %v3351 = vpow.pop %v3350
        %v3352 = vmul.f32 %v3311, 1.442695
        %v3353 = vpow.pop %v3352
        %v3354 = vmul.f32 %v3312, 1.442695
        %v3355 = vpow.pop %v3354
        %v3356 = vmul.f32 %v3313, 1.442695
        %v3357 = vpow.pop %v3356
        %v3358 = vmul.f32 %v3314, 1.442695
        %v3359 = vpow.pop %v3358
        %v3360 = vmul.f32 %v3315, 1.442695
        %v3361 = vpow.pop %v3360
        %v3362 = vmul.f32 %v3316, 1.442695
        %v3363 = vpow.pop %v3362
        %v3364 = vmul.f32 %v3317, 1.442695
        %v3365 = vpow.pop %v3364
        %v3366 = vmul.f32 %v3318, 1.442695
        %v3367 = vpow.pop %v3366
        %v3368 = vmul.f32 %v3319, 1.442695
        %v3369 = vpow.pop %v3368
        %v3370 = vmul.f32 %v3320, 1.442695
        %v3371 = vpow.pop %v3370
        %v3372 = vmul.f32 %v3321, 1.442695
        %v3373 = vpow.pop %v3372
        %v3374 = vmul.f32 %v3322, 1.442695
        %v3375 = vpow.pop %v3374
        %v3376 = vmul.f32 %v3323, 1.442695
        %v3377 = vpow.pop %v3376
        %v3378 = vmul.f32 %v3324, 1.442695
        %v3379 = vpow.pop %v3378
        %v3380 = vmul.f32 %v3325, 1.442695
        %v3381 = vpow.pop %v3380
        %v3382 = vmul.f32 %v3326, 1.442695
        %v3383 = vpow.pop %v3382
        %v3384 = vmul.f32 %v3327, 1.442695
        %v3385 = vpow.pop %v3384
        %v3386 = vmul.f32 %v3328, 1.442695
        %v3387 = vpow.pop %v3386
        %v3388 = vmul.f32 %v3329, 1.442695
        %v3389 = vpow.pop %v3388
        %v3390 = vmul.f32 %v3330, 1.442695
        %v3391 = vpow.pop %v3390
        %v3392 = vmul.f32 %v3331, 1.442695
        %v3393 = vpow.pop %v3392
        %v3394 = vmul.f32 %v3332, 1.442695
        %v3395 = vpow.pop %v3394
        %v3396 = vmul.f32 %v3333, 1.442695
        %v3397 = vpow.pop %v3396
        %v3398 = vadd.f32 %v3335, 1.0
        %v3399 = vadd.f32 %v3337, 1.0
        %v3400 = vadd.f32 %v3339, 1.0
        %v3401 = vadd.f32 %v3341, 1.0
        %v3402 = vadd.f32 %v3343, 1.0
        %v3403 = vadd.f32 %v3345, 1.0
        %v3404 = vadd.f32 %v3347, 1.0
        %v3405 = vadd.f32 %v3349, 1.0
        %v3406 = vadd.f32 %v3351, 1.0
        %v3407 = vadd.f32 %v3353, 1.0
        %v3408 = vadd.f32 %v3355, 1.0
        %v3409 = vadd.f32 %v3357, 1.0
        %v3410 = vadd.f32 %v3359, 1.0
        %v3411 = vadd.f32 %v3361, 1.0
        %v3412 = vadd.f32 %v3363, 1.0
        %v3413 = vadd.f32 %v3365, 1.0
        %v3414 = vadd.f32 %v3367, 1.0
        %v3415 = vadd.f32 %v3369, 1.0
        %v3416 = vadd.f32 %v3371, 1.0
        %v3417 = vadd.f32 %v3373, 1.0
        %v3418 = vadd.f32 %v3375, 1.0
        %v3419 = vadd.f32 %v3377, 1.0
        %v3420 = vadd.f32 %v3379, 1.0
        %v3421 = vadd.f32 %v3381, 1.0
        %v3422 = vadd.f32 %v3383, 1.0
        %v3423 = vadd.f32 %v3385, 1.0
        %v3424 = vadd.f32 %v3387, 1.0
        %v3425 = vadd.f32 %v3389, 1.0
        %v3426 = vadd.f32 %v3391, 1.0
        %v3427 = vadd.f32 %v3393, 1.0
        %v3428 = vadd.f32 %v3395, 1.0
        %v3429 = vadd.f32 %v3397, 1.0
        %v3430 = vrcp.pop %v3398
        %v3431 = vmul.f32 1.0, %v3430
        %v3432 = vrcp.pop %v3399
        %v3433 = vmul.f32 1.0, %v3432
        %v3434 = vrcp.pop %v3400
        %v3435 = vmul.f32 1.0, %v3434
        %v3436 = vrcp.pop %v3401
        %v3437 = vmul.f32 1.0, %v3436
        %v3438 = vrcp.pop %v3402
        %v3439 = vmul.f32 1.0, %v3438
        %v3440 = vrcp.pop %v3403
        %v3441 = vmul.f32 1.0, %v3440
        %v3442 = vrcp.pop %v3404
        %v3443 = vmul.f32 1.0, %v3442
        %v3444 = vrcp.pop %v3405
        %v3445 = vmul.f32 1.0, %v3444
        %v3446 = vrcp.pop %v3406
        %v3447 = vmul.f32 1.0, %v3446
        %v3448 = vrcp.pop %v3407
        %v3449 = vmul.f32 1.0, %v3448
        %v3450 = vrcp.pop %v3408
        %v3451 = vmul.f32 1.0, %v3450
        %v3452 = vrcp.pop %v3409
        %v3453 = vmul.f32 1.0, %v3452
        %v3454 = vrcp.pop %v3410
        %v3455 = vmul.f32 1.0, %v3454
        %v3456 = vrcp.pop %v3411
        %v3457 = vmul.f32 1.0, %v3456
        %v3458 = vrcp.pop %v3412
        %v3459 = vmul.f32 1.0, %v3458
        %v3460 = vrcp.pop %v3413
        %v3461 = vmul.f32 1.0, %v3460
        %v3462 = vrcp.pop %v3414
        %v3463 = vmul.f32 1.0, %v3462
        %v3464 = vrcp.pop %v3415
        %v3465 = vmul.f32 1.0, %v3464
        %v3466 = vrcp.pop %v3416
        %v3467 = vmul.f32 1.0, %v3466
        %v3468 = vrcp.pop %v3417
        %v3469 = vmul.f32 1.0, %v3468
        %v3470 = vrcp.pop %v3418
        %v3471 = vmul.f32 1.0, %v3470
        %v3472 = vrcp.pop %v3419
        %v3473 = vmul.f32 1.0, %v3472
        %v3474 = vrcp.pop %v3420
        %v3475 = vmul.f32 1.0, %v3474
        %v3476 = vrcp.pop %v3421
        %v3477 = vmul.f32 1.0, %v3476
        %v3478 = vrcp.pop %v3422
        %v3479 = vmul.f32 1.0, %v3478
        %v3480 = vrcp.pop %v3423
        %v3481 = vmul.f32 1.0, %v3480
        %v3482 = vrcp.pop %v3424
        %v3483 = vmul.f32 1.0, %v3482
        %v3484 = vrcp.pop %v3425
        %v3485 = vmul.f32 1.0, %v3484
        %v3486 = vrcp.pop %v3426
        %v3487 = vmul.f32 1.0, %v3486
        %v3488 = vrcp.pop %v3427
        %v3489 = vmul.f32 1.0, %v3488
        %v3490 = vrcp.pop %v3428
        %v3491 = vmul.f32 1.0, %v3490
        %v3492 = vrcp.pop %v3429
        %v3493 = vmul.f32 1.0, %v3492
        %v3494 = vmul.f32 %v2885, %v3431
        %v3495 = vmul.f32 %v2887, %v3433
        %v3496 = vmul.f32 %v2889, %v3435
        %v3497 = vmul.f32 %v2891, %v3437
        %v3498 = vmul.f32 %v2895, %v3439
        %v3499 = vmul.f32 %v2897, %v3441
        %v3500 = vmul.f32 %v2899, %v3443
        %v3501 = vmul.f32 %v2901, %v3445
        %v3502 = vmul.f32 %v2905, %v3447
        %v3503 = vmul.f32 %v2907, %v3449
        %v3504 = vmul.f32 %v2909, %v3451
        %v3505 = vmul.f32 %v2911, %v3453
        %v3506 = vmul.f32 %v2915, %v3455
        %v3507 = vmul.f32 %v2917, %v3457
        %v3508 = vmul.f32 %v2919, %v3459
        %v3509 = vmul.f32 %v2921, %v3461
        %v3510 = vmul.f32 %v2925, %v3463
        %v3511 = vmul.f32 %v2927, %v3465
        %v3512 = vmul.f32 %v2929, %v3467
        %v3513 = vmul.f32 %v2931, %v3469
        %v3514 = vmul.f32 %v2935, %v3471
        %v3515 = vmul.f32 %v2937, %v3473
        %v3516 = vmul.f32 %v2939, %v3475
        %v3517 = vmul.f32 %v2941, %v3477
        %v3518 = vmul.f32 %v2945, %v3479
        %v3519 = vmul.f32 %v2947, %v3481
        %v3520 = vmul.f32 %v2949, %v3483
        %v3521 = vmul.f32 %v2951, %v3485
        %v3522 = vmul.f32 %v2955, %v3487
        %v3523 = vmul.f32 %v2957, %v3489
        %v3524 = vmul.f32 %v2959, %v3491
        %v3525 = vmul.f32 %v2961, %v3493
        %v3526 = vadd.f32 %v3494, %v585
        %v3527 = vadd.f32 %v3495, %v587
        %v3528 = vadd.f32 %v3496, %v591
        %v3529 = vadd.f32 %v3497, %v593
        %v3530 = vadd.f32 %v3498, %v597
        %v3531 = vadd.f32 %v3499, %v599
        %v3532 = vadd.f32 %v3500, %v603
        %v3533 = vadd.f32 %v3501, %v605
        %v3534 = vadd.f32 %v3502, %v609
        %v3535 = vadd.f32 %v3503, %v611
        %v3536 = vadd.f32 %v3504, %v615
        %v3537 = vadd.f32 %v3505, %v617
        %v3538 = vadd.f32 %v3506, %v621
        %v3539 = vadd.f32 %v3507, %v623
        %v3540 = vadd.f32 %v3508, %v627
        %v3541 = vadd.f32 %v3509, %v629
        %v3542 = vadd.f32 %v3510, %v633
        %v3543 = vadd.f32 %v3511, %v635
        %v3544 = vadd.f32 %v3512, %v639
        %v3545 = vadd.f32 %v3513, %v641
        %v3546 = vadd.f32 %v3514, %v645
        %v3547 = vadd.f32 %v3515, %v647
        %v3548 = vadd.f32 %v3516, %v651
        %v3549 = vadd.f32 %v3517, %v653
        %v3550 = vadd.f32 %v3518, %v657
        %v3551 = vadd.f32 %v3519, %v659
        %v3552 = vadd.f32 %v3520, %v663
        %v3553 = vadd.f32 %v3521, %v665
        %v3554 = vadd.f32 %v3522, %v669
        %v3555 = vadd.f32 %v3523, %v671
        %v3556 = vadd.f32 %v3524, %v675
        %v3557 = vadd.f32 %v3525, %v677
        %v3558 = vmul.f32 %v3526, 0.70710677
        %v3559 = vmul.f32 %v3527, 0.70710677
        %v3560 = vmul.f32 %v3528, 0.70710677
        %v3561 = vmul.f32 %v3529, 0.70710677
        %v3562 = vmul.f32 %v3530, 0.70710677
        %v3563 = vmul.f32 %v3531, 0.70710677
        %v3564 = vmul.f32 %v3532, 0.70710677
        %v3565 = vmul.f32 %v3533, 0.70710677
        %v3566 = vmul.f32 %v3534, 0.70710677
        %v3567 = vmul.f32 %v3535, 0.70710677
        %v3568 = vmul.f32 %v3536, 0.70710677
        %v3569 = vmul.f32 %v3537, 0.70710677
        %v3570 = vmul.f32 %v3538, 0.70710677
        %v3571 = vmul.f32 %v3539, 0.70710677
        %v3572 = vmul.f32 %v3540, 0.70710677
        %v3573 = vmul.f32 %v3541, 0.70710677
        %v3574 = vmul.f32 %v3542, 0.70710677
        %v3575 = vmul.f32 %v3543, 0.70710677
        %v3576 = vmul.f32 %v3544, 0.70710677
        %v3577 = vmul.f32 %v3545, 0.70710677
        %v3578 = vmul.f32 %v3546, 0.70710677
        %v3579 = vmul.f32 %v3547, 0.70710677
        %v3580 = vmul.f32 %v3548, 0.70710677
        %v3581 = vmul.f32 %v3549, 0.70710677
        %v3582 = vmul.f32 %v3550, 0.70710677
        %v3583 = vmul.f32 %v3551, 0.70710677
        %v3584 = vmul.f32 %v3552, 0.70710677
        %v3585 = vmul.f32 %v3553, 0.70710677
        %v3586 = vmul.f32 %v3554, 0.70710677
        %v3587 = vmul.f32 %v3555, 0.70710677
        %v3588 = vmul.f32 %v3556, 0.70710677
        %v3589 = vmul.f32 %v3557, 0.70710677
        %3590 = vmatprep.subr.mxu0 %v3589
        %3591 = vmatpush1.msra.mxu0 %v3588
        %3592 = vmatprep.subr.mxu0 %v3587
        %3593 = vmatpush1.msra.mxu0 %v3586
        %3594 = vmatprep.subr.mxu0 %v3585
        %3595 = vmatpush1.msra.mxu0 %v3584
        %3596 = vmatprep.subr.mxu0 %v3583
        %3597 = vmatpush1.msra.mxu0 %v3582
        %3598 = vmatprep.subr.mxu0 %v3581
        %3599 = vmatpush1.msra.mxu0 %v3580
        %3600 = vmatprep.subr.mxu0 %v3579
        %3601 = vmatpush1.msra.mxu0 %v3578
        %3602 = vmatprep.subr.mxu0 %v3577
        %3603 = vmatpush1.msra.mxu0 %v3576
        %3604 = vmatprep.subr.mxu0 %v3575
        %3605 = vmatpush1.msra.mxu0 %v3574
        %3606 = vmatprep.subr.mxu0 %v3573
        %3607 = vmatpush1.msra.mxu0 %v3572
        %3608 = vmatprep.subr.mxu0 %v3571
        %3609 = vmatpush1.msra.mxu0 %v3570
        %3610 = vmatprep.subr.mxu0 %v3569
        %3611 = vmatpush1.msra.mxu0 %v3568
        %3612 = vmatprep.subr.mxu0 %v3567
        %3613 = vmatpush1.msra.mxu0 %v3566
        %3614 = vmatprep.subr.mxu0 %v3565
        %3615 = vmatpush1.msra.mxu0 %v3564
        %3616 = vmatprep.subr.mxu0 %v3563
        %3617 = vmatpush1.msra.mxu0 %v3562
        %3618 = vmatprep.subr.mxu0 %v3561
        %3619 = vmatpush1.msra.mxu0 %v3560
        %3620 = vmatprep.subr.mxu0 %v3559
        %3621 = vmatpush1.msra.mxu0 %v3558
        %3622 = vmatprep.subr.mxu0 0.0
        %3623 = vmatpush2.msra.mxu0 0.0
        %3624 = vmatprep.subr.mxu0 0.0
        %3625 = vmatpush2.msra.mxu0 0.0
        %3626 = vmatprep.subr.mxu0 0.0
        %3627 = vmatpush2.msra.mxu0 0.0
        %3628 = vmatprep.subr.mxu0 0.0
        %3629 = vmatpush2.msra.mxu0 0.0
        %3630 = vmatprep.subr.mxu0 0.0
        %3631 = vmatpush2.msra.mxu0 0.0
        %3632 = vmatprep.subr.mxu0 0.0
        %3633 = vmatpush2.msra.mxu0 0.0
        %3634 = vmatprep.subr.mxu0 0.0
        %3635 = vmatpush2.msra.mxu0 0.0
        %3636 = vmatprep.subr.mxu0 0.0
        %3637 = vmatpush2.msra.mxu0 0.0
        %3638 = vmatprep.subr.mxu0 0.0
        %3639 = vmatpush2.msra.mxu0 0.0
        %3640 = vmatprep.subr.mxu0 0.0
        %3641 = vmatpush2.msra.mxu0 0.0
        %3642 = vmatprep.subr.mxu0 0.0
        %3643 = vmatpush2.msra.mxu0 0.0
        %3644 = vmatprep.subr.mxu0 0.0
        %3645 = vmatpush2.msra.mxu0 0.0
        %3646 = vmatprep.subr.mxu0 0.0
        %3647 = vmatpush2.msra.mxu0 0.0
        %3648 = vmatprep.subr.mxu0 0.0
        %3649 = vmatpush2.msra.mxu0 0.0
        %3650 = vmatprep.subr.mxu0 0.0
        %3651 = vmatpush2.msra.mxu0 0.0
        %3652 = vmatprep.subr.mxu0 0.0
        %3653 = vmatpush2.msra.mxu0 0.0
        %3654 = vmatprep.mubr.f32.mxu0 0.0
        %3655 = vmatmul.mubr.f32.gmra.mxu0 %v1064
        %v3656 = vpop.f32.mrf.mxu0
        %v3657 = vadd.f32 0.0, %v3656
        %v3658 = vpop.f32.mrf.mxu0
        %v3659 = vadd.f32 0.0, %v3658
        %3660 = vmatprep.mubr.f32.mxu0 0.0
        %3661 = vmatmul.mubr.f32.gmra.mxu0 %v1065
        %v3662 = vpop.f32.mrf.mxu0
        %v3663 = vadd.f32 0.0, %v3662
        %v3664 = vpop.f32.mrf.mxu0
        %v3665 = vadd.f32 0.0, %v3664
        %3666 = vmatprep.mubr.f32.mxu0 0.0
        %3667 = vmatmul.mubr.f32.gmra.mxu0 %v1066
        %v3668 = vpop.f32.mrf.mxu0
        %v3669 = vadd.f32 0.0, %v3668
        %v3670 = vpop.f32.mrf.mxu0
        %v3671 = vadd.f32 0.0, %v3670
        %3672 = vmatprep.mubr.f32.mxu0 0.0
        %3673 = vmatmul.mubr.f32.gmra.mxu0 %v1067
        %v3674 = vpop.f32.mrf.mxu0
        %v3675 = vadd.f32 0.0, %v3674
        %v3676 = vpop.f32.mrf.mxu0
        %v3677 = vadd.f32 0.0, %v3676
        %3678 = vmatprep.mubr.f32.mxu0 0.0
        %3679 = vmatmul.mubr.f32.gmra.mxu0 %v1068
        %v3680 = vpop.f32.mrf.mxu0
        %v3681 = vadd.f32 0.0, %v3680
        %v3682 = vpop.f32.mrf.mxu0
        %v3683 = vadd.f32 0.0, %v3682
        %3684 = vmatprep.mubr.f32.mxu0 0.0
        %3685 = vmatmul.mubr.f32.gmra.mxu0 %v1069
        %v3686 = vpop.f32.mrf.mxu0
        %v3687 = vadd.f32 0.0, %v3686
        %v3688 = vpop.f32.mrf.mxu0
        %v3689 = vadd.f32 0.0, %v3688
        %3690 = vmatprep.mubr.f32.mxu0 0.0
        %3691 = vmatmul.mubr.f32.gmra.mxu0 %v1070
        %v3692 = vpop.f32.mrf.mxu0
        %v3693 = vadd.f32 0.0, %v3692
        %v3694 = vpop.f32.mrf.mxu0
        %v3695 = vadd.f32 0.0, %v3694
        %3696 = vmatprep.mubr.f32.mxu0 0.0
        %3697 = vmatmul.mubr.f32.gmra.mxu0 %v1071
        %v3698 = vpop.f32.mrf.mxu0
        %v3699 = vadd.f32 0.0, %v3698
        %v3700 = vpop.f32.mrf.mxu0
        %v3701 = vadd.f32 0.0, %v3700
        %3702 = vmatprep.mubr.f32.mxu0 0.0
        %3703 = vmatmul.mubr.f32.gmra.mxu0 %v1072
        %v3704 = vpop.f32.mrf.mxu0
        %v3705 = vadd.f32 0.0, %v3704
        %v3706 = vpop.f32.mrf.mxu0
        %v3707 = vadd.f32 0.0, %v3706
        %3708 = vmatprep.mubr.f32.mxu0 0.0
        %3709 = vmatmul.mubr.f32.gmra.mxu0 %v1073
        %v3710 = vpop.f32.mrf.mxu0
        %v3711 = vadd.f32 0.0, %v3710
        %v3712 = vpop.f32.mrf.mxu0
        %v3713 = vadd.f32 0.0, %v3712
        %3714 = vmatprep.mubr.f32.mxu0 0.0
        %3715 = vmatmul.mubr.f32.gmra.mxu0 %v1074
        %v3716 = vpop.f32.mrf.mxu0
        %v3717 = vadd.f32 0.0, %v3716
        %v3718 = vpop.f32.mrf.mxu0
        %v3719 = vadd.f32 0.0, %v3718
        %3720 = vmatprep.mubr.f32.mxu0 0.0
        %3721 = vmatmul.mubr.f32.gmra.mxu0 %v1075
        %v3722 = vpop.f32.mrf.mxu0
        %v3723 = vadd.f32 0.0, %v3722
        %v3724 = vpop.f32.mrf.mxu0
        %v3725 = vadd.f32 0.0, %v3724
        %3726 = vmatprep.mubr.f32.mxu0 0.0
        %3727 = vmatmul.mubr.f32.gmra.mxu0 %v1076
        %v3728 = vpop.f32.mrf.mxu0
        %v3729 = vadd.f32 0.0, %v3728
        %v3730 = vpop.f32.mrf.mxu0
        %v3731 = vadd.f32 0.0, %v3730
        %3732 = vmatprep.mubr.f32.mxu0 0.0
        %3733 = vmatmul.mubr.f32.gmra.mxu0 %v1077
        %v3734 = vpop.f32.mrf.mxu0
        %v3735 = vadd.f32 0.0, %v3734
        %v3736 = vpop.f32.mrf.mxu0
        %v3737 = vadd.f32 0.0, %v3736
        %3738 = vmatprep.mubr.f32.mxu0 0.0
        %3739 = vmatmul.mubr.f32.gmra.mxu0 %v1078
        %v3740 = vpop.f32.mrf.mxu0
        %v3741 = vadd.f32 0.0, %v3740
        %v3742 = vpop.f32.mrf.mxu0
        %v3743 = vadd.f32 0.0, %v3742
        %3744 = vmatprep.mubr.f32.mxu0 0.0
        %3745 = vmatmul.mubr.f32.gmra.mxu0 %v1079
        %v3746 = vpop.f32.mrf.mxu0
        %v3747 = vadd.f32 0.0, %v3746
        %v3748 = vpop.f32.mrf.mxu0
        %v3749 = vadd.f32 0.0, %v3748
        %3750 = vdwg.mxu0
        %3751 = vmatprep.subr.mxu0 %v3589
        %3752 = vmatpush1.msra.mxu0 %v3588
        %3753 = vmatprep.subr.mxu0 %v3587
        %3754 = vmatpush1.msra.mxu0 %v3586
        %3755 = vmatprep.subr.mxu0 %v3585
        %3756 = vmatpush1.msra.mxu0 %v3584
        %3757 = vmatprep.subr.mxu0 %v3583
        %3758 = vmatpush1.msra.mxu0 %v3582
        %3759 = vmatprep.subr.mxu0 %v3581
        %3760 = vmatpush1.msra.mxu0 %v3580
        %3761 = vmatprep.subr.mxu0 %v3579
        %3762 = vmatpush1.msra.mxu0 %v3578
        %3763 = vmatprep.subr.mxu0 %v3577
        %3764 = vmatpush1.msra.mxu0 %v3576
        %3765 = vmatprep.subr.mxu0 %v3575
        %3766 = vmatpush1.msra.mxu0 %v3574
        %3767 = vmatprep.subr.mxu0 %v3573
        %3768 = vmatpush1.msra.mxu0 %v3572
        %3769 = vmatprep.subr.mxu0 %v3571
        %3770 = vmatpush1.msra.mxu0 %v3570
        %3771 = vmatprep.subr.mxu0 %v3569
        %3772 = vmatpush1.msra.mxu0 %v3568
        %3773 = vmatprep.subr.mxu0 %v3567
        %3774 = vmatpush1.msra.mxu0 %v3566
        %3775 = vmatprep.subr.mxu0 %v3565
        %3776 = vmatpush1.msra.mxu0 %v3564
        %3777 = vmatprep.subr.mxu0 %v3563
        %3778 = vmatpush1.msra.mxu0 %v3562
        %3779 = vmatprep.subr.mxu0 %v3561
        %3780 = vmatpush1.msra.mxu0 %v3560
        %3781 = vmatprep.subr.mxu0 %v3559
        %3782 = vmatpush1.msra.mxu0 %v3558
        %3783 = vmatprep.subr.mxu0 0.0
        %3784 = vmatpush2.msra.mxu0 0.0
        %3785 = vmatprep.subr.mxu0 0.0
        %3786 = vmatpush2.msra.mxu0 0.0
        %3787 = vmatprep.subr.mxu0 0.0
        %3788 = vmatpush2.msra.mxu0 0.0
        %3789 = vmatprep.subr.mxu0 0.0
        %3790 = vmatpush2.msra.mxu0 0.0
        %3791 = vmatprep.subr.mxu0 0.0
        %3792 = vmatpush2.msra.mxu0 0.0
        %3793 = vmatprep.subr.mxu0 0.0
        %3794 = vmatpush2.msra.mxu0 0.0
        %3795 = vmatprep.subr.mxu0 0.0
        %3796 = vmatpush2.msra.mxu0 0.0
        %3797 = vmatprep.subr.mxu0 0.0
        %3798 = vmatpush2.msra.mxu0 0.0
        %3799 = vmatprep.subr.mxu0 0.0
        %3800 = vmatpush2.msra.mxu0 0.0
        %3801 = vmatprep.subr.mxu0 0.0
        %3802 = vmatpush2.msra.mxu0 0.0
        %3803 = vmatprep.subr.mxu0 0.0
        %3804 = vmatpush2.msra.mxu0 0.0
        %3805 = vmatprep.subr.mxu0 0.0
        %3806 = vmatpush2.msra.mxu0 0.0
        %3807 = vmatprep.subr.mxu0 0.0
        %3808 = vmatpush2.msra.mxu0 0.0
        %3809 = vmatprep.subr.mxu0 0.0
        %3810 = vmatpush2.msra.mxu0 0.0
        %3811 = vmatprep.subr.mxu0 0.0
        %3812 = vmatpush2.msra.mxu0 0.0
        %3813 = vmatprep.subr.mxu0 0.0
        %3814 = vmatpush2.msra.mxu0 0.0
        %3815 = vmatprep.mubr.f32.mxu0 0.0
        %3816 = vmatmul.mubr.f32.gmra.mxu0 %v968
        %v3817 = vpop.f32.mrf.mxu0
        %v3818 = vadd.f32 0.0, %v3817
        %v3819 = vpop.f32.mrf.mxu0
        %v3820 = vadd.f32 0.0, %v3819
        %3821 = vmatprep.mubr.f32.mxu0 0.0
        %3822 = vmatmul.mubr.f32.gmra.mxu0 %v969
        %v3823 = vpop.f32.mrf.mxu0
        %v3824 = vadd.f32 0.0, %v3823
        %v3825 = vpop.f32.mrf.mxu0
        %v3826 = vadd.f32 0.0, %v3825
        %3827 = vmatprep.mubr.f32.mxu0 0.0
        %3828 = vmatmul.mubr.f32.gmra.mxu0 %v970
        %v3829 = vpop.f32.mrf.mxu0
        %v3830 = vadd.f32 0.0, %v3829
        %v3831 = vpop.f32.mrf.mxu0
        %v3832 = vadd.f32 0.0, %v3831
        %3833 = vmatprep.mubr.f32.mxu0 0.0
        %3834 = vmatmul.mubr.f32.gmra.mxu0 %v971
        %v3835 = vpop.f32.mrf.mxu0
        %v3836 = vadd.f32 0.0, %v3835
        %v3837 = vpop.f32.mrf.mxu0
        %v3838 = vadd.f32 0.0, %v3837
        %3839 = vmatprep.mubr.f32.mxu0 0.0
        %3840 = vmatmul.mubr.f32.gmra.mxu0 %v972
        %v3841 = vpop.f32.mrf.mxu0
        %v3842 = vadd.f32 0.0, %v3841
        %v3843 = vpop.f32.mrf.mxu0
        %v3844 = vadd.f32 0.0, %v3843
        %3845 = vmatprep.mubr.f32.mxu0 0.0
        %3846 = vmatmul.mubr.f32.gmra.mxu0 %v973
        %v3847 = vpop.f32.mrf.mxu0
        %v3848 = vadd.f32 0.0, %v3847
        %v3849 = vpop.f32.mrf.mxu0
        %v3850 = vadd.f32 0.0, %v3849
        %3851 = vmatprep.mubr.f32.mxu0 0.0
        %3852 = vmatmul.mubr.f32.gmra.mxu0 %v974
        %v3853 = vpop.f32.mrf.mxu0
        %v3854 = vadd.f32 0.0, %v3853
        %v3855 = vpop.f32.mrf.mxu0
        %v3856 = vadd.f32 0.0, %v3855
        %3857 = vmatprep.mubr.f32.mxu0 0.0
        %3858 = vmatmul.mubr.f32.gmra.mxu0 %v975
        %v3859 = vpop.f32.mrf.mxu0
        %v3860 = vadd.f32 0.0, %v3859
        %v3861 = vpop.f32.mrf.mxu0
        %v3862 = vadd.f32 0.0, %v3861
        %3863 = vmatprep.mubr.f32.mxu0 0.0
        %3864 = vmatmul.mubr.f32.gmra.mxu0 %v976
        %v3865 = vpop.f32.mrf.mxu0
        %v3866 = vadd.f32 0.0, %v3865
        %v3867 = vpop.f32.mrf.mxu0
        %v3868 = vadd.f32 0.0, %v3867
        %3869 = vmatprep.mubr.f32.mxu0 0.0
        %3870 = vmatmul.mubr.f32.gmra.mxu0 %v977
        %v3871 = vpop.f32.mrf.mxu0
        %v3872 = vadd.f32 0.0, %v3871
        %v3873 = vpop.f32.mrf.mxu0
        %v3874 = vadd.f32 0.0, %v3873
        %3875 = vmatprep.mubr.f32.mxu0 0.0
        %3876 = vmatmul.mubr.f32.gmra.mxu0 %v978
        %v3877 = vpop.f32.mrf.mxu0
        %v3878 = vadd.f32 0.0, %v3877
        %v3879 = vpop.f32.mrf.mxu0
        %v3880 = vadd.f32 0.0, %v3879
        %3881 = vmatprep.mubr.f32.mxu0 0.0
        %3882 = vmatmul.mubr.f32.gmra.mxu0 %v979
        %v3883 = vpop.f32.mrf.mxu0
        %v3884 = vadd.f32 0.0, %v3883
        %v3885 = vpop.f32.mrf.mxu0
        %v3886 = vadd.f32 0.0, %v3885
        %3887 = vmatprep.mubr.f32.mxu0 0.0
        %3888 = vmatmul.mubr.f32.gmra.mxu0 %v980
        %v3889 = vpop.f32.mrf.mxu0
        %v3890 = vadd.f32 0.0, %v3889
        %v3891 = vpop.f32.mrf.mxu0
        %v3892 = vadd.f32 0.0, %v3891
        %3893 = vmatprep.mubr.f32.mxu0 0.0
        %3894 = vmatmul.mubr.f32.gmra.mxu0 %v981
        %v3895 = vpop.f32.mrf.mxu0
        %v3896 = vadd.f32 0.0, %v3895
        %v3897 = vpop.f32.mrf.mxu0
        %v3898 = vadd.f32 0.0, %v3897
        %3899 = vmatprep.mubr.f32.mxu0 0.0
        %3900 = vmatmul.mubr.f32.gmra.mxu0 %v982
        %v3901 = vpop.f32.mrf.mxu0
        %v3902 = vadd.f32 0.0, %v3901
        %v3903 = vpop.f32.mrf.mxu0
        %v3904 = vadd.f32 0.0, %v3903
        %3905 = vmatprep.mubr.f32.mxu0 0.0
        %3906 = vmatmul.mubr.f32.gmra.mxu0 %v983
        %v3907 = vpop.f32.mrf.mxu0
        %v3908 = vadd.f32 0.0, %v3907
        %v3909 = vpop.f32.mrf.mxu0
        %v3910 = vadd.f32 0.0, %v3909
        %3911 = vdwg.mxu0
        %v3912 = vpack.c.bf16 %v3663, %v3657
        %v3913 = vpack.c.bf16 %v3665, %v3659
        %v3914 = vpack.c.bf16 %v3824, %v3818
        %v3915 = vpack.c.bf16 %v3826, %v3820
        %v3916 = vpack.c.bf16 %v3560, %v3558
        %v3917 = vpack.c.bf16 %v3561, %v3559
        %v3918 = vpack.c.bf16 %v3675, %v3669
        %v3919 = vpack.c.bf16 %v3677, %v3671
        %v3920 = vpack.c.bf16 %v3836, %v3830
        %v3921 = vpack.c.bf16 %v3838, %v3832
        %v3922 = vpack.c.bf16 %v3564, %v3562
        %v3923 = vpack.c.bf16 %v3565, %v3563
        %v3924 = vpack.c.bf16 %v3687, %v3681
        %v3925 = vpack.c.bf16 %v3689, %v3683
        %v3926 = vpack.c.bf16 %v3848, %v3842
        %v3927 = vpack.c.bf16 %v3850, %v3844
        %v3928 = vpack.c.bf16 %v3568, %v3566
        %v3929 = vpack.c.bf16 %v3569, %v3567
        %v3930 = vpack.c.bf16 %v3699, %v3693
        %v3931 = vpack.c.bf16 %v3701, %v3695
        %v3932 = vpack.c.bf16 %v3860, %v3854
        %v3933 = vpack.c.bf16 %v3862, %v3856
        %v3934 = vpack.c.bf16 %v3572, %v3570
        %v3935 = vpack.c.bf16 %v3573, %v3571
        %v3936 = vpack.c.bf16 %v3711, %v3705
        %v3937 = vpack.c.bf16 %v3713, %v3707
        %v3938 = vpack.c.bf16 %v3872, %v3866
        %v3939 = vpack.c.bf16 %v3874, %v3868
        %v3940 = vpack.c.bf16 %v3576, %v3574
        %v3941 = vpack.c.bf16 %v3577, %v3575
        %v3942 = vpack.c.bf16 %v3723, %v3717
        %v3943 = vpack.c.bf16 %v3725, %v3719
        %v3944 = vpack.c.bf16 %v3884, %v3878
        %v3945 = vpack.c.bf16 %v3886, %v3880
        %v3946 = vpack.c.bf16 %v3580, %v3578
        %v3947 = vpack.c.bf16 %v3581, %v3579
        %v3948 = vpack.c.bf16 %v3735, %v3729
        %v3949 = vpack.c.bf16 %v3737, %v3731
        %v3950 = vpack.c.bf16 %v3896, %v3890
        %v3951 = vpack.c.bf16 %v3898, %v3892
        %v3952 = vpack.c.bf16 %v3584, %v3582
        %v3953 = vpack.c.bf16 %v3585, %v3583
        %v3954 = vpack.c.bf16 %v3747, %v3741
        %v3955 = vpack.c.bf16 %v3749, %v3743
        %v3956 = vpack.c.bf16 %v3908, %v3902
        %v3957 = vpack.c.bf16 %v3910, %v3904
        %v3958 = vpack.c.bf16 %v3588, %v3586
        %v3959 = vpack.c.bf16 %v3589, %v3587
        %v3960 = vld [vmem:[#allocation7] sm:$0xff]
        %v3961 = vld [vmem:[#allocation7 + $0x8] sm:$0xff]
        %v3962 = vld [vmem:[#allocation7 + $0x10] sm:$0xff]
        %v3963 = vld [vmem:[#allocation7 + $0x18] sm:$0xff]
        %v3964 = vld [vmem:[#allocation7 + $0x20] sm:$0xff]
        %v3965 = vld [vmem:[#allocation7 + $0x28] sm:$0xff]
        %v3966 = vld [vmem:[#allocation7 + $0x30] sm:$0xff]
        %v3967 = vld [vmem:[#allocation7 + $0x38] sm:$0xff]
        %v3968 = vld [vmem:[#allocation7 + $0x40] sm:$0xff]
        %v3969 = vld [vmem:[#allocation7 + $0x48] sm:$0xff]
        %v3970 = vld [vmem:[#allocation7 + $0x50] sm:$0xff]
        %v3971 = vld [vmem:[#allocation7 + $0x58] sm:$0xff]
        %v3972 = vld [vmem:[#allocation7 + $0x60] sm:$0xff]
        %v3973 = vld [vmem:[#allocation7 + $0x68] sm:$0xff]
        %v3974 = vld [vmem:[#allocation7 + $0x70] sm:$0xff]
        %v3975 = vld [vmem:[#allocation7 + $0x78] sm:$0xff]
        %v3976 = vld [vmem:[#allocation7 + $0x80] sm:$0xff]
        %v3977 = vld [vmem:[#allocation7 + $0x88] sm:$0xff]
        %v3978 = vld [vmem:[#allocation7 + $0x90] sm:$0xff]
        %v3979 = vld [vmem:[#allocation7 + $0x98] sm:$0xff]
        %v3980 = vld [vmem:[#allocation7 + $0xa0] sm:$0xff]
        %v3981 = vld [vmem:[#allocation7 + $0xa8] sm:$0xff]
        %v3982 = vld [vmem:[#allocation7 + $0xb0] sm:$0xff]
        %v3983 = vld [vmem:[#allocation7 + $0xb8] sm:$0xff]
        %v3984 = vld [vmem:[#allocation7 + $0xc0] sm:$0xff]
        %v3985 = vld [vmem:[#allocation7 + $0xc8] sm:$0xff]
        %v3986 = vld [vmem:[#allocation7 + $0xd0] sm:$0xff]
        %v3987 = vld [vmem:[#allocation7 + $0xd8] sm:$0xff]
        %v3988 = vld [vmem:[#allocation7 + $0xe0] sm:$0xff]
        %v3989 = vld [vmem:[#allocation7 + $0xe8] sm:$0xff]
        %v3990 = vld [vmem:[#allocation7 + $0xf0] sm:$0xff]
        %v3991 = vld [vmem:[#allocation7 + $0xf8] sm:$0xff]
        %v3992 = vld [vmem:[#allocation7 + $0x100] sm:$0xff]
        %v3993 = vld [vmem:[#allocation7 + $0x108] sm:$0xff]
        %v3994 = vld [vmem:[#allocation7 + $0x110] sm:$0xff]
        %v3995 = vld [vmem:[#allocation7 + $0x118] sm:$0xff]
        %v3996 = vld [vmem:[#allocation7 + $0x120] sm:$0xff]
        %v3997 = vld [vmem:[#allocation7 + $0x128] sm:$0xff]
        %v3998 = vld [vmem:[#allocation7 + $0x130] sm:$0xff]
        %v3999 = vld [vmem:[#allocation7 + $0x138] sm:$0xff]
        %v4000 = vld [vmem:[#allocation7 + $0x140] sm:$0xff]
        %v4001 = vld [vmem:[#allocation7 + $0x148] sm:$0xff]
        %v4002 = vld [vmem:[#allocation7 + $0x150] sm:$0xff]
        %v4003 = vld [vmem:[#allocation7 + $0x158] sm:$0xff]
        %v4004 = vld [vmem:[#allocation7 + $0x160] sm:$0xff]
        %v4005 = vld [vmem:[#allocation7 + $0x168] sm:$0xff]
        %v4006 = vld [vmem:[#allocation7 + $0x170] sm:$0xff]
        %v4007 = vld [vmem:[#allocation7 + $0x178] sm:$0xff]
        %v4008 = vld [vmem:[#allocation7 + $0x180] sm:$0xff]
        %v4009 = vld [vmem:[#allocation7 + $0x188] sm:$0xff]
        %v4010 = vld [vmem:[#allocation7 + $0x190] sm:$0xff]
        %v4011 = vld [vmem:[#allocation7 + $0x198] sm:$0xff]
        %v4012 = vld [vmem:[#allocation7 + $0x1a0] sm:$0xff]
        %v4013 = vld [vmem:[#allocation7 + $0x1a8] sm:$0xff]
        %v4014 = vld [vmem:[#allocation7 + $0x1b0] sm:$0xff]
        %v4015 = vld [vmem:[#allocation7 + $0x1b8] sm:$0xff]
        %v4016 = vld [vmem:[#allocation7 + $0x1c0] sm:$0xff]
        %v4017 = vld [vmem:[#allocation7 + $0x1c8] sm:$0xff]
        %v4018 = vld [vmem:[#allocation7 + $0x1d0] sm:$0xff]
        %v4019 = vld [vmem:[#allocation7 + $0x1d8] sm:$0xff]
        %v4020 = vld [vmem:[#allocation7 + $0x1e0] sm:$0xff]
        %v4021 = vld [vmem:[#allocation7 + $0x1e8] sm:$0xff]
        %v4022 = vld [vmem:[#allocation7 + $0x1f0] sm:$0xff]
        %v4023 = vld [vmem:[#allocation7 + $0x1f8] sm:$0xff]
        %v4024 = vld [vmem:[#allocation7 + $0x200] sm:$0xff]
        %v4025 = vld [vmem:[#allocation7 + $0x208] sm:$0xff]
        %v4026 = vld [vmem:[#allocation7 + $0x210] sm:$0xff]
        %v4027 = vld [vmem:[#allocation7 + $0x218] sm:$0xff]
        %v4028 = vld [vmem:[#allocation7 + $0x220] sm:$0xff]
        %v4029 = vld [vmem:[#allocation7 + $0x228] sm:$0xff]
        %v4030 = vld [vmem:[#allocation7 + $0x230] sm:$0xff]
        %v4031 = vld [vmem:[#allocation7 + $0x238] sm:$0xff]
        %v4032 = vld [vmem:[#allocation7 + $0x240] sm:$0xff]
        %v4033 = vld [vmem:[#allocation7 + $0x248] sm:$0xff]
        %v4034 = vld [vmem:[#allocation7 + $0x250] sm:$0xff]
        %v4035 = vld [vmem:[#allocation7 + $0x258] sm:$0xff]
        %v4036 = vld [vmem:[#allocation7 + $0x260] sm:$0xff]
        %v4037 = vld [vmem:[#allocation7 + $0x268] sm:$0xff]
        %v4038 = vld [vmem:[#allocation7 + $0x270] sm:$0xff]
        %v4039 = vld [vmem:[#allocation7 + $0x278] sm:$0xff]
        %v4040 = vld [vmem:[#allocation7 + $0x280] sm:$0xff]
        %v4041 = vld [vmem:[#allocation7 + $0x288] sm:$0xff]
        %v4042 = vld [vmem:[#allocation7 + $0x290] sm:$0xff]
        %v4043 = vld [vmem:[#allocation7 + $0x298] sm:$0xff]
        %v4044 = vld [vmem:[#allocation7 + $0x2a0] sm:$0xff]
        %v4045 = vld [vmem:[#allocation7 + $0x2a8] sm:$0xff]
        %v4046 = vld [vmem:[#allocation7 + $0x2b0] sm:$0xff]
        %v4047 = vld [vmem:[#allocation7 + $0x2b8] sm:$0xff]
        %v4048 = vld [vmem:[#allocation7 + $0x2c0] sm:$0xff]
        %v4049 = vld [vmem:[#allocation7 + $0x2c8] sm:$0xff]
        %v4050 = vld [vmem:[#allocation7 + $0x2d0] sm:$0xff]
        %v4051 = vld [vmem:[#allocation7 + $0x2d8] sm:$0xff]
        %v4052 = vld [vmem:[#allocation7 + $0x2e0] sm:$0xff]
        %v4053 = vld [vmem:[#allocation7 + $0x2e8] sm:$0xff]
        %v4054 = vld [vmem:[#allocation7 + $0x2f0] sm:$0xff]
        %v4055 = vld [vmem:[#allocation7 + $0x2f8] sm:$0xff]
        %v4056 = vld [vmem:[#allocation7 + $0x300] sm:$0xff]
        %v4057 = vld [vmem:[#allocation7 + $0x308] sm:$0xff]
        %v4058 = vld [vmem:[#allocation7 + $0x310] sm:$0xff]
        %v4059 = vld [vmem:[#allocation7 + $0x318] sm:$0xff]
        %v4060 = vld [vmem:[#allocation7 + $0x320] sm:$0xff]
        %v4061 = vld [vmem:[#allocation7 + $0x328] sm:$0xff]
        %v4062 = vld [vmem:[#allocation7 + $0x330] sm:$0xff]
        %v4063 = vld [vmem:[#allocation7 + $0x338] sm:$0xff]
        %v4064 = vld [vmem:[#allocation7 + $0x340] sm:$0xff]
        %v4065 = vld [vmem:[#allocation7 + $0x348] sm:$0xff]
        %v4066 = vld [vmem:[#allocation7 + $0x350] sm:$0xff]
        %v4067 = vld [vmem:[#allocation7 + $0x358] sm:$0xff]
        %v4068 = vld [vmem:[#allocation7 + $0x360] sm:$0xff]
        %v4069 = vld [vmem:[#allocation7 + $0x368] sm:$0xff]
        %v4070 = vld [vmem:[#allocation7 + $0x370] sm:$0xff]
        %v4071 = vld [vmem:[#allocation7 + $0x378] sm:$0xff]
        %v4072 = vld [vmem:[#allocation7 + $0x380] sm:$0xff]
        %v4073 = vld [vmem:[#allocation7 + $0x388] sm:$0xff]
        %v4074 = vld [vmem:[#allocation7 + $0x390] sm:$0xff]
        %v4075 = vld [vmem:[#allocation7 + $0x398] sm:$0xff]
        %v4076 = vld [vmem:[#allocation7 + $0x3a0] sm:$0xff]
        %v4077 = vld [vmem:[#allocation7 + $0x3a8] sm:$0xff]
        %v4078 = vld [vmem:[#allocation7 + $0x3b0] sm:$0xff]
        %v4079 = vld [vmem:[#allocation7 + $0x3b8] sm:$0xff]
        %v4080 = vld [vmem:[#allocation7 + $0x3c0] sm:$0xff]
        %v4081 = vld [vmem:[#allocation7 + $0x3c8] sm:$0xff]
        %v4082 = vld [vmem:[#allocation7 + $0x3d0] sm:$0xff]
        %v4083 = vld [vmem:[#allocation7 + $0x3d8] sm:$0xff]
        %v4084 = vld [vmem:[#allocation7 + $0x3e0] sm:$0xff]
        %v4085 = vld [vmem:[#allocation7 + $0x3e8] sm:$0xff]
        %v4086 = vld [vmem:[#allocation7 + $0x3f0] sm:$0xff]
        %v4087 = vld [vmem:[#allocation7 + $0x3f8] sm:$0xff]
        %v4088 = vld [vmem:[#allocation7 + $0x400] sm:$0xff]
        %v4089 = vld [vmem:[#allocation7 + $0x408] sm:$0xff]
        %v4090 = vld [vmem:[#allocation7 + $0x410] sm:$0xff]
        %v4091 = vld [vmem:[#allocation7 + $0x418] sm:$0xff]
        %v4092 = vld [vmem:[#allocation7 + $0x420] sm:$0xff]
        %v4093 = vld [vmem:[#allocation7 + $0x428] sm:$0xff]
        %v4094 = vld [vmem:[#allocation7 + $0x430] sm:$0xff]
        %v4095 = vld [vmem:[#allocation7 + $0x438] sm:$0xff]
        %v4096 = vld [vmem:[#allocation7 + $0x440] sm:$0xff]
        %v4097 = vld [vmem:[#allocation7 + $0x448] sm:$0xff]
        %v4098 = vld [vmem:[#allocation7 + $0x450] sm:$0xff]
        %v4099 = vld [vmem:[#allocation7 + $0x458] sm:$0xff]
        %v4100 = vld [vmem:[#allocation7 + $0x460] sm:$0xff]
        %v4101 = vld [vmem:[#allocation7 + $0x468] sm:$0xff]
        %v4102 = vld [vmem:[#allocation7 + $0x470] sm:$0xff]
        %v4103 = vld [vmem:[#allocation7 + $0x478] sm:$0xff]
        %v4104 = vld [vmem:[#allocation7 + $0x480] sm:$0xff]
        %v4105 = vld [vmem:[#allocation7 + $0x488] sm:$0xff]
        %v4106 = vld [vmem:[#allocation7 + $0x490] sm:$0xff]
        %v4107 = vld [vmem:[#allocation7 + $0x498] sm:$0xff]
        %v4108 = vld [vmem:[#allocation7 + $0x4a0] sm:$0xff]
        %v4109 = vld [vmem:[#allocation7 + $0x4a8] sm:$0xff]
        %v4110 = vld [vmem:[#allocation7 + $0x4b0] sm:$0xff]
        %v4111 = vld [vmem:[#allocation7 + $0x4b8] sm:$0xff]
        %v4112 = vld [vmem:[#allocation7 + $0x4c0] sm:$0xff]
        %v4113 = vld [vmem:[#allocation7 + $0x4c8] sm:$0xff]
        %v4114 = vld [vmem:[#allocation7 + $0x4d0] sm:$0xff]
        %v4115 = vld [vmem:[#allocation7 + $0x4d8] sm:$0xff]
        %v4116 = vld [vmem:[#allocation7 + $0x4e0] sm:$0xff]
        %v4117 = vld [vmem:[#allocation7 + $0x4e8] sm:$0xff]
        %v4118 = vld [vmem:[#allocation7 + $0x4f0] sm:$0xff]
        %v4119 = vld [vmem:[#allocation7 + $0x4f8] sm:$0xff]
        %v4120 = vld [vmem:[#allocation7 + $0x500] sm:$0xff]
        %v4121 = vld [vmem:[#allocation7 + $0x508] sm:$0xff]
        %v4122 = vld [vmem:[#allocation7 + $0x510] sm:$0xff]
        %v4123 = vld [vmem:[#allocation7 + $0x518] sm:$0xff]
        %v4124 = vld [vmem:[#allocation7 + $0x520] sm:$0xff]
        %v4125 = vld [vmem:[#allocation7 + $0x528] sm:$0xff]
        %v4126 = vld [vmem:[#allocation7 + $0x530] sm:$0xff]
        %v4127 = vld [vmem:[#allocation7 + $0x538] sm:$0xff]
        %v4128 = vld [vmem:[#allocation7 + $0x540] sm:$0xff]
        %v4129 = vld [vmem:[#allocation7 + $0x548] sm:$0xff]
        %v4130 = vld [vmem:[#allocation7 + $0x550] sm:$0xff]
        %v4131 = vld [vmem:[#allocation7 + $0x558] sm:$0xff]
        %v4132 = vld [vmem:[#allocation7 + $0x560] sm:$0xff]
        %v4133 = vld [vmem:[#allocation7 + $0x568] sm:$0xff]
        %v4134 = vld [vmem:[#allocation7 + $0x570] sm:$0xff]
        %v4135 = vld [vmem:[#allocation7 + $0x578] sm:$0xff]
        %v4136 = vld [vmem:[#allocation7 + $0x580] sm:$0xff]
        %v4137 = vld [vmem:[#allocation7 + $0x588] sm:$0xff]
        %v4138 = vld [vmem:[#allocation7 + $0x590] sm:$0xff]
        %v4139 = vld [vmem:[#allocation7 + $0x598] sm:$0xff]
        %v4140 = vld [vmem:[#allocation7 + $0x5a0] sm:$0xff]
        %v4141 = vld [vmem:[#allocation7 + $0x5a8] sm:$0xff]
        %v4142 = vld [vmem:[#allocation7 + $0x5b0] sm:$0xff]
        %v4143 = vld [vmem:[#allocation7 + $0x5b8] sm:$0xff]
        %v4144 = vld [vmem:[#allocation7 + $0x5c0] sm:$0xff]
        %v4145 = vld [vmem:[#allocation7 + $0x5c8] sm:$0xff]
        %v4146 = vld [vmem:[#allocation7 + $0x5d0] sm:$0xff]
        %v4147 = vld [vmem:[#allocation7 + $0x5d8] sm:$0xff]
        %v4148 = vld [vmem:[#allocation7 + $0x5e0] sm:$0xff]
        %v4149 = vld [vmem:[#allocation7 + $0x5e8] sm:$0xff]
        %v4150 = vld [vmem:[#allocation7 + $0x5f0] sm:$0xff]
        %v4151 = vld [vmem:[#allocation7 + $0x5f8] sm:$0xff]
        %v4152 = vld [vmem:[%s5] sm:$0xf]
        %v4154 = vlaneseq
        %v4155 = vshrl.u32 %v4154, 7
        %v4156 = vsub.s32 0, %v4155
        %v4157 = vrot.slane %v4152, %v4156
        %v4158 = vlaneseq
        %v4159 = vshrl.u32 %v4158, 7
        %v4160 = vsub.s32 1, %v4159
        %v4161 = vrot.slane %v4152, %v4160
        %v4162 = vlaneseq
        %v4163 = vshrl.u32 %v4162, 7
        %v4164 = vsub.s32 2, %v4163
        %v4165 = vrot.slane %v4152, %v4164
        %v4166 = vlaneseq
        %v4167 = vshrl.u32 %v4166, 7
        %v4168 = vsub.s32 3, %v4167
        %v4169 = vrot.slane %v4152, %v4168
        %v4366 = vunpack.c.l.b16 %v3960
        %v4367 = vunpack.c.h.b16 %v3960
        %v4368 = vunpack.c.l.b16 %v3961
        %v4369 = vunpack.c.h.b16 %v3961
        %v4370 = vunpack.c.l.b16 %v3962
        %v4371 = vunpack.c.h.b16 %v3962
        %v4372 = vunpack.c.l.b16 %v3963
        %v4373 = vunpack.c.h.b16 %v3963
        %v4374 = vunpack.c.l.b16 %v3964
        %v4375 = vunpack.c.h.b16 %v3964
        %v4376 = vunpack.c.l.b16 %v3965
        %v4377 = vunpack.c.h.b16 %v3965
        %v4378 = vunpack.c.l.b16 %v3966
        %v4379 = vunpack.c.h.b16 %v3966
        %v4380 = vunpack.c.l.b16 %v3967
        %v4381 = vunpack.c.h.b16 %v3967
        %v4382 = vunpack.c.l.b16 %v3968
        %v4383 = vunpack.c.h.b16 %v3968
        %v4384 = vunpack.c.l.b16 %v3969
        %v4385 = vunpack.c.h.b16 %v3969
        %v4386 = vunpack.c.l.b16 %v3970
        %v4387 = vunpack.c.h.b16 %v3970
        %v4388 = vunpack.c.l.b16 %v3971
        %v4389 = vunpack.c.h.b16 %v3971
        %v4390 = vunpack.c.l.b16 %v3972
        %v4391 = vunpack.c.h.b16 %v3972
        %v4392 = vunpack.c.l.b16 %v3973
        %v4393 = vunpack.c.h.b16 %v3973
        %v4394 = vunpack.c.l.b16 %v3974
        %v4395 = vunpack.c.h.b16 %v3974
        %v4396 = vunpack.c.l.b16 %v3975
        %v4397 = vunpack.c.h.b16 %v3975
        %v4398 = vunpack.c.l.b16 %v3976
        %v4399 = vunpack.c.h.b16 %v3976
        %v4400 = vunpack.c.l.b16 %v3977
        %v4401 = vunpack.c.h.b16 %v3977
        %v4402 = vunpack.c.l.b16 %v3978
        %v4403 = vunpack.c.h.b16 %v3978
        %v4404 = vunpack.c.l.b16 %v3979
        %v4405 = vunpack.c.h.b16 %v3979
        %v4406 = vunpack.c.l.b16 %v3980
        %v4407 = vunpack.c.h.b16 %v3980
        %v4408 = vunpack.c.l.b16 %v3981
        %v4409 = vunpack.c.h.b16 %v3981
        %v4410 = vunpack.c.l.b16 %v3982
        %v4411 = vunpack.c.h.b16 %v3982
        %v4412 = vunpack.c.l.b16 %v3983
        %v4413 = vunpack.c.h.b16 %v3983
        %v4414 = vunpack.c.l.b16 %v3984
        %v4415 = vunpack.c.h.b16 %v3984
        %v4416 = vunpack.c.l.b16 %v3985
        %v4417 = vunpack.c.h.b16 %v3985
        %v4418 = vunpack.c.l.b16 %v3986
        %v4419 = vunpack.c.h.b16 %v3986
        %v4420 = vunpack.c.l.b16 %v3987
        %v4421 = vunpack.c.h.b16 %v3987
        %v4422 = vunpack.c.l.b16 %v3988
        %v4423 = vunpack.c.h.b16 %v3988
        %v4424 = vunpack.c.l.b16 %v3989
        %v4425 = vunpack.c.h.b16 %v3989
        %v4426 = vunpack.c.l.b16 %v3990
        %v4427 = vunpack.c.h.b16 %v3990
        %v4428 = vunpack.c.l.b16 %v3991
        %v4429 = vunpack.c.h.b16 %v3991
        %v4430 = vunpack.c.l.b16 %v3992
        %v4431 = vunpack.c.h.b16 %v3992
        %v4432 = vunpack.c.l.b16 %v3993
        %v4433 = vunpack.c.h.b16 %v3993
        %v4434 = vunpack.c.l.b16 %v3994
        %v4435 = vunpack.c.h.b16 %v3994
        %v4436 = vunpack.c.l.b16 %v3995
        %v4437 = vunpack.c.h.b16 %v3995
        %v4438 = vunpack.c.l.b16 %v3996
        %v4439 = vunpack.c.h.b16 %v3996
        %v4440 = vunpack.c.l.b16 %v3997
        %v4441 = vunpack.c.h.b16 %v3997
        %v4442 = vunpack.c.l.b16 %v3998
        %v4443 = vunpack.c.h.b16 %v3998
        %v4444 = vunpack.c.l.b16 %v3999
        %v4445 = vunpack.c.h.b16 %v3999
        %v4446 = vunpack.c.l.b16 %v4000
        %v4447 = vunpack.c.h.b16 %v4000
        %v4448 = vunpack.c.l.b16 %v4001
        %v4449 = vunpack.c.h.b16 %v4001
        %v4450 = vunpack.c.l.b16 %v4002
        %v4451 = vunpack.c.h.b16 %v4002
        %v4452 = vunpack.c.l.b16 %v4003
        %v4453 = vunpack.c.h.b16 %v4003
        %v4454 = vunpack.c.l.b16 %v4004
        %v4455 = vunpack.c.h.b16 %v4004
        %v4456 = vunpack.c.l.b16 %v4005
        %v4457 = vunpack.c.h.b16 %v4005
        %v4458 = vunpack.c.l.b16 %v4006
        %v4459 = vunpack.c.h.b16 %v4006
        %v4460 = vunpack.c.l.b16 %v4007
        %v4461 = vunpack.c.h.b16 %v4007
        %v4462 = vunpack.c.l.b16 %v4008
        %v4463 = vunpack.c.h.b16 %v4008
        %v4464 = vunpack.c.l.b16 %v4009
        %v4465 = vunpack.c.h.b16 %v4009
        %v4466 = vunpack.c.l.b16 %v4010
        %v4467 = vunpack.c.h.b16 %v4010
        %v4468 = vunpack.c.l.b16 %v4011
        %v4469 = vunpack.c.h.b16 %v4011
        %v4470 = vunpack.c.l.b16 %v4012
        %v4471 = vunpack.c.h.b16 %v4012
        %v4472 = vunpack.c.l.b16 %v4013
        %v4473 = vunpack.c.h.b16 %v4013
        %v4474 = vunpack.c.l.b16 %v4014
        %v4475 = vunpack.c.h.b16 %v4014
        %v4476 = vunpack.c.l.b16 %v4015
        %v4477 = vunpack.c.h.b16 %v4015
        %v4478 = vunpack.c.l.b16 %v4016
        %v4479 = vunpack.c.h.b16 %v4016
        %v4480 = vunpack.c.l.b16 %v4017
        %v4481 = vunpack.c.h.b16 %v4017
        %v4482 = vunpack.c.l.b16 %v4018
        %v4483 = vunpack.c.h.b16 %v4018
        %v4484 = vunpack.c.l.b16 %v4019
        %v4485 = vunpack.c.h.b16 %v4019
        %v4486 = vunpack.c.l.b16 %v4020
        %v4487 = vunpack.c.h.b16 %v4020
        %v4488 = vunpack.c.l.b16 %v4021
        %v4489 = vunpack.c.h.b16 %v4021
        %v4490 = vunpack.c.l.b16 %v4022
        %v4491 = vunpack.c.h.b16 %v4022
        %v4492 = vunpack.c.l.b16 %v4023
        %v4493 = vunpack.c.h.b16 %v4023
        %v4494 = vunpack.c.l.b16 %v4024
        %v4495 = vunpack.c.h.b16 %v4024
        %v4496 = vunpack.c.l.b16 %v4025
        %v4497 = vunpack.c.h.b16 %v4025
        %v4498 = vunpack.c.l.b16 %v4026
        %v4499 = vunpack.c.h.b16 %v4026
        %v4500 = vunpack.c.l.b16 %v4027
        %v4501 = vunpack.c.h.b16 %v4027
        %v4502 = vunpack.c.l.b16 %v4028
        %v4503 = vunpack.c.h.b16 %v4028
        %v4504 = vunpack.c.l.b16 %v4029
        %v4505 = vunpack.c.h.b16 %v4029
        %v4506 = vunpack.c.l.b16 %v4030
        %v4507 = vunpack.c.h.b16 %v4030
        %v4508 = vunpack.c.l.b16 %v4031
        %v4509 = vunpack.c.h.b16 %v4031
        %v4510 = vunpack.c.l.b16 %v4032
        %v4511 = vunpack.c.h.b16 %v4032
        %v4512 = vunpack.c.l.b16 %v4033
        %v4513 = vunpack.c.h.b16 %v4033
        %v4514 = vunpack.c.l.b16 %v4034
        %v4515 = vunpack.c.h.b16 %v4034
        %v4516 = vunpack.c.l.b16 %v4035
        %v4517 = vunpack.c.h.b16 %v4035
        %v4518 = vunpack.c.l.b16 %v4036
        %v4519 = vunpack.c.h.b16 %v4036
        %v4520 = vunpack.c.l.b16 %v4037
        %v4521 = vunpack.c.h.b16 %v4037
        %v4522 = vunpack.c.l.b16 %v4038
        %v4523 = vunpack.c.h.b16 %v4038
        %v4524 = vunpack.c.l.b16 %v4039
        %v4525 = vunpack.c.h.b16 %v4039
        %v4526 = vunpack.c.l.b16 %v4040
        %v4527 = vunpack.c.h.b16 %v4040
        %v4528 = vunpack.c.l.b16 %v4041
        %v4529 = vunpack.c.h.b16 %v4041
        %v4530 = vunpack.c.l.b16 %v4042
        %v4531 = vunpack.c.h.b16 %v4042
        %v4532 = vunpack.c.l.b16 %v4043
        %v4533 = vunpack.c.h.b16 %v4043
        %v4534 = vunpack.c.l.b16 %v4044
        %v4535 = vunpack.c.h.b16 %v4044
        %v4536 = vunpack.c.l.b16 %v4045
        %v4537 = vunpack.c.h.b16 %v4045
        %v4538 = vunpack.c.l.b16 %v4046
        %v4539 = vunpack.c.h.b16 %v4046
        %v4540 = vunpack.c.l.b16 %v4047
        %v4541 = vunpack.c.h.b16 %v4047
        %v4542 = vunpack.c.l.b16 %v4048
        %v4543 = vunpack.c.h.b16 %v4048
        %v4544 = vunpack.c.l.b16 %v4049
        %v4545 = vunpack.c.h.b16 %v4049
        %v4546 = vunpack.c.l.b16 %v4050
        %v4547 = vunpack.c.h.b16 %v4050
        %v4548 = vunpack.c.l.b16 %v4051
        %v4549 = vunpack.c.h.b16 %v4051
        %v4550 = vunpack.c.l.b16 %v4052
        %v4551 = vunpack.c.h.b16 %v4052
        %v4552 = vunpack.c.l.b16 %v4053
        %v4553 = vunpack.c.h.b16 %v4053
        %v4554 = vunpack.c.l.b16 %v4054
        %v4555 = vunpack.c.h.b16 %v4054
        %v4556 = vunpack.c.l.b16 %v4055
        %v4557 = vunpack.c.h.b16 %v4055
        %v4558 = vunpack.c.l.b16 %v4056
        %v4559 = vunpack.c.h.b16 %v4056
        %v4560 = vunpack.c.l.b16 %v4057
        %v4561 = vunpack.c.h.b16 %v4057
        %v4562 = vunpack.c.l.b16 %v4058
        %v4563 = vunpack.c.h.b16 %v4058
        %v4564 = vunpack.c.l.b16 %v4059
        %v4565 = vunpack.c.h.b16 %v4059
        %v4566 = vunpack.c.l.b16 %v4060
        %v4567 = vunpack.c.h.b16 %v4060
        %v4568 = vunpack.c.l.b16 %v4061
        %v4569 = vunpack.c.h.b16 %v4061
        %v4570 = vunpack.c.l.b16 %v4062
        %v4571 = vunpack.c.h.b16 %v4062
        %v4572 = vunpack.c.l.b16 %v4063
        %v4573 = vunpack.c.h.b16 %v4063
        %v4574 = vunpack.c.l.b16 %v4064
        %v4575 = vunpack.c.h.b16 %v4064
        %v4576 = vunpack.c.l.b16 %v4065
        %v4577 = vunpack.c.h.b16 %v4065
        %v4578 = vunpack.c.l.b16 %v4066
        %v4579 = vunpack.c.h.b16 %v4066
        %v4580 = vunpack.c.l.b16 %v4067
        %v4581 = vunpack.c.h.b16 %v4067
        %v4582 = vunpack.c.l.b16 %v4068
        %v4583 = vunpack.c.h.b16 %v4068
        %v4584 = vunpack.c.l.b16 %v4069
        %v4585 = vunpack.c.h.b16 %v4069
        %v4586 = vunpack.c.l.b16 %v4070
        %v4587 = vunpack.c.h.b16 %v4070
        %v4588 = vunpack.c.l.b16 %v4071
        %v4589 = vunpack.c.h.b16 %v4071
        %v4590 = vunpack.c.l.b16 %v4072
        %v4591 = vunpack.c.h.b16 %v4072
        %v4592 = vunpack.c.l.b16 %v4073
        %v4593 = vunpack.c.h.b16 %v4073
        %v4594 = vunpack.c.l.b16 %v4074
        %v4595 = vunpack.c.h.b16 %v4074
        %v4596 = vunpack.c.l.b16 %v4075
        %v4597 = vunpack.c.h.b16 %v4075
        %v4598 = vunpack.c.l.b16 %v4076
        %v4599 = vunpack.c.h.b16 %v4076
        %v4600 = vunpack.c.l.b16 %v4077
        %v4601 = vunpack.c.h.b16 %v4077
        %v4602 = vunpack.c.l.b16 %v4078
        %v4603 = vunpack.c.h.b16 %v4078
        %v4604 = vunpack.c.l.b16 %v4079
        %v4605 = vunpack.c.h.b16 %v4079
        %v4606 = vunpack.c.l.b16 %v4080
        %v4607 = vunpack.c.h.b16 %v4080
        %v4608 = vunpack.c.l.b16 %v4081
        %v4609 = vunpack.c.h.b16 %v4081
        %v4610 = vunpack.c.l.b16 %v4082
        %v4611 = vunpack.c.h.b16 %v4082
        %v4612 = vunpack.c.l.b16 %v4083
        %v4613 = vunpack.c.h.b16 %v4083
        %v4614 = vunpack.c.l.b16 %v4084
        %v4615 = vunpack.c.h.b16 %v4084
        %v4616 = vunpack.c.l.b16 %v4085
        %v4617 = vunpack.c.h.b16 %v4085
        %v4618 = vunpack.c.l.b16 %v4086
        %v4619 = vunpack.c.h.b16 %v4086
        %v4620 = vunpack.c.l.b16 %v4087
        %v4621 = vunpack.c.h.b16 %v4087
        %v4622 = vunpack.c.l.b16 %v4088
        %v4623 = vunpack.c.h.b16 %v4088
        %v4624 = vunpack.c.l.b16 %v4089
        %v4625 = vunpack.c.h.b16 %v4089
        %v4626 = vunpack.c.l.b16 %v4090
        %v4627 = vunpack.c.h.b16 %v4090
        %v4628 = vunpack.c.l.b16 %v4091
        %v4629 = vunpack.c.h.b16 %v4091
        %v4630 = vunpack.c.l.b16 %v4092
        %v4631 = vunpack.c.h.b16 %v4092
        %v4632 = vunpack.c.l.b16 %v4093
        %v4633 = vunpack.c.h.b16 %v4093
        %v4634 = vunpack.c.l.b16 %v4094
        %v4635 = vunpack.c.h.b16 %v4094
        %v4636 = vunpack.c.l.b16 %v4095
        %v4637 = vunpack.c.h.b16 %v4095
        %v4638 = vunpack.c.l.b16 %v4096
        %v4639 = vunpack.c.h.b16 %v4096
        %v4640 = vunpack.c.l.b16 %v4097
        %v4641 = vunpack.c.h.b16 %v4097
        %v4642 = vunpack.c.l.b16 %v4098
        %v4643 = vunpack.c.h.b16 %v4098
        %v4644 = vunpack.c.l.b16 %v4099
        %v4645 = vunpack.c.h.b16 %v4099
        %v4646 = vunpack.c.l.b16 %v4100
        %v4647 = vunpack.c.h.b16 %v4100
        %v4648 = vunpack.c.l.b16 %v4101
        %v4649 = vunpack.c.h.b16 %v4101
        %v4650 = vunpack.c.l.b16 %v4102
        %v4651 = vunpack.c.h.b16 %v4102
        %v4652 = vunpack.c.l.b16 %v4103
        %v4653 = vunpack.c.h.b16 %v4103
        %v4654 = vunpack.c.l.b16 %v4104
        %v4655 = vunpack.c.h.b16 %v4104
        %v4656 = vunpack.c.l.b16 %v4105
        %v4657 = vunpack.c.h.b16 %v4105
        %v4658 = vunpack.c.l.b16 %v4106
        %v4659 = vunpack.c.h.b16 %v4106
        %v4660 = vunpack.c.l.b16 %v4107
        %v4661 = vunpack.c.h.b16 %v4107
        %v4662 = vunpack.c.l.b16 %v4108
        %v4663 = vunpack.c.h.b16 %v4108
        %v4664 = vunpack.c.l.b16 %v4109
        %v4665 = vunpack.c.h.b16 %v4109
        %v4666 = vunpack.c.l.b16 %v4110
        %v4667 = vunpack.c.h.b16 %v4110
        %v4668 = vunpack.c.l.b16 %v4111
        %v4669 = vunpack.c.h.b16 %v4111
        %v4670 = vunpack.c.l.b16 %v4112
        %v4671 = vunpack.c.h.b16 %v4112
        %v4672 = vunpack.c.l.b16 %v4113
        %v4673 = vunpack.c.h.b16 %v4113
        %v4674 = vunpack.c.l.b16 %v4114
        %v4675 = vunpack.c.h.b16 %v4114
        %v4676 = vunpack.c.l.b16 %v4115
        %v4677 = vunpack.c.h.b16 %v4115
        %v4678 = vunpack.c.l.b16 %v4116
        %v4679 = vunpack.c.h.b16 %v4116
        %v4680 = vunpack.c.l.b16 %v4117
        %v4681 = vunpack.c.h.b16 %v4117
        %v4682 = vunpack.c.l.b16 %v4118
        %v4683 = vunpack.c.h.b16 %v4118
        %v4684 = vunpack.c.l.b16 %v4119
        %v4685 = vunpack.c.h.b16 %v4119
        %v4686 = vunpack.c.l.b16 %v4120
        %v4687 = vunpack.c.h.b16 %v4120
        %v4688 = vunpack.c.l.b16 %v4121
        %v4689 = vunpack.c.h.b16 %v4121
        %v4690 = vunpack.c.l.b16 %v4122
        %v4691 = vunpack.c.h.b16 %v4122
        %v4692 = vunpack.c.l.b16 %v4123
        %v4693 = vunpack.c.h.b16 %v4123
        %v4694 = vunpack.c.l.b16 %v4124
        %v4695 = vunpack.c.h.b16 %v4124
        %v4696 = vunpack.c.l.b16 %v4125
        %v4697 = vunpack.c.h.b16 %v4125
        %v4698 = vunpack.c.l.b16 %v4126
        %v4699 = vunpack.c.h.b16 %v4126
        %v4700 = vunpack.c.l.b16 %v4127
        %v4701 = vunpack.c.h.b16 %v4127
        %v4702 = vunpack.c.l.b16 %v4128
        %v4703 = vunpack.c.h.b16 %v4128
        %v4704 = vunpack.c.l.b16 %v4129
        %v4705 = vunpack.c.h.b16 %v4129
        %v4706 = vunpack.c.l.b16 %v4130
        %v4707 = vunpack.c.h.b16 %v4130
        %v4708 = vunpack.c.l.b16 %v4131
        %v4709 = vunpack.c.h.b16 %v4131
        %v4710 = vunpack.c.l.b16 %v4132
        %v4711 = vunpack.c.h.b16 %v4132
        %v4712 = vunpack.c.l.b16 %v4133
        %v4713 = vunpack.c.h.b16 %v4133
        %v4714 = vunpack.c.l.b16 %v4134
        %v4715 = vunpack.c.h.b16 %v4134
        %v4716 = vunpack.c.l.b16 %v4135
        %v4717 = vunpack.c.h.b16 %v4135
        %v4718 = vunpack.c.l.b16 %v4136
        %v4719 = vunpack.c.h.b16 %v4136
        %v4720 = vunpack.c.l.b16 %v4137
        %v4721 = vunpack.c.h.b16 %v4137
        %v4722 = vunpack.c.l.b16 %v4138
        %v4723 = vunpack.c.h.b16 %v4138
        %v4724 = vunpack.c.l.b16 %v4139
        %v4725 = vunpack.c.h.b16 %v4139
        %v4726 = vunpack.c.l.b16 %v4140
        %v4727 = vunpack.c.h.b16 %v4140
        %v4728 = vunpack.c.l.b16 %v4141
        %v4729 = vunpack.c.h.b16 %v4141
        %v4730 = vunpack.c.l.b16 %v4142
        %v4731 = vunpack.c.h.b16 %v4142
        %v4732 = vunpack.c.l.b16 %v4143
        %v4733 = vunpack.c.h.b16 %v4143
        %v4734 = vunpack.c.l.b16 %v4144
        %v4735 = vunpack.c.h.b16 %v4144
        %v4736 = vunpack.c.l.b16 %v4145
        %v4737 = vunpack.c.h.b16 %v4145
        %v4738 = vunpack.c.l.b16 %v4146
        %v4739 = vunpack.c.h.b16 %v4146
        %v4740 = vunpack.c.l.b16 %v4147
        %v4741 = vunpack.c.h.b16 %v4147
        %v4742 = vunpack.c.l.b16 %v4148
        %v4743 = vunpack.c.h.b16 %v4148
        %v4744 = vunpack.c.l.b16 %v4149
        %v4745 = vunpack.c.h.b16 %v4149
        %v4746 = vunpack.c.l.b16 %v4150
        %v4747 = vunpack.c.h.b16 %v4150
        %v4748 = vunpack.c.l.b16 %v4151
        %v4749 = vunpack.c.h.b16 %v4151
        %v4750 = vpack.c.b16 %v4370, %v4366
        %v4751 = vpack.c.b16 %v4371, %v4367
        %v4752 = vpack.c.b16 %v4372, %v4368
        %v4753 = vpack.c.b16 %v4373, %v4369
        %v4754 = vpack.c.b16 %v4378, %v4374
        %v4755 = vpack.c.b16 %v4379, %v4375
        %v4756 = vpack.c.b16 %v4380, %v4376
        %v4757 = vpack.c.b16 %v4381, %v4377
        %v4758 = vpack.c.b16 %v4386, %v4382
        %v4759 = vpack.c.b16 %v4387, %v4383
        %v4760 = vpack.c.b16 %v4388, %v4384
        %v4761 = vpack.c.b16 %v4389, %v4385
        %v4762 = vpack.c.b16 %v4394, %v4390
        %v4763 = vpack.c.b16 %v4395, %v4391
        %v4764 = vpack.c.b16 %v4396, %v4392
        %v4765 = vpack.c.b16 %v4397, %v4393
        %v4766 = vpack.c.b16 %v4402, %v4398
        %v4767 = vpack.c.b16 %v4403, %v4399
        %v4768 = vpack.c.b16 %v4404, %v4400
        %v4769 = vpack.c.b16 %v4405, %v4401
        %v4770 = vpack.c.b16 %v4410, %v4406
        %v4771 = vpack.c.b16 %v4411, %v4407
        %v4772 = vpack.c.b16 %v4412, %v4408
        %v4773 = vpack.c.b16 %v4413, %v4409
        %v4774 = vpack.c.b16 %v4418, %v4414
        %v4775 = vpack.c.b16 %v4419, %v4415
        %v4776 = vpack.c.b16 %v4420, %v4416
        %v4777 = vpack.c.b16 %v4421, %v4417
        %v4778 = vpack.c.b16 %v4426, %v4422
        %v4779 = vpack.c.b16 %v4427, %v4423
        %v4780 = vpack.c.b16 %v4428, %v4424
        %v4781 = vpack.c.b16 %v4429, %v4425
        %v4782 = vpack.c.b16 %v4434, %v4430
        %v4783 = vpack.c.b16 %v4435, %v4431
        %v4784 = vpack.c.b16 %v4436, %v4432
        %v4785 = vpack.c.b16 %v4437, %v4433
        %v4786 = vpack.c.b16 %v4442, %v4438
        %v4787 = vpack.c.b16 %v4443, %v4439
        %v4788 = vpack.c.b16 %v4444, %v4440
        %v4789 = vpack.c.b16 %v4445, %v4441
        %v4790 = vpack.c.b16 %v4450, %v4446
        %v4791 = vpack.c.b16 %v4451, %v4447
        %v4792 = vpack.c.b16 %v4452, %v4448
        %v4793 = vpack.c.b16 %v4453, %v4449
        %v4794 = vpack.c.b16 %v4458, %v4454
        %v4795 = vpack.c.b16 %v4459, %v4455
        %v4796 = vpack.c.b16 %v4460, %v4456
        %v4797 = vpack.c.b16 %v4461, %v4457
        %v4798 = vpack.c.b16 %v4466, %v4462
        %v4799 = vpack.c.b16 %v4467, %v4463
        %v4800 = vpack.c.b16 %v4468, %v4464
        %v4801 = vpack.c.b16 %v4469, %v4465
        %v4802 = vpack.c.b16 %v4474, %v4470
        %v4803 = vpack.c.b16 %v4475, %v4471
        %v4804 = vpack.c.b16 %v4476, %v4472
        %v4805 = vpack.c.b16 %v4477, %v4473
        %v4806 = vpack.c.b16 %v4482, %v4478
        %v4807 = vpack.c.b16 %v4483, %v4479
        %v4808 = vpack.c.b16 %v4484, %v4480
        %v4809 = vpack.c.b16 %v4485, %v4481
        %v4810 = vpack.c.b16 %v4490, %v4486
        %v4811 = vpack.c.b16 %v4491, %v4487
        %v4812 = vpack.c.b16 %v4492, %v4488
        %v4813 = vpack.c.b16 %v4493, %v4489
        %v4814 = vpack.c.b16 %v4498, %v4494
        %v4815 = vpack.c.b16 %v4499, %v4495
        %v4816 = vpack.c.b16 %v4500, %v4496
        %v4817 = vpack.c.b16 %v4501, %v4497
        %v4818 = vpack.c.b16 %v4506, %v4502
        %v4819 = vpack.c.b16 %v4507, %v4503
        %v4820 = vpack.c.b16 %v4508, %v4504
        %v4821 = vpack.c.b16 %v4509, %v4505
        %v4822 = vpack.c.b16 %v4514, %v4510
        %v4823 = vpack.c.b16 %v4515, %v4511
        %v4824 = vpack.c.b16 %v4516, %v4512
        %v4825 = vpack.c.b16 %v4517, %v4513
        %v4826 = vpack.c.b16 %v4522, %v4518
        %v4827 = vpack.c.b16 %v4523, %v4519
        %v4828 = vpack.c.b16 %v4524, %v4520
        %v4829 = vpack.c.b16 %v4525, %v4521
        %v4830 = vpack.c.b16 %v4530, %v4526
        %v4831 = vpack.c.b16 %v4531, %v4527
        %v4832 = vpack.c.b16 %v4532, %v4528
        %v4833 = vpack.c.b16 %v4533, %v4529
        %v4834 = vpack.c.b16 %v4538, %v4534
        %v4835 = vpack.c.b16 %v4539, %v4535
        %v4836 = vpack.c.b16 %v4540, %v4536
        %v4837 = vpack.c.b16 %v4541, %v4537
        %v4838 = vpack.c.b16 %v4546, %v4542
        %v4839 = vpack.c.b16 %v4547, %v4543
        %v4840 = vpack.c.b16 %v4548, %v4544
        %v4841 = vpack.c.b16 %v4549, %v4545
        %v4842 = vpack.c.b16 %v4554, %v4550
        %v4843 = vpack.c.b16 %v4555, %v4551
        %v4844 = vpack.c.b16 %v4556, %v4552
        %v4845 = vpack.c.b16 %v4557, %v4553
        %v4846 = vpack.c.b16 %v4562, %v4558
        %v4847 = vpack.c.b16 %v4563, %v4559
        %v4848 = vpack.c.b16 %v4564, %v4560
        %v4849 = vpack.c.b16 %v4565, %v4561
        %v4850 = vpack.c.b16 %v4570, %v4566
        %v4851 = vpack.c.b16 %v4571, %v4567
        %v4852 = vpack.c.b16 %v4572, %v4568
        %v4853 = vpack.c.b16 %v4573, %v4569
        %v4854 = vpack.c.b16 %v4578, %v4574
        %v4855 = vpack.c.b16 %v4579, %v4575
        %v4856 = vpack.c.b16 %v4580, %v4576
        %v4857 = vpack.c.b16 %v4581, %v4577
        %v4858 = vpack.c.b16 %v4586, %v4582
        %v4859 = vpack.c.b16 %v4587, %v4583
        %v4860 = vpack.c.b16 %v4588, %v4584
        %v4861 = vpack.c.b16 %v4589, %v4585
        %v4862 = vpack.c.b16 %v4594, %v4590
        %v4863 = vpack.c.b16 %v4595, %v4591
        %v4864 = vpack.c.b16 %v4596, %v4592
        %v4865 = vpack.c.b16 %v4597, %v4593
        %v4866 = vpack.c.b16 %v4602, %v4598
        %v4867 = vpack.c.b16 %v4603, %v4599
        %v4868 = vpack.c.b16 %v4604, %v4600
        %v4869 = vpack.c.b16 %v4605, %v4601
        %v4870 = vpack.c.b16 %v4610, %v4606
        %v4871 = vpack.c.b16 %v4611, %v4607
        %v4872 = vpack.c.b16 %v4612, %v4608
        %v4873 = vpack.c.b16 %v4613, %v4609
        %v4874 = vpack.c.b16 %v4618, %v4614
        %v4875 = vpack.c.b16 %v4619, %v4615
        %v4876 = vpack.c.b16 %v4620, %v4616
        %v4877 = vpack.c.b16 %v4621, %v4617
        %v4878 = vpack.c.b16 %v4626, %v4622
        %v4879 = vpack.c.b16 %v4627, %v4623
        %v4880 = vpack.c.b16 %v4628, %v4624
        %v4881 = vpack.c.b16 %v4629, %v4625
        %v4882 = vpack.c.b16 %v4634, %v4630
        %v4883 = vpack.c.b16 %v4635, %v4631
        %v4884 = vpack.c.b16 %v4636, %v4632
        %v4885 = vpack.c.b16 %v4637, %v4633
        %v4886 = vpack.c.b16 %v4642, %v4638
        %v4887 = vpack.c.b16 %v4643, %v4639
        %v4888 = vpack.c.b16 %v4644, %v4640
        %v4889 = vpack.c.b16 %v4645, %v4641
        %v4890 = vpack.c.b16 %v4650, %v4646
        %v4891 = vpack.c.b16 %v4651, %v4647
        %v4892 = vpack.c.b16 %v4652, %v4648
        %v4893 = vpack.c.b16 %v4653, %v4649
        %v4894 = vpack.c.b16 %v4658, %v4654
        %v4895 = vpack.c.b16 %v4659, %v4655
        %v4896 = vpack.c.b16 %v4660, %v4656
        %v4897 = vpack.c.b16 %v4661, %v4657
        %v4898 = vpack.c.b16 %v4666, %v4662
        %v4899 = vpack.c.b16 %v4667, %v4663
        %v4900 = vpack.c.b16 %v4668, %v4664
        %v4901 = vpack.c.b16 %v4669, %v4665
        %v4902 = vpack.c.b16 %v4674, %v4670
        %v4903 = vpack.c.b16 %v4675, %v4671
        %v4904 = vpack.c.b16 %v4676, %v4672
        %v4905 = vpack.c.b16 %v4677, %v4673
        %v4906 = vpack.c.b16 %v4682, %v4678
        %v4907 = vpack.c.b16 %v4683, %v4679
        %v4908 = vpack.c.b16 %v4684, %v4680
        %v4909 = vpack.c.b16 %v4685, %v4681
        %v4910 = vpack.c.b16 %v4690, %v4686
        %v4911 = vpack.c.b16 %v4691, %v4687
        %v4912 = vpack.c.b16 %v4692, %v4688
        %v4913 = vpack.c.b16 %v4693, %v4689
        %v4914 = vpack.c.b16 %v4698, %v4694
        %v4915 = vpack.c.b16 %v4699, %v4695
        %v4916 = vpack.c.b16 %v4700, %v4696
        %v4917 = vpack.c.b16 %v4701, %v4697
        %v4918 = vpack.c.b16 %v4706, %v4702
        %v4919 = vpack.c.b16 %v4707, %v4703
        %v4920 = vpack.c.b16 %v4708, %v4704
        %v4921 = vpack.c.b16 %v4709, %v4705
        %v4922 = vpack.c.b16 %v4714, %v4710
        %v4923 = vpack.c.b16 %v4715, %v4711
        %v4924 = vpack.c.b16 %v4716, %v4712
        %v4925 = vpack.c.b16 %v4717, %v4713
        %v4926 = vpack.c.b16 %v4722, %v4718
        %v4927 = vpack.c.b16 %v4723, %v4719
        %v4928 = vpack.c.b16 %v4724, %v4720
        %v4929 = vpack.c.b16 %v4725, %v4721
        %v4930 = vpack.c.b16 %v4730, %v4726
        %v4931 = vpack.c.b16 %v4731, %v4727
        %v4932 = vpack.c.b16 %v4732, %v4728
        %v4933 = vpack.c.b16 %v4733, %v4729
        %v4934 = vpack.c.b16 %v4738, %v4734
        %v4935 = vpack.c.b16 %v4739, %v4735
        %v4936 = vpack.c.b16 %v4740, %v4736
        %v4937 = vpack.c.b16 %v4741, %v4737
        %v4938 = vpack.c.b16 %v4746, %v4742
        %v4939 = vpack.c.b16 %v4747, %v4743
        %v4940 = vpack.c.b16 %v4748, %v4744
        %v4941 = vpack.c.b16 %v4749, %v4745
        %5134 = vmatprep.subr.bf16.mxu0 %v4779
        %5135 = vmatpush1.bf16.msra.mxu0 %v4778
        %5136 = vmatprep.subr.bf16.mxu0 %v4775
        %5137 = vmatpush1.bf16.msra.mxu0 %v4774
        %5138 = vmatprep.subr.bf16.mxu0 %v4771
        %5139 = vmatpush1.bf16.msra.mxu0 %v4770
        %5140 = vmatprep.subr.bf16.mxu0 %v4767
        %5141 = vmatpush1.bf16.msra.mxu0 %v4766
        %5142 = vmatprep.subr.bf16.mxu0 %v4763
        %5143 = vmatpush1.bf16.msra.mxu0 %v4762
        %5144 = vmatprep.subr.bf16.mxu0 %v4759
        %5145 = vmatpush1.bf16.msra.mxu0 %v4758
        %5146 = vmatprep.subr.bf16.mxu0 %v4755
        %5147 = vmatpush1.bf16.msra.mxu0 %v4754
        %5148 = vmatprep.subr.bf16.mxu0 %v4751
        %5149 = vmatpush1.bf16.msra.mxu0 %v4750
        %5150 = vmatprep.subr.bf16.mxu0 %v4811
        %5151 = vmatpush2.bf16.msra.mxu0 %v4810
        %5152 = vmatprep.subr.bf16.mxu0 %v4807
        %5153 = vmatpush2.bf16.msra.mxu0 %v4806
        %5154 = vmatprep.subr.bf16.mxu0 %v4803
        %5155 = vmatpush2.bf16.msra.mxu0 %v4802
        %5156 = vmatprep.subr.bf16.mxu0 %v4799
        %5157 = vmatpush2.bf16.msra.mxu0 %v4798
        %5158 = vmatprep.subr.bf16.mxu0 %v4795
        %5159 = vmatpush2.bf16.msra.mxu0 %v4794
        %5160 = vmatprep.subr.bf16.mxu0 %v4791
        %5161 = vmatpush2.bf16.msra.mxu0 %v4790
        %5162 = vmatprep.subr.bf16.mxu0 %v4787
        %5163 = vmatpush2.bf16.msra.mxu0 %v4786
        %5164 = vmatprep.subr.bf16.mxu0 %v4783
        %5165 = vmatpush2.bf16.msra.mxu0 %v4782
        %5166 = vmatprep.mubr.bf16.mxu0 %v3913
        %5167 = vmatmul.mubr.bf16.gmra.mxu0 %v3912
        %v5168 = vpop.f32.mrf.mxu0
        %v5169 = vadd.f32 %v4157, %v5168
        %v5170 = vpop.f32.mrf.mxu0
        %v5171 = vadd.f32 %v4161, %v5170
        %v5172 = vpop.f32.mrf.mxu0
        %v5173 = vadd.f32 %v4157, %v5172
        %v5174 = vpop.f32.mrf.mxu0
        %v5175 = vadd.f32 %v4161, %v5174
        %5176 = vmatprep.mubr.bf16.mxu0 %v3919
        %5177 = vmatmul.mubr.bf16.gmra.mxu0 %v3918
        %v5178 = vpop.f32.mrf.mxu0
        %v5179 = vadd.f32 %v4157, %v5178
        %v5180 = vpop.f32.mrf.mxu0
        %v5181 = vadd.f32 %v4161, %v5180
        %v5182 = vpop.f32.mrf.mxu0
        %v5183 = vadd.f32 %v4157, %v5182
        %v5184 = vpop.f32.mrf.mxu0
        %v5185 = vadd.f32 %v4161, %v5184
        %5186 = vmatprep.mubr.bf16.mxu0 %v3925
        %5187 = vmatmul.mubr.bf16.gmra.mxu0 %v3924
        %v5188 = vpop.f32.mrf.mxu0
        %v5189 = vadd.f32 %v4157, %v5188
        %v5190 = vpop.f32.mrf.mxu0
        %v5191 = vadd.f32 %v4161, %v5190
        %v5192 = vpop.f32.mrf.mxu0
        %v5193 = vadd.f32 %v4157, %v5192
        %v5194 = vpop.f32.mrf.mxu0
        %v5195 = vadd.f32 %v4161, %v5194
        %5196 = vmatprep.mubr.bf16.mxu0 %v3931
        %5197 = vmatmul.mubr.bf16.gmra.mxu0 %v3930
        %v5198 = vpop.f32.mrf.mxu0
        %v5199 = vadd.f32 %v4157, %v5198
        %v5200 = vpop.f32.mrf.mxu0
        %v5201 = vadd.f32 %v4161, %v5200
        %v5202 = vpop.f32.mrf.mxu0
        %v5203 = vadd.f32 %v4157, %v5202
        %v5204 = vpop.f32.mrf.mxu0
        %v5205 = vadd.f32 %v4161, %v5204
        %5206 = vmatprep.mubr.bf16.mxu0 %v3937
        %5207 = vmatmul.mubr.bf16.gmra.mxu0 %v3936
        %v5208 = vpop.f32.mrf.mxu0
        %v5209 = vadd.f32 %v4157, %v5208
        %v5210 = vpop.f32.mrf.mxu0
        %v5211 = vadd.f32 %v4161, %v5210
        %v5212 = vpop.f32.mrf.mxu0
        %v5213 = vadd.f32 %v4157, %v5212
        %v5214 = vpop.f32.mrf.mxu0
        %v5215 = vadd.f32 %v4161, %v5214
        %5216 = vmatprep.mubr.bf16.mxu0 %v3943
        %5217 = vmatmul.mubr.bf16.gmra.mxu0 %v3942
        %v5218 = vpop.f32.mrf.mxu0
        %v5219 = vadd.f32 %v4157, %v5218
        %v5220 = vpop.f32.mrf.mxu0
        %v5221 = vadd.f32 %v4161, %v5220
        %v5222 = vpop.f32.mrf.mxu0
        %v5223 = vadd.f32 %v4157, %v5222
        %v5224 = vpop.f32.mrf.mxu0
        %v5225 = vadd.f32 %v4161, %v5224
        %5226 = vmatprep.mubr.bf16.mxu0 %v3949
        %5227 = vmatmul.mubr.bf16.gmra.mxu0 %v3948
        %v5228 = vpop.f32.mrf.mxu0
        %v5229 = vadd.f32 %v4157, %v5228
        %v5230 = vpop.f32.mrf.mxu0
        %v5231 = vadd.f32 %v4161, %v5230
        %v5232 = vpop.f32.mrf.mxu0
        %v5233 = vadd.f32 %v4157, %v5232
        %v5234 = vpop.f32.mrf.mxu0
        %v5235 = vadd.f32 %v4161, %v5234
        %5236 = vmatprep.mubr.bf16.mxu0 %v3955
        %5237 = vmatmul.mubr.bf16.gmra.mxu0 %v3954
        %v5238 = vpop.f32.mrf.mxu0
        %v5239 = vadd.f32 %v4157, %v5238
        %v5240 = vpop.f32.mrf.mxu0
        %v5241 = vadd.f32 %v4161, %v5240
        %v5242 = vpop.f32.mrf.mxu0
        %v5243 = vadd.f32 %v4157, %v5242
        %v5244 = vpop.f32.mrf.mxu0
        %v5245 = vadd.f32 %v4161, %v5244
        %5246 = vdwg.mxu0
        %5247 = vmatprep.subr.bf16.mxu0 %v4843
        %5248 = vmatpush1.bf16.msra.mxu0 %v4842
        %5249 = vmatprep.subr.bf16.mxu0 %v4839
        %5250 = vmatpush1.bf16.msra.mxu0 %v4838
        %5251 = vmatprep.subr.bf16.mxu0 %v4835
        %5252 = vmatpush1.bf16.msra.mxu0 %v4834
        %5253 = vmatprep.subr.bf16.mxu0 %v4831
        %5254 = vmatpush1.bf16.msra.mxu0 %v4830
        %5255 = vmatprep.subr.bf16.mxu0 %v4827
        %5256 = vmatpush1.bf16.msra.mxu0 %v4826
        %5257 = vmatprep.subr.bf16.mxu0 %v4823
        %5258 = vmatpush1.bf16.msra.mxu0 %v4822
        %5259 = vmatprep.subr.bf16.mxu0 %v4819
        %5260 = vmatpush1.bf16.msra.mxu0 %v4818
        %5261 = vmatprep.subr.bf16.mxu0 %v4815
        %5262 = vmatpush1.bf16.msra.mxu0 %v4814
        %5263 = vmatprep.subr.bf16.mxu0 %v4875
        %5264 = vmatpush2.bf16.msra.mxu0 %v4874
        %5265 = vmatprep.subr.bf16.mxu0 %v4871
        %5266 = vmatpush2.bf16.msra.mxu0 %v4870
        %5267 = vmatprep.subr.bf16.mxu0 %v4867
        %5268 = vmatpush2.bf16.msra.mxu0 %v4866
        %5269 = vmatprep.subr.bf16.mxu0 %v4863
        %5270 = vmatpush2.bf16.msra.mxu0 %v4862
        %5271 = vmatprep.subr.bf16.mxu0 %v4859
        %5272 = vmatpush2.bf16.msra.mxu0 %v4858
        %5273 = vmatprep.subr.bf16.mxu0 %v4855
        %5274 = vmatpush2.bf16.msra.mxu0 %v4854
        %5275 = vmatprep.subr.bf16.mxu0 %v4851
        %5276 = vmatpush2.bf16.msra.mxu0 %v4850
        %5277 = vmatprep.subr.bf16.mxu0 %v4847
        %5278 = vmatpush2.bf16.msra.mxu0 %v4846
        %5279 = vmatprep.mubr.bf16.mxu0 %v3915
        %5280 = vmatmul.mubr.bf16.gmra.mxu0 %v3914
        %v5281 = vpop.f32.mrf.mxu0
        %v5282 = vadd.f32 %v5169, %v5281
        %v5283 = vpop.f32.mrf.mxu0
        %v5284 = vadd.f32 %v5171, %v5283
        %v5285 = vpop.f32.mrf.mxu0
        %v5286 = vadd.f32 %v5173, %v5285
        %v5287 = vpop.f32.mrf.mxu0
        %v5288 = vadd.f32 %v5175, %v5287
        %5289 = vmatprep.mubr.bf16.mxu0 %v3921
        %5290 = vmatmul.mubr.bf16.gmra.mxu0 %v3920
        %v5291 = vpop.f32.mrf.mxu0
        %v5292 = vadd.f32 %v5179, %v5291
        %v5293 = vpop.f32.mrf.mxu0
        %v5294 = vadd.f32 %v5181, %v5293
        %v5295 = vpop.f32.mrf.mxu0
        %v5296 = vadd.f32 %v5183, %v5295
        %v5297 = vpop.f32.mrf.mxu0
        %v5298 = vadd.f32 %v5185, %v5297
        %5299 = vmatprep.mubr.bf16.mxu0 %v3927
        %5300 = vmatmul.mubr.bf16.gmra.mxu0 %v3926
        %v5301 = vpop.f32.mrf.mxu0
        %v5302 = vadd.f32 %v5189, %v5301
        %v5303 = vpop.f32.mrf.mxu0
        %v5304 = vadd.f32 %v5191, %v5303
        %v5305 = vpop.f32.mrf.mxu0
        %v5306 = vadd.f32 %v5193, %v5305
        %v5307 = vpop.f32.mrf.mxu0
        %v5308 = vadd.f32 %v5195, %v5307
        %5309 = vmatprep.mubr.bf16.mxu0 %v3933
        %5310 = vmatmul.mubr.bf16.gmra.mxu0 %v3932
        %v5311 = vpop.f32.mrf.mxu0
        %v5312 = vadd.f32 %v5199, %v5311
        %v5313 = vpop.f32.mrf.mxu0
        %v5314 = vadd.f32 %v5201, %v5313
        %v5315 = vpop.f32.mrf.mxu0
        %v5316 = vadd.f32 %v5203, %v5315
        %v5317 = vpop.f32.mrf.mxu0
        %v5318 = vadd.f32 %v5205, %v5317
        %5319 = vmatprep.mubr.bf16.mxu0 %v3939
        %5320 = vmatmul.mubr.bf16.gmra.mxu0 %v3938
        %v5321 = vpop.f32.mrf.mxu0
        %v5322 = vadd.f32 %v5209, %v5321
        %v5323 = vpop.f32.mrf.mxu0
        %v5324 = vadd.f32 %v5211, %v5323
        %v5325 = vpop.f32.mrf.mxu0
        %v5326 = vadd.f32 %v5213, %v5325
        %v5327 = vpop.f32.mrf.mxu0
        %v5328 = vadd.f32 %v5215, %v5327
        %5329 = vmatprep.mubr.bf16.mxu0 %v3945
        %5330 = vmatmul.mubr.bf16.gmra.mxu0 %v3944
        %v5331 = vpop.f32.mrf.mxu0
        %v5332 = vadd.f32 %v5219, %v5331
        %v5333 = vpop.f32.mrf.mxu0
        %v5334 = vadd.f32 %v5221, %v5333
        %v5335 = vpop.f32.mrf.mxu0
        %v5336 = vadd.f32 %v5223, %v5335
        %v5337 = vpop.f32.mrf.mxu0
        %v5338 = vadd.f32 %v5225, %v5337
        %5339 = vmatprep.mubr.bf16.mxu0 %v3951
        %5340 = vmatmul.mubr.bf16.gmra.mxu0 %v3950
        %v5341 = vpop.f32.mrf.mxu0
        %v5342 = vadd.f32 %v5229, %v5341
        %v5343 = vpop.f32.mrf.mxu0
        %v5344 = vadd.f32 %v5231, %v5343
        %v5345 = vpop.f32.mrf.mxu0
        %v5346 = vadd.f32 %v5233, %v5345
        %v5347 = vpop.f32.mrf.mxu0
        %v5348 = vadd.f32 %v5235, %v5347
        %5349 = vmatprep.mubr.bf16.mxu0 %v3957
        %5350 = vmatmul.mubr.bf16.gmra.mxu0 %v3956
        %v5351 = vpop.f32.mrf.mxu0
        %v5352 = vadd.f32 %v5239, %v5351
        %v5353 = vpop.f32.mrf.mxu0
        %v5354 = vadd.f32 %v5241, %v5353
        %v5355 = vpop.f32.mrf.mxu0
        %v5356 = vadd.f32 %v5243, %v5355
        %v5357 = vpop.f32.mrf.mxu0
        %v5358 = vadd.f32 %v5245, %v5357
        %5359 = vdwg.mxu0
        %5360 = vmatprep.subr.bf16.mxu0 %v4907
        %5361 = vmatpush1.bf16.msra.mxu0 %v4906
        %5362 = vmatprep.subr.bf16.mxu0 %v4903
        %5363 = vmatpush1.bf16.msra.mxu0 %v4902
        %5364 = vmatprep.subr.bf16.mxu0 %v4899
        %5365 = vmatpush1.bf16.msra.mxu0 %v4898
        %5366 = vmatprep.subr.bf16.mxu0 %v4895
        %5367 = vmatpush1.bf16.msra.mxu0 %v4894
        %5368 = vmatprep.subr.bf16.mxu0 %v4891
        %5369 = vmatpush1.bf16.msra.mxu0 %v4890
        %5370 = vmatprep.subr.bf16.mxu0 %v4887
        %5371 = vmatpush1.bf16.msra.mxu0 %v4886
        %5372 = vmatprep.subr.bf16.mxu0 %v4883
        %5373 = vmatpush1.bf16.msra.mxu0 %v4882
        %5374 = vmatprep.subr.bf16.mxu0 %v4879
        %5375 = vmatpush1.bf16.msra.mxu0 %v4878
        %5376 = vmatprep.subr.bf16.mxu0 %v4939
        %5377 = vmatpush2.bf16.msra.mxu0 %v4938
        %5378 = vmatprep.subr.bf16.mxu0 %v4935
        %5379 = vmatpush2.bf16.msra.mxu0 %v4934
        %5380 = vmatprep.subr.bf16.mxu0 %v4931
        %5381 = vmatpush2.bf16.msra.mxu0 %v4930
        %5382 = vmatprep.subr.bf16.mxu0 %v4927
        %5383 = vmatpush2.bf16.msra.mxu0 %v4926
        %5384 = vmatprep.subr.bf16.mxu0 %v4923
        %5385 = vmatpush2.bf16.msra.mxu0 %v4922
        %5386 = vmatprep.subr.bf16.mxu0 %v4919
        %5387 = vmatpush2.bf16.msra.mxu0 %v4918
        %5388 = vmatprep.subr.bf16.mxu0 %v4915
        %5389 = vmatpush2.bf16.msra.mxu0 %v4914
        %5390 = vmatprep.subr.bf16.mxu0 %v4911
        %5391 = vmatpush2.bf16.msra.mxu0 %v4910
        %5392 = vmatprep.mubr.bf16.mxu0 %v3917
        %5393 = vmatmul.mubr.bf16.gmra.mxu0 %v3916
        %v5394 = vpop.f32.mrf.mxu0
        %v5395 = vadd.f32 %v5282, %v5394
        %v5396 = vpop.f32.mrf.mxu0
        %v5397 = vadd.f32 %v5284, %v5396
        %v5398 = vpop.f32.mrf.mxu0
        %v5399 = vadd.f32 %v5286, %v5398
        %v5400 = vpop.f32.mrf.mxu0
        %v5401 = vadd.f32 %v5288, %v5400
        %5402 = vmatprep.mubr.bf16.mxu0 %v3923
        %5403 = vmatmul.mubr.bf16.gmra.mxu0 %v3922
        %v5404 = vpop.f32.mrf.mxu0
        %v5405 = vadd.f32 %v5292, %v5404
        %v5406 = vpop.f32.mrf.mxu0
        %v5407 = vadd.f32 %v5294, %v5406
        %v5408 = vpop.f32.mrf.mxu0
        %v5409 = vadd.f32 %v5296, %v5408
        %v5410 = vpop.f32.mrf.mxu0
        %v5411 = vadd.f32 %v5298, %v5410
        %5412 = vmatprep.mubr.bf16.mxu0 %v3929
        %5413 = vmatmul.mubr.bf16.gmra.mxu0 %v3928
        %v5414 = vpop.f32.mrf.mxu0
        %v5415 = vadd.f32 %v5302, %v5414
        %v5416 = vpop.f32.mrf.mxu0
        %v5417 = vadd.f32 %v5304, %v5416
        %v5418 = vpop.f32.mrf.mxu0
        %v5419 = vadd.f32 %v5306, %v5418
        %v5420 = vpop.f32.mrf.mxu0
        %v5421 = vadd.f32 %v5308, %v5420
        %5422 = vmatprep.mubr.bf16.mxu0 %v3935
        %5423 = vmatmul.mubr.bf16.gmra.mxu0 %v3934
        %v5424 = vpop.f32.mrf.mxu0
        %v5425 = vadd.f32 %v5312, %v5424
        %v5426 = vpop.f32.mrf.mxu0
        %v5427 = vadd.f32 %v5314, %v5426
        %v5428 = vpop.f32.mrf.mxu0
        %v5429 = vadd.f32 %v5316, %v5428
        %v5430 = vpop.f32.mrf.mxu0
        %v5431 = vadd.f32 %v5318, %v5430
        %5432 = vmatprep.mubr.bf16.mxu0 %v3941
        %5433 = vmatmul.mubr.bf16.gmra.mxu0 %v3940
        %v5434 = vpop.f32.mrf.mxu0
        %v5435 = vadd.f32 %v5322, %v5434
        %v5436 = vpop.f32.mrf.mxu0
        %v5437 = vadd.f32 %v5324, %v5436
        %v5438 = vpop.f32.mrf.mxu0
        %v5439 = vadd.f32 %v5326, %v5438
        %v5440 = vpop.f32.mrf.mxu0
        %v5441 = vadd.f32 %v5328, %v5440
        %5442 = vmatprep.mubr.bf16.mxu0 %v3947
        %5443 = vmatmul.mubr.bf16.gmra.mxu0 %v3946
        %v5444 = vpop.f32.mrf.mxu0
        %v5445 = vadd.f32 %v5332, %v5444
        %v5446 = vpop.f32.mrf.mxu0
        %v5447 = vadd.f32 %v5334, %v5446
        %v5448 = vpop.f32.mrf.mxu0
        %v5449 = vadd.f32 %v5336, %v5448
        %v5450 = vpop.f32.mrf.mxu0
        %v5451 = vadd.f32 %v5338, %v5450
        %5452 = vmatprep.mubr.bf16.mxu0 %v3953
        %5453 = vmatmul.mubr.bf16.gmra.mxu0 %v3952
        %v5454 = vpop.f32.mrf.mxu0
        %v5455 = vadd.f32 %v5342, %v5454
        %v5456 = vpop.f32.mrf.mxu0
        %v5457 = vadd.f32 %v5344, %v5456
        %v5458 = vpop.f32.mrf.mxu0
        %v5459 = vadd.f32 %v5346, %v5458
        %v5460 = vpop.f32.mrf.mxu0
        %v5461 = vadd.f32 %v5348, %v5460
        %5462 = vmatprep.mubr.bf16.mxu0 %v3959
        %5463 = vmatmul.mubr.bf16.gmra.mxu0 %v3958
        %v5464 = vpop.f32.mrf.mxu0
        %v5465 = vadd.f32 %v5352, %v5464
        %v5466 = vpop.f32.mrf.mxu0
        %v5467 = vadd.f32 %v5354, %v5466
        %v5468 = vpop.f32.mrf.mxu0
        %v5469 = vadd.f32 %v5356, %v5468
        %v5470 = vpop.f32.mrf.mxu0
        %v5471 = vadd.f32 %v5358, %v5470
        %5472 = vdwg.mxu0
        %5473 = vmatprep.subr.bf16.mxu0 %v4781
        %5474 = vmatpush1.bf16.msra.mxu0 %v4780
        %5475 = vmatprep.subr.bf16.mxu0 %v4777
        %5476 = vmatpush1.bf16.msra.mxu0 %v4776
        %5477 = vmatprep.subr.bf16.mxu0 %v4773
        %5478 = vmatpush1.bf16.msra.mxu0 %v4772
        %5479 = vmatprep.subr.bf16.mxu0 %v4769
        %5480 = vmatpush1.bf16.msra.mxu0 %v4768
        %5481 = vmatprep.subr.bf16.mxu0 %v4765
        %5482 = vmatpush1.bf16.msra.mxu0 %v4764
        %5483 = vmatprep.subr.bf16.mxu0 %v4761
        %5484 = vmatpush1.bf16.msra.mxu0 %v4760
        %5485 = vmatprep.subr.bf16.mxu0 %v4757
        %5486 = vmatpush1.bf16.msra.mxu0 %v4756
        %5487 = vmatprep.subr.bf16.mxu0 %v4753
        %5488 = vmatpush1.bf16.msra.mxu0 %v4752
        %5489 = vmatprep.subr.bf16.mxu0 %v4813
        %5490 = vmatpush2.bf16.msra.mxu0 %v4812
        %5491 = vmatprep.subr.bf16.mxu0 %v4809
        %5492 = vmatpush2.bf16.msra.mxu0 %v4808
        %5493 = vmatprep.subr.bf16.mxu0 %v4805
        %5494 = vmatpush2.bf16.msra.mxu0 %v4804
        %5495 = vmatprep.subr.bf16.mxu0 %v4801
        %5496 = vmatpush2.bf16.msra.mxu0 %v4800
        %5497 = vmatprep.subr.bf16.mxu0 %v4797
        %5498 = vmatpush2.bf16.msra.mxu0 %v4796
        %5499 = vmatprep.subr.bf16.mxu0 %v4793
        %5500 = vmatpush2.bf16.msra.mxu0 %v4792
        %5501 = vmatprep.subr.bf16.mxu0 %v4789
        %5502 = vmatpush2.bf16.msra.mxu0 %v4788
        %5503 = vmatprep.subr.bf16.mxu0 %v4785
        %5504 = vmatpush2.bf16.msra.mxu0 %v4784
        %5505 = vmatprep.mubr.bf16.mxu0 %v3913
        %5506 = vmatmul.mubr.bf16.gmra.mxu0 %v3912
        %v5507 = vpop.f32.mrf.mxu0
        %v5508 = vadd.f32 %v4165, %v5507
        %v5509 = vpop.f32.mrf.mxu0
        %v5510 = vadd.f32 %v4169, %v5509
        %v5511 = vpop.f32.mrf.mxu0
        %v5512 = vadd.f32 %v4165, %v5511
        %v5513 = vpop.f32.mrf.mxu0
        %v5514 = vadd.f32 %v4169, %v5513
        %5515 = vmatprep.mubr.bf16.mxu0 %v3919
        %5516 = vmatmul.mubr.bf16.gmra.mxu0 %v3918
        %v5517 = vpop.f32.mrf.mxu0
        %v5518 = vadd.f32 %v4165, %v5517
        %v5519 = vpop.f32.mrf.mxu0
        %v5520 = vadd.f32 %v4169, %v5519
        %v5521 = vpop.f32.mrf.mxu0
        %v5522 = vadd.f32 %v4165, %v5521
        %v5523 = vpop.f32.mrf.mxu0
        %v5524 = vadd.f32 %v4169, %v5523
        %5525 = vmatprep.mubr.bf16.mxu0 %v3925
        %5526 = vmatmul.mubr.bf16.gmra.mxu0 %v3924
        %v5527 = vpop.f32.mrf.mxu0
        %v5528 = vadd.f32 %v4165, %v5527
        %v5529 = vpop.f32.mrf.mxu0
        %v5530 = vadd.f32 %v4169, %v5529
        %v5531 = vpop.f32.mrf.mxu0
        %v5532 = vadd.f32 %v4165, %v5531
        %v5533 = vpop.f32.mrf.mxu0
        %v5534 = vadd.f32 %v4169, %v5533
        %5535 = vmatprep.mubr.bf16.mxu0 %v3931
        %5536 = vmatmul.mubr.bf16.gmra.mxu0 %v3930
        %v5537 = vpop.f32.mrf.mxu0
        %v5538 = vadd.f32 %v4165, %v5537
        %v5539 = vpop.f32.mrf.mxu0
        %v5540 = vadd.f32 %v4169, %v5539
        %v5541 = vpop.f32.mrf.mxu0
        %v5542 = vadd.f32 %v4165, %v5541
        %v5543 = vpop.f32.mrf.mxu0
        %v5544 = vadd.f32 %v4169, %v5543
        %5545 = vmatprep.mubr.bf16.mxu0 %v3937
        %5546 = vmatmul.mubr.bf16.gmra.mxu0 %v3936
        %v5547 = vpop.f32.mrf.mxu0
        %v5548 = vadd.f32 %v4165, %v5547
        %v5549 = vpop.f32.mrf.mxu0
        %v5550 = vadd.f32 %v4169, %v5549
        %v5551 = vpop.f32.mrf.mxu0
        %v5552 = vadd.f32 %v4165, %v5551
        %v5553 = vpop.f32.mrf.mxu0
        %v5554 = vadd.f32 %v4169, %v5553
        %5555 = vmatprep.mubr.bf16.mxu0 %v3943
        %5556 = vmatmul.mubr.bf16.gmra.mxu0 %v3942
        %v5557 = vpop.f32.mrf.mxu0
        %v5558 = vadd.f32 %v4165, %v5557
        %v5559 = vpop.f32.mrf.mxu0
        %v5560 = vadd.f32 %v4169, %v5559
        %v5561 = vpop.f32.mrf.mxu0
        %v5562 = vadd.f32 %v4165, %v5561
        %v5563 = vpop.f32.mrf.mxu0
        %v5564 = vadd.f32 %v4169, %v5563
        %5565 = vmatprep.mubr.bf16.mxu0 %v3949
        %5566 = vmatmul.mubr.bf16.gmra.mxu0 %v3948
        %v5567 = vpop.f32.mrf.mxu0
        %v5568 = vadd.f32 %v4165, %v5567
        %v5569 = vpop.f32.mrf.mxu0
        %v5570 = vadd.f32 %v4169, %v5569
        %v5571 = vpop.f32.mrf.mxu0
        %v5572 = vadd.f32 %v4165, %v5571
        %v5573 = vpop.f32.mrf.mxu0
        %v5574 = vadd.f32 %v4169, %v5573
        %5575 = vmatprep.mubr.bf16.mxu0 %v3955
        %5576 = vmatmul.mubr.bf16.gmra.mxu0 %v3954
        %v5577 = vpop.f32.mrf.mxu0
        %v5578 = vadd.f32 %v4165, %v5577
        %v5579 = vpop.f32.mrf.mxu0
        %v5580 = vadd.f32 %v4169, %v5579
        %v5581 = vpop.f32.mrf.mxu0
        %v5582 = vadd.f32 %v4165, %v5581
        %v5583 = vpop.f32.mrf.mxu0
        %v5584 = vadd.f32 %v4169, %v5583
        %5585 = vdwg.mxu0
        %5586 = vmatprep.subr.bf16.mxu0 %v4845
        %5587 = vmatpush1.bf16.msra.mxu0 %v4844
        %5588 = vmatprep.subr.bf16.mxu0 %v4841
        %5589 = vmatpush1.bf16.msra.mxu0 %v4840
        %5590 = vmatprep.subr.bf16.mxu0 %v4837
        %5591 = vmatpush1.bf16.msra.mxu0 %v4836
        %5592 = vmatprep.subr.bf16.mxu0 %v4833
        %5593 = vmatpush1.bf16.msra.mxu0 %v4832
        %5594 = vmatprep.subr.bf16.mxu0 %v4829
        %5595 = vmatpush1.bf16.msra.mxu0 %v4828
        %5596 = vmatprep.subr.bf16.mxu0 %v4825
        %5597 = vmatpush1.bf16.msra.mxu0 %v4824
        %5598 = vmatprep.subr.bf16.mxu0 %v4821
        %5599 = vmatpush1.bf16.msra.mxu0 %v4820
        %5600 = vmatprep.subr.bf16.mxu0 %v4817
        %5601 = vmatpush1.bf16.msra.mxu0 %v4816
        %5602 = vmatprep.subr.bf16.mxu0 %v4877
        %5603 = vmatpush2.bf16.msra.mxu0 %v4876
        %5604 = vmatprep.subr.bf16.mxu0 %v4873
        %5605 = vmatpush2.bf16.msra.mxu0 %v4872
        %5606 = vmatprep.subr.bf16.mxu0 %v4869
        %5607 = vmatpush2.bf16.msra.mxu0 %v4868
        %5608 = vmatprep.subr.bf16.mxu0 %v4865
        %5609 = vmatpush2.bf16.msra.mxu0 %v4864
        %5610 = vmatprep.subr.bf16.mxu0 %v4861
        %5611 = vmatpush2.bf16.msra.mxu0 %v4860
        %5612 = vmatprep.subr.bf16.mxu0 %v4857
        %5613 = vmatpush2.bf16.msra.mxu0 %v4856
        %5614 = vmatprep.subr.bf16.mxu0 %v4853
        %5615 = vmatpush2.bf16.msra.mxu0 %v4852
        %5616 = vmatprep.subr.bf16.mxu0 %v4849
        %5617 = vmatpush2.bf16.msra.mxu0 %v4848
        %5618 = vmatprep.mubr.bf16.mxu0 %v3915
        %5619 = vmatmul.mubr.bf16.gmra.mxu0 %v3914
        %v5620 = vpop.f32.mrf.mxu0
        %v5621 = vadd.f32 %v5508, %v5620
        %v5622 = vpop.f32.mrf.mxu0
        %v5623 = vadd.f32 %v5510, %v5622
        %v5624 = vpop.f32.mrf.mxu0
        %v5625 = vadd.f32 %v5512, %v5624
        %v5626 = vpop.f32.mrf.mxu0
        %v5627 = vadd.f32 %v5514, %v5626
        %5628 = vmatprep.mubr.bf16.mxu0 %v3921
        %5629 = vmatmul.mubr.bf16.gmra.mxu0 %v3920
        %v5630 = vpop.f32.mrf.mxu0
        %v5631 = vadd.f32 %v5518, %v5630
        %v5632 = vpop.f32.mrf.mxu0
        %v5633 = vadd.f32 %v5520, %v5632
        %v5634 = vpop.f32.mrf.mxu0
        %v5635 = vadd.f32 %v5522, %v5634
        %v5636 = vpop.f32.mrf.mxu0
        %v5637 = vadd.f32 %v5524, %v5636
        %5638 = vmatprep.mubr.bf16.mxu0 %v3927
        %5639 = vmatmul.mubr.bf16.gmra.mxu0 %v3926
        %v5640 = vpop.f32.mrf.mxu0
        %v5641 = vadd.f32 %v5528, %v5640
        %v5642 = vpop.f32.mrf.mxu0
        %v5643 = vadd.f32 %v5530, %v5642
        %v5644 = vpop.f32.mrf.mxu0
        %v5645 = vadd.f32 %v5532, %v5644
        %v5646 = vpop.f32.mrf.mxu0
        %v5647 = vadd.f32 %v5534, %v5646
        %5648 = vmatprep.mubr.bf16.mxu0 %v3933
        %5649 = vmatmul.mubr.bf16.gmra.mxu0 %v3932
        %v5650 = vpop.f32.mrf.mxu0
        %v5651 = vadd.f32 %v5538, %v5650
        %v5652 = vpop.f32.mrf.mxu0
        %v5653 = vadd.f32 %v5540, %v5652
        %v5654 = vpop.f32.mrf.mxu0
        %v5655 = vadd.f32 %v5542, %v5654
        %v5656 = vpop.f32.mrf.mxu0
        %v5657 = vadd.f32 %v5544, %v5656
        %5658 = vmatprep.mubr.bf16.mxu0 %v3939
        %5659 = vmatmul.mubr.bf16.gmra.mxu0 %v3938
        %v5660 = vpop.f32.mrf.mxu0
        %v5661 = vadd.f32 %v5548, %v5660
        %v5662 = vpop.f32.mrf.mxu0
        %v5663 = vadd.f32 %v5550, %v5662
        %v5664 = vpop.f32.mrf.mxu0
        %v5665 = vadd.f32 %v5552, %v5664
        %v5666 = vpop.f32.mrf.mxu0
        %v5667 = vadd.f32 %v5554, %v5666
        %5668 = vmatprep.mubr.bf16.mxu0 %v3945
        %5669 = vmatmul.mubr.bf16.gmra.mxu0 %v3944
        %v5670 = vpop.f32.mrf.mxu0
        %v5671 = vadd.f32 %v5558, %v5670
        %v5672 = vpop.f32.mrf.mxu0
        %v5673 = vadd.f32 %v5560, %v5672
        %v5674 = vpop.f32.mrf.mxu0
        %v5675 = vadd.f32 %v5562, %v5674
        %v5676 = vpop.f32.mrf.mxu0
        %v5677 = vadd.f32 %v5564, %v5676
        %5678 = vmatprep.mubr.bf16.mxu0 %v3951
        %5679 = vmatmul.mubr.bf16.gmra.mxu0 %v3950
        %v5680 = vpop.f32.mrf.mxu0
        %v5681 = vadd.f32 %v5568, %v5680
        %v5682 = vpop.f32.mrf.mxu0
        %v5683 = vadd.f32 %v5570, %v5682
        %v5684 = vpop.f32.mrf.mxu0
        %v5685 = vadd.f32 %v5572, %v5684
        %v5686 = vpop.f32.mrf.mxu0
        %v5687 = vadd.f32 %v5574, %v5686
        %5688 = vmatprep.mubr.bf16.mxu0 %v3957
        %5689 = vmatmul.mubr.bf16.gmra.mxu0 %v3956
        %v5690 = vpop.f32.mrf.mxu0
        %v5691 = vadd.f32 %v5578, %v5690
        %v5692 = vpop.f32.mrf.mxu0
        %v5693 = vadd.f32 %v5580, %v5692
        %v5694 = vpop.f32.mrf.mxu0
        %v5695 = vadd.f32 %v5582, %v5694
        %v5696 = vpop.f32.mrf.mxu0
        %v5697 = vadd.f32 %v5584, %v5696
        %5698 = vdwg.mxu0
        %5699 = vmatprep.subr.bf16.mxu0 %v4909
        %5700 = vmatpush1.bf16.msra.mxu0 %v4908
        %5701 = vmatprep.subr.bf16.mxu0 %v4905
        %5702 = vmatpush1.bf16.msra.mxu0 %v4904
        %5703 = vmatprep.subr.bf16.mxu0 %v4901
        %5704 = vmatpush1.bf16.msra.mxu0 %v4900
        %5705 = vmatprep.subr.bf16.mxu0 %v4897
        %5706 = vmatpush1.bf16.msra.mxu0 %v4896
        %5707 = vmatprep.subr.bf16.mxu0 %v4893
        %5708 = vmatpush1.bf16.msra.mxu0 %v4892
        %5709 = vmatprep.subr.bf16.mxu0 %v4889
        %5710 = vmatpush1.bf16.msra.mxu0 %v4888
        %5711 = vmatprep.subr.bf16.mxu0 %v4885
        %5712 = vmatpush1.bf16.msra.mxu0 %v4884
        %5713 = vmatprep.subr.bf16.mxu0 %v4881
        %5714 = vmatpush1.bf16.msra.mxu0 %v4880
        %5715 = vmatprep.subr.bf16.mxu0 %v4941
        %5716 = vmatpush2.bf16.msra.mxu0 %v4940
        %5717 = vmatprep.subr.bf16.mxu0 %v4937
        %5718 = vmatpush2.bf16.msra.mxu0 %v4936
        %5719 = vmatprep.subr.bf16.mxu0 %v4933
        %5720 = vmatpush2.bf16.msra.mxu0 %v4932
        %5721 = vmatprep.subr.bf16.mxu0 %v4929
        %5722 = vmatpush2.bf16.msra.mxu0 %v4928
        %5723 = vmatprep.subr.bf16.mxu0 %v4925
        %5724 = vmatpush2.bf16.msra.mxu0 %v4924
        %5725 = vmatprep.subr.bf16.mxu0 %v4921
        %5726 = vmatpush2.bf16.msra.mxu0 %v4920
        %5727 = vmatprep.subr.bf16.mxu0 %v4917
        %5728 = vmatpush2.bf16.msra.mxu0 %v4916
        %5729 = vmatprep.subr.bf16.mxu0 %v4913
        %5730 = vmatpush2.bf16.msra.mxu0 %v4912
        %5731 = vmatprep.mubr.bf16.mxu0 %v3917
        %5732 = vmatmul.mubr.bf16.gmra.mxu0 %v3916
        %v5733 = vpop.f32.mrf.mxu0
        %v5734 = vadd.f32 %v5621, %v5733
        %v5735 = vpop.f32.mrf.mxu0
        %v5736 = vadd.f32 %v5623, %v5735
        %v5737 = vpop.f32.mrf.mxu0
        %v5738 = vadd.f32 %v5625, %v5737
        %v5739 = vpop.f32.mrf.mxu0
        %v5740 = vadd.f32 %v5627, %v5739
        %5741 = vmatprep.mubr.bf16.mxu0 %v3923
        %5742 = vmatmul.mubr.bf16.gmra.mxu0 %v3922
        %v5743 = vpop.f32.mrf.mxu0
        %v5744 = vadd.f32 %v5631, %v5743
        %v5745 = vpop.f32.mrf.mxu0
        %v5746 = vadd.f32 %v5633, %v5745
        %v5747 = vpop.f32.mrf.mxu0
        %v5748 = vadd.f32 %v5635, %v5747
        %v5749 = vpop.f32.mrf.mxu0
        %v5750 = vadd.f32 %v5637, %v5749
        %5751 = vmatprep.mubr.bf16.mxu0 %v3929
        %5752 = vmatmul.mubr.bf16.gmra.mxu0 %v3928
        %v5753 = vpop.f32.mrf.mxu0
        %v5754 = vadd.f32 %v5641, %v5753
        %v5755 = vpop.f32.mrf.mxu0
        %v5756 = vadd.f32 %v5643, %v5755
        %v5757 = vpop.f32.mrf.mxu0
        %v5758 = vadd.f32 %v5645, %v5757
        %v5759 = vpop.f32.mrf.mxu0
        %v5760 = vadd.f32 %v5647, %v5759
        %5761 = vmatprep.mubr.bf16.mxu0 %v3935
        %5762 = vmatmul.mubr.bf16.gmra.mxu0 %v3934
        %v5763 = vpop.f32.mrf.mxu0
        %v5764 = vadd.f32 %v5651, %v5763
        %v5765 = vpop.f32.mrf.mxu0
        %v5766 = vadd.f32 %v5653, %v5765
        %v5767 = vpop.f32.mrf.mxu0
        %v5768 = vadd.f32 %v5655, %v5767
        %v5769 = vpop.f32.mrf.mxu0
        %v5770 = vadd.f32 %v5657, %v5769
        %5771 = vmatprep.mubr.bf16.mxu0 %v3941
        %5772 = vmatmul.mubr.bf16.gmra.mxu0 %v3940
        %v5773 = vpop.f32.mrf.mxu0
        %v5774 = vadd.f32 %v5661, %v5773
        %v5775 = vpop.f32.mrf.mxu0
        %v5776 = vadd.f32 %v5663, %v5775
        %v5777 = vpop.f32.mrf.mxu0
        %v5778 = vadd.f32 %v5665, %v5777
        %v5779 = vpop.f32.mrf.mxu0
        %v5780 = vadd.f32 %v5667, %v5779
        %5781 = vmatprep.mubr.bf16.mxu0 %v3947
        %5782 = vmatmul.mubr.bf16.gmra.mxu0 %v3946
        %v5783 = vpop.f32.mrf.mxu0
        %v5784 = vadd.f32 %v5671, %v5783
        %v5785 = vpop.f32.mrf.mxu0
        %v5786 = vadd.f32 %v5673, %v5785
        %v5787 = vpop.f32.mrf.mxu0
        %v5788 = vadd.f32 %v5675, %v5787
        %v5789 = vpop.f32.mrf.mxu0
        %v5790 = vadd.f32 %v5677, %v5789
        %5791 = vmatprep.mubr.bf16.mxu0 %v3953
        %5792 = vmatmul.mubr.bf16.gmra.mxu0 %v3952
        %v5793 = vpop.f32.mrf.mxu0
        %v5794 = vadd.f32 %v5681, %v5793
        %v5795 = vpop.f32.mrf.mxu0
        %v5796 = vadd.f32 %v5683, %v5795
        %v5797 = vpop.f32.mrf.mxu0
        %v5798 = vadd.f32 %v5685, %v5797
        %v5799 = vpop.f32.mrf.mxu0
        %v5800 = vadd.f32 %v5687, %v5799
        %5801 = vmatprep.mubr.bf16.mxu0 %v3959
        %5802 = vmatmul.mubr.bf16.gmra.mxu0 %v3958
        %v5803 = vpop.f32.mrf.mxu0
        %v5804 = vadd.f32 %v5691, %v5803
        %v5805 = vpop.f32.mrf.mxu0
        %v5806 = vadd.f32 %v5693, %v5805
        %v5807 = vpop.f32.mrf.mxu0
        %v5808 = vadd.f32 %v5695, %v5807
        %v5809 = vpop.f32.mrf.mxu0
        %v5810 = vadd.f32 %v5697, %v5809
        %5811 = vdwg.mxu0
        %v5812 = vxor.u32 %v5734, 2147483648
        %v5813 = vxor.u32 %v5736, 2147483648
        %v5814 = vxor.u32 %v5738, 2147483648
        %v5815 = vxor.u32 %v5740, 2147483648
        %v5816 = vxor.u32 %v5744, 2147483648
        %v5817 = vxor.u32 %v5746, 2147483648
        %v5818 = vxor.u32 %v5748, 2147483648
        %v5819 = vxor.u32 %v5750, 2147483648
        %v5820 = vxor.u32 %v5754, 2147483648
        %v5821 = vxor.u32 %v5756, 2147483648
        %v5822 = vxor.u32 %v5758, 2147483648
        %v5823 = vxor.u32 %v5760, 2147483648
        %v5824 = vxor.u32 %v5764, 2147483648
        %v5825 = vxor.u32 %v5766, 2147483648
        %v5826 = vxor.u32 %v5768, 2147483648
        %v5827 = vxor.u32 %v5770, 2147483648
        %v5828 = vxor.u32 %v5774, 2147483648
        %v5829 = vxor.u32 %v5776, 2147483648
        %v5830 = vxor.u32 %v5778, 2147483648
        %v5831 = vxor.u32 %v5780, 2147483648
        %v5832 = vxor.u32 %v5784, 2147483648
        %v5833 = vxor.u32 %v5786, 2147483648
        %v5834 = vxor.u32 %v5788, 2147483648
        %v5835 = vxor.u32 %v5790, 2147483648
        %v5836 = vxor.u32 %v5794, 2147483648
        %v5837 = vxor.u32 %v5796, 2147483648
        %v5838 = vxor.u32 %v5798, 2147483648
        %v5839 = vxor.u32 %v5800, 2147483648
        %v5840 = vxor.u32 %v5804, 2147483648
        %v5841 = vxor.u32 %v5806, 2147483648
        %v5842 = vxor.u32 %v5808, 2147483648
        %v5843 = vxor.u32 %v5810, 2147483648
        %v5844 = vmul.f32 %v5812, 1.442695
        %v5845 = vpow.pop %v5844
        %v5846 = vmul.f32 %v5813, 1.442695
        %v5847 = vpow.pop %v5846
        %v5848 = vmul.f32 %v5814, 1.442695
        %v5849 = vpow.pop %v5848
        %v5850 = vmul.f32 %v5815, 1.442695
        %v5851 = vpow.pop %v5850
        %v5852 = vmul.f32 %v5816, 1.442695
        %v5853 = vpow.pop %v5852
        %v5854 = vmul.f32 %v5817, 1.442695
        %v5855 = vpow.pop %v5854
        %v5856 = vmul.f32 %v5818, 1.442695
        %v5857 = vpow.pop %v5856
        %v5858 = vmul.f32 %v5819, 1.442695
        %v5859 = vpow.pop %v5858
        %v5860 = vmul.f32 %v5820, 1.442695
        %v5861 = vpow.pop %v5860
        %v5862 = vmul.f32 %v5821, 1.442695
        %v5863 = vpow.pop %v5862
        %v5864 = vmul.f32 %v5822, 1.442695
        %v5865 = vpow.pop %v5864
        %v5866 = vmul.f32 %v5823, 1.442695
        %v5867 = vpow.pop %v5866
        %v5868 = vmul.f32 %v5824, 1.442695
        %v5869 = vpow.pop %v5868
        %v5870 = vmul.f32 %v5825, 1.442695
        %v5871 = vpow.pop %v5870
        %v5872 = vmul.f32 %v5826, 1.442695
        %v5873 = vpow.pop %v5872
        %v5874 = vmul.f32 %v5827, 1.442695
        %v5875 = vpow.pop %v5874
        %v5876 = vmul.f32 %v5828, 1.442695
        %v5877 = vpow.pop %v5876
        %v5878 = vmul.f32 %v5829, 1.442695
        %v5879 = vpow.pop %v5878
        %v5880 = vmul.f32 %v5830, 1.442695
        %v5881 = vpow.pop %v5880
        %v5882 = vmul.f32 %v5831, 1.442695
        %v5883 = vpow.pop %v5882
        %v5884 = vmul.f32 %v5832, 1.442695
        %v5885 = vpow.pop %v5884
        %v5886 = vmul.f32 %v5833, 1.442695
        %v5887 = vpow.pop %v5886
        %v5888 = vmul.f32 %v5834, 1.442695
        %v5889 = vpow.pop %v5888
        %v5890 = vmul.f32 %v5835, 1.442695
        %v5891 = vpow.pop %v5890
        %v5892 = vmul.f32 %v5836, 1.442695
        %v5893 = vpow.pop %v5892
        %v5894 = vmul.f32 %v5837, 1.442695
        %v5895 = vpow.pop %v5894
        %v5896 = vmul.f32 %v5838, 1.442695
        %v5897 = vpow.pop %v5896
        %v5898 = vmul.f32 %v5839, 1.442695
        %v5899 = vpow.pop %v5898
        %v5900 = vmul.f32 %v5840, 1.442695
        %v5901 = vpow.pop %v5900
        %v5902 = vmul.f32 %v5841, 1.442695
        %v5903 = vpow.pop %v5902
        %v5904 = vmul.f32 %v5842, 1.442695
        %v5905 = vpow.pop %v5904
        %v5906 = vmul.f32 %v5843, 1.442695
        %v5907 = vpow.pop %v5906
        %v5908 = vadd.f32 %v5845, 1.0
        %v5909 = vadd.f32 %v5847, 1.0
        %v5910 = vadd.f32 %v5849, 1.0
        %v5911 = vadd.f32 %v5851, 1.0
        %v5912 = vadd.f32 %v5853, 1.0
        %v5913 = vadd.f32 %v5855, 1.0
        %v5914 = vadd.f32 %v5857, 1.0
        %v5915 = vadd.f32 %v5859, 1.0
        %v5916 = vadd.f32 %v5861, 1.0
        %v5917 = vadd.f32 %v5863, 1.0
        %v5918 = vadd.f32 %v5865, 1.0
        %v5919 = vadd.f32 %v5867, 1.0
        %v5920 = vadd.f32 %v5869, 1.0
        %v5921 = vadd.f32 %v5871, 1.0
        %v5922 = vadd.f32 %v5873, 1.0
        %v5923 = vadd.f32 %v5875, 1.0
        %v5924 = vadd.f32 %v5877, 1.0
        %v5925 = vadd.f32 %v5879, 1.0
        %v5926 = vadd.f32 %v5881, 1.0
        %v5927 = vadd.f32 %v5883, 1.0
        %v5928 = vadd.f32 %v5885, 1.0
        %v5929 = vadd.f32 %v5887, 1.0
        %v5930 = vadd.f32 %v5889, 1.0
        %v5931 = vadd.f32 %v5891, 1.0
        %v5932 = vadd.f32 %v5893, 1.0
        %v5933 = vadd.f32 %v5895, 1.0
        %v5934 = vadd.f32 %v5897, 1.0
        %v5935 = vadd.f32 %v5899, 1.0
        %v5936 = vadd.f32 %v5901, 1.0
        %v5937 = vadd.f32 %v5903, 1.0
        %v5938 = vadd.f32 %v5905, 1.0
        %v5939 = vadd.f32 %v5907, 1.0
        %v5940 = vrcp.pop %v5908
        %v5941 = vmul.f32 1.0, %v5940
        %v5942 = vrcp.pop %v5909
        %v5943 = vmul.f32 1.0, %v5942
        %v5944 = vrcp.pop %v5910
        %v5945 = vmul.f32 1.0, %v5944
        %v5946 = vrcp.pop %v5911
        %v5947 = vmul.f32 1.0, %v5946
        %v5948 = vrcp.pop %v5912
        %v5949 = vmul.f32 1.0, %v5948
        %v5950 = vrcp.pop %v5913
        %v5951 = vmul.f32 1.0, %v5950
        %v5952 = vrcp.pop %v5914
        %v5953 = vmul.f32 1.0, %v5952
        %v5954 = vrcp.pop %v5915
        %v5955 = vmul.f32 1.0, %v5954
        %v5956 = vrcp.pop %v5916
        %v5957 = vmul.f32 1.0, %v5956
        %v5958 = vrcp.pop %v5917
        %v5959 = vmul.f32 1.0, %v5958
        %v5960 = vrcp.pop %v5918
        %v5961 = vmul.f32 1.0, %v5960
        %v5962 = vrcp.pop %v5919
        %v5963 = vmul.f32 1.0, %v5962
        %v5964 = vrcp.pop %v5920
        %v5965 = vmul.f32 1.0, %v5964
        %v5966 = vrcp.pop %v5921
        %v5967 = vmul.f32 1.0, %v5966
        %v5968 = vrcp.pop %v5922
        %v5969 = vmul.f32 1.0, %v5968
        %v5970 = vrcp.pop %v5923
        %v5971 = vmul.f32 1.0, %v5970
        %v5972 = vrcp.pop %v5924
        %v5973 = vmul.f32 1.0, %v5972
        %v5974 = vrcp.pop %v5925
        %v5975 = vmul.f32 1.0, %v5974
        %v5976 = vrcp.pop %v5926
        %v5977 = vmul.f32 1.0, %v5976
        %v5978 = vrcp.pop %v5927
        %v5979 = vmul.f32 1.0, %v5978
        %v5980 = vrcp.pop %v5928
        %v5981 = vmul.f32 1.0, %v5980
        %v5982 = vrcp.pop %v5929
        %v5983 = vmul.f32 1.0, %v5982
        %v5984 = vrcp.pop %v5930
        %v5985 = vmul.f32 1.0, %v5984
        %v5986 = vrcp.pop %v5931
        %v5987 = vmul.f32 1.0, %v5986
        %v5988 = vrcp.pop %v5932
        %v5989 = vmul.f32 1.0, %v5988
        %v5990 = vrcp.pop %v5933
        %v5991 = vmul.f32 1.0, %v5990
        %v5992 = vrcp.pop %v5934
        %v5993 = vmul.f32 1.0, %v5992
        %v5994 = vrcp.pop %v5935
        %v5995 = vmul.f32 1.0, %v5994
        %v5996 = vrcp.pop %v5936
        %v5997 = vmul.f32 1.0, %v5996
        %v5998 = vrcp.pop %v5937
        %v5999 = vmul.f32 1.0, %v5998
        %v6000 = vrcp.pop %v5938
        %v6001 = vmul.f32 1.0, %v6000
        %v6002 = vrcp.pop %v5939
        %v6003 = vmul.f32 1.0, %v6002
        %v6004 = vmul.f32 %v5395, %v5941
        %v6005 = vmul.f32 %v5397, %v5943
        %v6006 = vmul.f32 %v5399, %v5945
        %v6007 = vmul.f32 %v5401, %v5947
        %v6008 = vmul.f32 %v5405, %v5949
        %v6009 = vmul.f32 %v5407, %v5951
        %v6010 = vmul.f32 %v5409, %v5953
        %v6011 = vmul.f32 %v5411, %v5955
        %v6012 = vmul.f32 %v5415, %v5957
        %v6013 = vmul.f32 %v5417, %v5959
        %v6014 = vmul.f32 %v5419, %v5961
        %v6015 = vmul.f32 %v5421, %v5963
        %v6016 = vmul.f32 %v5425, %v5965
        %v6017 = vmul.f32 %v5427, %v5967
        %v6018 = vmul.f32 %v5429, %v5969
        %v6019 = vmul.f32 %v5431, %v5971
        %v6020 = vmul.f32 %v5435, %v5973
        %v6021 = vmul.f32 %v5437, %v5975
        %v6022 = vmul.f32 %v5439, %v5977
        %v6023 = vmul.f32 %v5441, %v5979
        %v6024 = vmul.f32 %v5445, %v5981
        %v6025 = vmul.f32 %v5447, %v5983
        %v6026 = vmul.f32 %v5449, %v5985
        %v6027 = vmul.f32 %v5451, %v5987
        %v6028 = vmul.f32 %v5455, %v5989
        %v6029 = vmul.f32 %v5457, %v5991
        %v6030 = vmul.f32 %v5459, %v5993
        %v6031 = vmul.f32 %v5461, %v5995
        %v6032 = vmul.f32 %v5465, %v5997
        %v6033 = vmul.f32 %v5467, %v5999
        %v6034 = vmul.f32 %v5469, %v6001
        %v6035 = vmul.f32 %v5471, %v6003
        %v6036 = vadd.f32 %v6004, %v3558
        %v6037 = vadd.f32 %v6005, %v3559
        %v6038 = vadd.f32 %v6006, %v3560
        %v6039 = vadd.f32 %v6007, %v3561
        %v6040 = vadd.f32 %v6008, %v3562
        %v6041 = vadd.f32 %v6009, %v3563
        %v6042 = vadd.f32 %v6010, %v3564
        %v6043 = vadd.f32 %v6011, %v3565
        %v6044 = vadd.f32 %v6012, %v3566
        %v6045 = vadd.f32 %v6013, %v3567
        %v6046 = vadd.f32 %v6014, %v3568
        %v6047 = vadd.f32 %v6015, %v3569
        %v6048 = vadd.f32 %v6016, %v3570
        %v6049 = vadd.f32 %v6017, %v3571
        %v6050 = vadd.f32 %v6018, %v3572
        %v6051 = vadd.f32 %v6019, %v3573
        %v6052 = vadd.f32 %v6020, %v3574
        %v6053 = vadd.f32 %v6021, %v3575
        %v6054 = vadd.f32 %v6022, %v3576
        %v6055 = vadd.f32 %v6023, %v3577
        %v6056 = vadd.f32 %v6024, %v3578
        %v6057 = vadd.f32 %v6025, %v3579
        %v6058 = vadd.f32 %v6026, %v3580
        %v6059 = vadd.f32 %v6027, %v3581
        %v6060 = vadd.f32 %v6028, %v3582
        %v6061 = vadd.f32 %v6029, %v3583
        %v6062 = vadd.f32 %v6030, %v3584
        %v6063 = vadd.f32 %v6031, %v3585
        %v6064 = vadd.f32 %v6032, %v3586
        %v6065 = vadd.f32 %v6033, %v3587
        %v6066 = vadd.f32 %v6034, %v3588
        %v6067 = vadd.f32 %v6035, %v3589
        %v6068 = vmul.f32 %v6036, 0.70710677
        %v6069 = vmul.f32 %v6037, 0.70710677
        %v6070 = vmul.f32 %v6038, 0.70710677
        %v6071 = vmul.f32 %v6039, 0.70710677
        %v6072 = vmul.f32 %v6040, 0.70710677
        %v6073 = vmul.f32 %v6041, 0.70710677
        %v6074 = vmul.f32 %v6042, 0.70710677
        %v6075 = vmul.f32 %v6043, 0.70710677
        %v6076 = vmul.f32 %v6044, 0.70710677
        %v6077 = vmul.f32 %v6045, 0.70710677
        %v6078 = vmul.f32 %v6046, 0.70710677
        %v6079 = vmul.f32 %v6047, 0.70710677
        %v6080 = vmul.f32 %v6048, 0.70710677
        %v6081 = vmul.f32 %v6049, 0.70710677
        %v6082 = vmul.f32 %v6050, 0.70710677
        %v6083 = vmul.f32 %v6051, 0.70710677
        %v6084 = vmul.f32 %v6052, 0.70710677
        %v6085 = vmul.f32 %v6053, 0.70710677
        %v6086 = vmul.f32 %v6054, 0.70710677
        %v6087 = vmul.f32 %v6055, 0.70710677
        %v6088 = vmul.f32 %v6056, 0.70710677
        %v6089 = vmul.f32 %v6057, 0.70710677
        %v6090 = vmul.f32 %v6058, 0.70710677
        %v6091 = vmul.f32 %v6059, 0.70710677
        %v6092 = vmul.f32 %v6060, 0.70710677
        %v6093 = vmul.f32 %v6061, 0.70710677
        %v6094 = vmul.f32 %v6062, 0.70710677
        %v6095 = vmul.f32 %v6063, 0.70710677
        %v6096 = vmul.f32 %v6064, 0.70710677
        %v6097 = vmul.f32 %v6065, 0.70710677
        %v6098 = vmul.f32 %v6066, 0.70710677
        %v6099 = vmul.f32 %v6067, 0.70710677
        %v6100 = vpack.c.bf16 %v6070, %v6068
        %v6101 = vpack.c.bf16 %v6071, %v6069
        %v6102 = vpack.c.bf16 %v6074, %v6072
        %v6103 = vpack.c.bf16 %v6075, %v6073
        %v6104 = vpack.c.bf16 %v6078, %v6076
        %v6105 = vpack.c.bf16 %v6079, %v6077
        %v6106 = vpack.c.bf16 %v6082, %v6080
        %v6107 = vpack.c.bf16 %v6083, %v6081
        %v6108 = vpack.c.bf16 %v6086, %v6084
        %v6109 = vpack.c.bf16 %v6087, %v6085
        %v6110 = vpack.c.bf16 %v6090, %v6088
        %v6111 = vpack.c.bf16 %v6091, %v6089
        %v6112 = vpack.c.bf16 %v6094, %v6092
        %v6113 = vpack.c.bf16 %v6095, %v6093
        %v6114 = vpack.c.bf16 %v6098, %v6096
        %v6115 = vpack.c.bf16 %v6099, %v6097
        %v6116 = vld [vmem:[%s6] sm:$0xff]
        %v6117 = vld [vmem:[%s6 + $0x8] sm:$0xff]
        %v6118 = vld [vmem:[%s6 + $0x10] sm:$0xff]
        %v6119 = vld [vmem:[%s6 + $0x18] sm:$0xff]
        %v6120 = vld [vmem:[%s6 + $0x20] sm:$0xff]
        %v6121 = vld [vmem:[%s6 + $0x28] sm:$0xff]
        %v6122 = vld [vmem:[%s6 + $0x30] sm:$0xff]
        %v6123 = vld [vmem:[%s6 + $0x38] sm:$0xff]
        %v6124 = vld [vmem:[%s6 + $0x40] sm:$0xff]
        %v6125 = vld [vmem:[%s6 + $0x48] sm:$0xff]
        %v6126 = vld [vmem:[%s6 + $0x50] sm:$0xff]
        %v6127 = vld [vmem:[%s6 + $0x58] sm:$0xff]
        %v6128 = vld [vmem:[%s6 + $0x60] sm:$0xff]
        %v6129 = vld [vmem:[%s6 + $0x68] sm:$0xff]
        %v6130 = vld [vmem:[%s6 + $0x70] sm:$0xff]
        %v6131 = vld [vmem:[%s6 + $0x78] sm:$0xff]
        %v6132 = vld [vmem:[%s6 + $0x80] sm:$0xff]
        %v6133 = vld [vmem:[%s6 + $0x88] sm:$0xff]
        %v6134 = vld [vmem:[%s6 + $0x90] sm:$0xff]
        %v6135 = vld [vmem:[%s6 + $0x98] sm:$0xff]
        %v6136 = vld [vmem:[%s6 + $0xa0] sm:$0xff]
        %v6137 = vld [vmem:[%s6 + $0xa8] sm:$0xff]
        %v6138 = vld [vmem:[%s6 + $0xb0] sm:$0xff]
        %v6139 = vld [vmem:[%s6 + $0xb8] sm:$0xff]
        %v6140 = vld [vmem:[%s6 + $0xc0] sm:$0xff]
        %v6141 = vld [vmem:[%s6 + $0xc8] sm:$0xff]
        %v6142 = vld [vmem:[%s6 + $0xd0] sm:$0xff]
        %v6143 = vld [vmem:[%s6 + $0xd8] sm:$0xff]
        %v6144 = vld [vmem:[%s6 + $0xe0] sm:$0xff]
        %v6145 = vld [vmem:[%s6 + $0xe8] sm:$0xff]
        %v6146 = vld [vmem:[%s6 + $0xf0] sm:$0xff]
        %v6147 = vld [vmem:[%s6 + $0xf8] sm:$0xff]
        %v6148 = vld [vmem:[%s7] sm:$0x3]
        %v6150 = vlaneseq
        %v6151 = vshrl.u32 %v6150, 7
        %v6152 = vsub.s32 0, %v6151
        %v6153 = vrot.slane %v6148, %v6152
        %v6154 = vlaneseq
        %v6155 = vshrl.u32 %v6154, 7
        %v6156 = vsub.s32 1, %v6155
        %v6157 = vrot.slane %v6148, %v6156
        %v6192 = vunpack.c.l.b16 %v6116
        %v6193 = vunpack.c.h.b16 %v6116
        %v6194 = vunpack.c.l.b16 %v6117
        %v6195 = vunpack.c.h.b16 %v6117
        %v6196 = vunpack.c.l.b16 %v6118
        %v6197 = vunpack.c.h.b16 %v6118
        %v6198 = vunpack.c.l.b16 %v6119
        %v6199 = vunpack.c.h.b16 %v6119
        %v6200 = vunpack.c.l.b16 %v6120
        %v6201 = vunpack.c.h.b16 %v6120
        %v6202 = vunpack.c.l.b16 %v6121
        %v6203 = vunpack.c.h.b16 %v6121
        %v6204 = vunpack.c.l.b16 %v6122
        %v6205 = vunpack.c.h.b16 %v6122
        %v6206 = vunpack.c.l.b16 %v6123
        %v6207 = vunpack.c.h.b16 %v6123
        %v6208 = vunpack.c.l.b16 %v6124
        %v6209 = vunpack.c.h.b16 %v6124
        %v6210 = vunpack.c.l.b16 %v6125
        %v6211 = vunpack.c.h.b16 %v6125
        %v6212 = vunpack.c.l.b16 %v6126
        %v6213 = vunpack.c.h.b16 %v6126
        %v6214 = vunpack.c.l.b16 %v6127
        %v6215 = vunpack.c.h.b16 %v6127
        %v6216 = vunpack.c.l.b16 %v6128
        %v6217 = vunpack.c.h.b16 %v6128
        %v6218 = vunpack.c.l.b16 %v6129
        %v6219 = vunpack.c.h.b16 %v6129
        %v6220 = vunpack.c.l.b16 %v6130
        %v6221 = vunpack.c.h.b16 %v6130
        %v6222 = vunpack.c.l.b16 %v6131
        %v6223 = vunpack.c.h.b16 %v6131
        %v6224 = vunpack.c.l.b16 %v6132
        %v6225 = vunpack.c.h.b16 %v6132
        %v6226 = vunpack.c.l.b16 %v6133
        %v6227 = vunpack.c.h.b16 %v6133
        %v6228 = vunpack.c.l.b16 %v6134
        %v6229 = vunpack.c.h.b16 %v6134
        %v6230 = vunpack.c.l.b16 %v6135
        %v6231 = vunpack.c.h.b16 %v6135
        %v6232 = vunpack.c.l.b16 %v6136
        %v6233 = vunpack.c.h.b16 %v6136
        %v6234 = vunpack.c.l.b16 %v6137
        %v6235 = vunpack.c.h.b16 %v6137
        %v6236 = vunpack.c.l.b16 %v6138
        %v6237 = vunpack.c.h.b16 %v6138
        %v6238 = vunpack.c.l.b16 %v6139
        %v6239 = vunpack.c.h.b16 %v6139
        %v6240 = vunpack.c.l.b16 %v6140
        %v6241 = vunpack.c.h.b16 %v6140
        %v6242 = vunpack.c.l.b16 %v6141
        %v6243 = vunpack.c.h.b16 %v6141
        %v6244 = vunpack.c.l.b16 %v6142
        %v6245 = vunpack.c.h.b16 %v6142
        %v6246 = vunpack.c.l.b16 %v6143
        %v6247 = vunpack.c.h.b16 %v6143
        %v6248 = vunpack.c.l.b16 %v6144
        %v6249 = vunpack.c.h.b16 %v6144
        %v6250 = vunpack.c.l.b16 %v6145
        %v6251 = vunpack.c.h.b16 %v6145
        %v6252 = vunpack.c.l.b16 %v6146
        %v6253 = vunpack.c.h.b16 %v6146
        %v6254 = vunpack.c.l.b16 %v6147
        %v6255 = vunpack.c.h.b16 %v6147
        %v6256 = vpack.c.b16 %v6194, %v6192
        %v6257 = vpack.c.b16 %v6195, %v6193
        %v6258 = vpack.c.b16 %v6198, %v6196
        %v6259 = vpack.c.b16 %v6199, %v6197
        %v6260 = vpack.c.b16 %v6202, %v6200
        %v6261 = vpack.c.b16 %v6203, %v6201
        %v6262 = vpack.c.b16 %v6206, %v6204
        %v6263 = vpack.c.b16 %v6207, %v6205
        %v6264 = vpack.c.b16 %v6210, %v6208
        %v6265 = vpack.c.b16 %v6211, %v6209
        %v6266 = vpack.c.b16 %v6214, %v6212
        %v6267 = vpack.c.b16 %v6215, %v6213
        %v6268 = vpack.c.b16 %v6218, %v6216
        %v6269 = vpack.c.b16 %v6219, %v6217
        %v6270 = vpack.c.b16 %v6222, %v6220
        %v6271 = vpack.c.b16 %v6223, %v6221
        %v6272 = vpack.c.b16 %v6226, %v6224
        %v6273 = vpack.c.b16 %v6227, %v6225
        %v6274 = vpack.c.b16 %v6230, %v6228
        %v6275 = vpack.c.b16 %v6231, %v6229
        %v6276 = vpack.c.b16 %v6234, %v6232
        %v6277 = vpack.c.b16 %v6235, %v6233
        %v6278 = vpack.c.b16 %v6238, %v6236
        %v6279 = vpack.c.b16 %v6239, %v6237
        %v6280 = vpack.c.b16 %v6242, %v6240
        %v6281 = vpack.c.b16 %v6243, %v6241
        %v6282 = vpack.c.b16 %v6246, %v6244
        %v6283 = vpack.c.b16 %v6247, %v6245
        %v6284 = vpack.c.b16 %v6250, %v6248
        %v6285 = vpack.c.b16 %v6251, %v6249
        %v6286 = vpack.c.b16 %v6254, %v6252
        %v6287 = vpack.c.b16 %v6255, %v6253
        %6320 = vmatprep.subr.bf16.mxu0 %v6271
        %6321 = vmatpush1.bf16.msra.mxu0 %v6270
        %6322 = vmatprep.subr.bf16.mxu0 %v6269
        %6323 = vmatpush1.bf16.msra.mxu0 %v6268
        %6324 = vmatprep.subr.bf16.mxu0 %v6267
        %6325 = vmatpush1.bf16.msra.mxu0 %v6266
        %6326 = vmatprep.subr.bf16.mxu0 %v6265
        %6327 = vmatpush1.bf16.msra.mxu0 %v6264
        %6328 = vmatprep.subr.bf16.mxu0 %v6263
        %6329 = vmatpush1.bf16.msra.mxu0 %v6262
        %6330 = vmatprep.subr.bf16.mxu0 %v6261
        %6331 = vmatpush1.bf16.msra.mxu0 %v6260
        %6332 = vmatprep.subr.bf16.mxu0 %v6259
        %6333 = vmatpush1.bf16.msra.mxu0 %v6258
        %6334 = vmatprep.subr.bf16.mxu0 %v6257
        %6335 = vmatpush1.bf16.msra.mxu0 %v6256
        %6336 = vmatprep.subr.bf16.mxu0 %v6287
        %6337 = vmatpush2.bf16.msra.mxu0 %v6286
        %6338 = vmatprep.subr.bf16.mxu0 %v6285
        %6339 = vmatpush2.bf16.msra.mxu0 %v6284
        %6340 = vmatprep.subr.bf16.mxu0 %v6283
        %6341 = vmatpush2.bf16.msra.mxu0 %v6282
        %6342 = vmatprep.subr.bf16.mxu0 %v6281
        %6343 = vmatpush2.bf16.msra.mxu0 %v6280
        %6344 = vmatprep.subr.bf16.mxu0 %v6279
        %6345 = vmatpush2.bf16.msra.mxu0 %v6278
        %6346 = vmatprep.subr.bf16.mxu0 %v6277
        %6347 = vmatpush2.bf16.msra.mxu0 %v6276
        %6348 = vmatprep.subr.bf16.mxu0 %v6275
        %6349 = vmatpush2.bf16.msra.mxu0 %v6274
        %6350 = vmatprep.subr.bf16.mxu0 %v6273
        %6351 = vmatpush2.bf16.msra.mxu0 %v6272
        %6352 = vmatprep.mubr.bf16.mxu0 %v6101
        %6353 = vmatmul.mubr.bf16.gmra.mxu0 %v6100
        %v6354 = vpop.f32.mrf.mxu0
        %v6355 = vadd.f32 %v6153, %v6354
        %v6356 = vpop.f32.mrf.mxu0
        %v6357 = vadd.f32 %v6157, %v6356
        %v6358 = vpop.f32.mrf.mxu0
        %v6359 = vadd.f32 %v6153, %v6358
        %v6360 = vpop.f32.mrf.mxu0
        %v6361 = vadd.f32 %v6157, %v6360
        %6362 = vmatprep.mubr.bf16.mxu0 %v6103
        %6363 = vmatmul.mubr.bf16.gmra.mxu0 %v6102
        %v6364 = vpop.f32.mrf.mxu0
        %v6365 = vadd.f32 %v6153, %v6364
        %v6366 = vpop.f32.mrf.mxu0
        %v6367 = vadd.f32 %v6157, %v6366
        %v6368 = vpop.f32.mrf.mxu0
        %v6369 = vadd.f32 %v6153, %v6368
        %v6370 = vpop.f32.mrf.mxu0
        %v6371 = vadd.f32 %v6157, %v6370
        %6372 = vmatprep.mubr.bf16.mxu0 %v6105
        %6373 = vmatmul.mubr.bf16.gmra.mxu0 %v6104
        %v6374 = vpop.f32.mrf.mxu0
        %v6375 = vadd.f32 %v6153, %v6374
        %v6376 = vpop.f32.mrf.mxu0
        %v6377 = vadd.f32 %v6157, %v6376
        %v6378 = vpop.f32.mrf.mxu0
        %v6379 = vadd.f32 %v6153, %v6378
        %v6380 = vpop.f32.mrf.mxu0
        %v6381 = vadd.f32 %v6157, %v6380
        %6382 = vmatprep.mubr.bf16.mxu0 %v6107
        %6383 = vmatmul.mubr.bf16.gmra.mxu0 %v6106
        %v6384 = vpop.f32.mrf.mxu0
        %v6385 = vadd.f32 %v6153, %v6384
        %v6386 = vpop.f32.mrf.mxu0
        %v6387 = vadd.f32 %v6157, %v6386
        %v6388 = vpop.f32.mrf.mxu0
        %v6389 = vadd.f32 %v6153, %v6388
        %v6390 = vpop.f32.mrf.mxu0
        %v6391 = vadd.f32 %v6157, %v6390
        %6392 = vmatprep.mubr.bf16.mxu0 %v6109
        %6393 = vmatmul.mubr.bf16.gmra.mxu0 %v6108
        %v6394 = vpop.f32.mrf.mxu0
        %v6395 = vadd.f32 %v6153, %v6394
        %v6396 = vpop.f32.mrf.mxu0
        %v6397 = vadd.f32 %v6157, %v6396
        %v6398 = vpop.f32.mrf.mxu0
        %v6399 = vadd.f32 %v6153, %v6398
        %v6400 = vpop.f32.mrf.mxu0
        %v6401 = vadd.f32 %v6157, %v6400
        %6402 = vmatprep.mubr.bf16.mxu0 %v6111
        %6403 = vmatmul.mubr.bf16.gmra.mxu0 %v6110
        %v6404 = vpop.f32.mrf.mxu0
        %v6405 = vadd.f32 %v6153, %v6404
        %v6406 = vpop.f32.mrf.mxu0
        %v6407 = vadd.f32 %v6157, %v6406
        %v6408 = vpop.f32.mrf.mxu0
        %v6409 = vadd.f32 %v6153, %v6408
        %v6410 = vpop.f32.mrf.mxu0
        %v6411 = vadd.f32 %v6157, %v6410
        %6412 = vmatprep.mubr.bf16.mxu0 %v6113
        %6413 = vmatmul.mubr.bf16.gmra.mxu0 %v6112
        %v6414 = vpop.f32.mrf.mxu0
        %v6415 = vadd.f32 %v6153, %v6414
        %v6416 = vpop.f32.mrf.mxu0
        %v6417 = vadd.f32 %v6157, %v6416
        %v6418 = vpop.f32.mrf.mxu0
        %v6419 = vadd.f32 %v6153, %v6418
        %v6420 = vpop.f32.mrf.mxu0
        %v6421 = vadd.f32 %v6157, %v6420
        %6422 = vmatprep.mubr.bf16.mxu0 %v6115
        %6423 = vmatmul.mubr.bf16.gmra.mxu0 %v6114
        %v6424 = vpop.f32.mrf.mxu0
        %v6425 = vadd.f32 %v6153, %v6424
        %v6426 = vpop.f32.mrf.mxu0
        %v6427 = vadd.f32 %v6157, %v6426
        %v6428 = vpop.f32.mrf.mxu0
        %v6429 = vadd.f32 %v6153, %v6428
        %v6430 = vpop.f32.mrf.mxu0
        %v6431 = vadd.f32 %v6157, %v6430
        %6432 = vdwg.mxu0
        %6433 = vst [vmem:[%s343] sm:$0xff] %v6355
        %6434 = vst [vmem:[%s343 + $0x8] sm:$0xff] %v6357
        %6435 = vst [vmem:[%s343 + $0x10] sm:$0xff] %v6359
        %6436 = vst [vmem:[%s343 + $0x18] sm:$0xff] %v6361
        %6437 = vst [vmem:[%s343 + $0x20] sm:$0xff] %v6365
        %6438 = vst [vmem:[%s343 + $0x28] sm:$0xff] %v6367
        %6439 = vst [vmem:[%s343 + $0x30] sm:$0xff] %v6369
        %6440 = vst [vmem:[%s343 + $0x38] sm:$0xff] %v6371
        %6441 = vst [vmem:[%s343 + $0x40] sm:$0xff] %v6375
        %6442 = vst [vmem:[%s343 + $0x48] sm:$0xff] %v6377
        %6443 = vst [vmem:[%s343 + $0x50] sm:$0xff] %v6379
        %6444 = vst [vmem:[%s343 + $0x58] sm:$0xff] %v6381
        %6445 = vst [vmem:[%s343 + $0x60] sm:$0xff] %v6385
        %6446 = vst [vmem:[%s343 + $0x68] sm:$0xff] %v6387
        %6447 = vst [vmem:[%s343 + $0x70] sm:$0xff] %v6389
        %6448 = vst [vmem:[%s343 + $0x78] sm:$0xff] %v6391
        %6449 = vst [vmem:[%s343 + $0x80] sm:$0xff] %v6395
        %6450 = vst [vmem:[%s343 + $0x88] sm:$0xff] %v6397
        %6451 = vst [vmem:[%s343 + $0x90] sm:$0xff] %v6399
        %6452 = vst [vmem:[%s343 + $0x98] sm:$0xff] %v6401
        %6453 = vst [vmem:[%s343 + $0xa0] sm:$0xff] %v6405
        %6454 = vst [vmem:[%s343 + $0xa8] sm:$0xff] %v6407
        %6455 = vst [vmem:[%s343 + $0xb0] sm:$0xff] %v6409
        %6456 = vst [vmem:[%s343 + $0xb8] sm:$0xff] %v6411
        %6457 = vst [vmem:[%s343 + $0xc0] sm:$0xff] %v6415
        %6458 = vst [vmem:[%s343 + $0xc8] sm:$0xff] %v6417
        %6459 = vst [vmem:[%s343 + $0xd0] sm:$0xff] %v6419
        %6460 = vst [vmem:[%s343 + $0xd8] sm:$0xff] %v6421
        %6461 = vst [vmem:[%s343 + $0xe0] sm:$0xff] %v6425
        %6462 = vst [vmem:[%s343 + $0xe8] sm:$0xff] %v6427
        %6463 = vst [vmem:[%s343 + $0xf0] sm:$0xff] %v6429
        %6464 = vst [vmem:[%s343 + $0xf8] sm:$0xff] %v6431
        %s6465 = sand.u32 %s205, 1
        %s6466 = scalar_lea.sflag [#allocation4], %s6465
        %s6467 = sand.u32 %s205, 1
        %s6468 = smul.addr %s6467, 256
        %s6469 = scalar_lea.vmem [#allocation8], %s6468
        // Predicated region
        $region65: #{tpu_custom_call.1} parent=51 // pred_check
          %p6470 = pneg %p215
        $region66: #{tpu_custom_call.1} parent=51 // pred_check_branch
          %6472 = sbr.rel (%p6470) target = $region68
        $region67: #{tpu_custom_call.1} parent=51 // pred_region
          %s6473 = smul.u32 16, %s24
          %s6475 = ssub.s32 4096, 4096
          %6476 = vsyncadd %s6466, %s6475
          %s6477 = smul.addr %s6473, 2
          %s6478 = smul.addr %s6477, 128
          %s6479 = scalar_lea.hbm %s8, %s6478
          %s6480 = sshll.u32 %s6469, 4
          %s6481 = int_to_ptr.vmem [resolvable:$true] %s6480
          %6486 = dma.vmem_to_hbm [thread:$0]  %s6481, 4096, %s6479, %s6466, 256, 256, 16
        $region68: #{tpu_custom_call.1} parent=51 // pred_fallthru
          _
      $region52: #{tpu_custom_call.1} parent=5 // pred_fallthru
        _
      %p6487 = scmp.le.s32.totalorder 2, %s19
      // Predicated region
      $region69: #{tpu_custom_call.1} parent=5 // pred_check
        %p6488 = pneg %p6487
      $region70: #{tpu_custom_call.1} parent=5 // pred_check_branch
        %6490 = sbr.rel (%p6488) target = $region72
      $region71: #{tpu_custom_call.1} parent=5 // pred_region
        %s6491 = ssub.s32 %s19, 2
        // Predicated region
        $region73: #{tpu_custom_call.1} parent=71 // pred_check
          %p6492 = pneg %p221
        $region74: #{tpu_custom_call.1} parent=71 // pred_check_branch
          %6494 = sbr.rel (%p6492) target = $region76
        $region75: #{tpu_custom_call.1} parent=71 // pred_region
          %s6495 = sand.u32 %s206, 1
          %s6496 = scalar_lea.sflag [#allocation4], %s6495
          %s6497 = sand.u32 %s206, 1
          %s6498 = smul.addr %s6497, 256
          %s6499 = scalar_lea.vmem [#allocation8], %s6498
          %6500 = dma.done %s6496, 4096
        $region76: #{tpu_custom_call.1} parent=71 // pred_fallthru
          _
      $region72: #{tpu_custom_call.1} parent=5 // pred_fallthru
        _
    $region6: #{tpu_custom_call.1} parent=1 // loop_footer
      %s23 = sadd.s32 1, %s19
    $region7: #{tpu_custom_call.1} parent=1 // loop_footer_branch
      %18 = sbr.rel target = $region3
    $region8: #{tpu_custom_call.1} parent=1 // loop_exit
      _
    %6501 = vsyncpa [#allocation3], 1
    %s6502 = scalar_lea.sflag [#allocation3], 1
    %6503 = vsyncpa %s6502, 1
    %6504 = vsyncpa [#allocation6], 1
    %6505 = vsyncpa [#allocation4], 1
    %s6506 = scalar_lea.sflag [#allocation4], 1
    %6507 = vsyncpa %s6506, 1

</llo_original>
